<compile_context>
chip_gen: v5e
topology: v5e:2x2
jax: 0.10.0
libtpu: 0.0.40
codegen_flags: <defaults>
</compile_context>

<pallas_src>
import functools

import jax
import jax.numpy as jnp
import numpy as np
from jax import lax
from jax.experimental import pallas as pl
from jax.experimental.pallas import tpu as pltpu


def _round_up(n, m):
    return ((n + m - 1) // m) * m


def _pad_gates(w, H, Hp):
    """Zero-pad the trailing 4H (i,f,g,o) axis to 4*Hp, per gate block."""
    if Hp == H:
        return w
    lead = w.shape[:-1]
    w4 = w.reshape(lead + (4, H))
    w4 = jnp.pad(w4, [(0, 0)] * len(lead) + [(0, 0), (0, Hp - H)])
    return w4.reshape(lead + (4 * Hp,))


def _mulcat_kernel(x_ref,                      # [1, T*Bt, Dp]  time-major batch tile
                   wih_ref,                    # [Dp, 8*Hp+Dp]  fused W_ih1 | W_ih2 | W_b_x
                   b_ref,                      # [1, 8*Hp+Dp]   fused biases (b1 | b2 | bb)
                   whh1_ref, whh2_ref,         # [Hp, 4*Hp]
                   wp1_ref, bp1_ref,           # [Hp, Dp], [1, Dp]
                   wp2_ref, bp2_ref,           # [Hp, Dp], [1, Dp]
                   wbg_ref,                    # [Dp, Dp]   "gated" half of block projection
                   o_ref,                      # [1, T*Bt, Dp]
                   xg_ref,                     # VMEM [T*Bt, 8*Hp+Dp] f32: precomputed gates + x@Wbx
                   hs1_ref, hs2_ref,           # VMEM [T*Bt, Hp]  f32: hidden states
                   *, seq_len, b_tile):
    Hp = whh1_ref.shape[0]
    Dp = wbg_ref.shape[0]
    Bt = b_tile
    H4 = 4 * Hp
    H8 = 8 * Hp
    x2 = x_ref[0]                              # [T*Bt, Dp]

    # ---- one fused input-side projection (both LSTMs + x-half of block proj)
    xg_ref[...] = jnp.dot(x2, wih_ref[...],
                          preferred_element_type=jnp.float32) + b_ref[...]

    # ---- interleaved recurrences; h/c live in loop-carried vregs ------------
    def lstm_cell(gates, c):                   # gates: [Bt, 4*Hp], order (i,f,g,o)
        i = jax.nn.sigmoid(gates[:, 0 * Hp:1 * Hp])
        f = jax.nn.sigmoid(gates[:, 1 * Hp:2 * Hp])
        g = jnp.tanh(gates[:, 2 * Hp:3 * Hp])
        o = jax.nn.sigmoid(gates[:, 3 * Hp:4 * Hp])
        c_new = f * c + i * g
        h_new = o * jnp.tanh(c_new)
        return h_new, c_new

    def step(t, carry):
        h1, c1, h2, c2 = carry
        row = pl.multiple_of(t * Bt, Bt)       # Bt is a multiple of 8
        g1 = xg_ref[pl.ds(row, Bt), 0:H4] + jnp.dot(
            h1, whh1_ref[...], preferred_element_type=jnp.float32)
        g2 = xg_ref[pl.ds(row, Bt), H4:H8] + jnp.dot(
            h2, whh2_ref[...], preferred_element_type=jnp.float32)
        h1, c1 = lstm_cell(g1, c1)
        h2, c2 = lstm_cell(g2, c2)
        hs1_ref[pl.ds(row, Bt), :] = h1
        hs2_ref[pl.ds(row, Bt), :] = h2
        return h1, c1, h2, c2

    z = jnp.zeros((Bt, Hp), jnp.float32)
    init = (z, z, z, z)
    # manual unroll (4 -> 2 -> 1) so the scheduler sees several timesteps /
    # both LSTM branches worth of MXU pushes + EUP gate math per loop body.
    if seq_len % 4 == 0 and seq_len >= 8:
        def body(t4, carry):
            for u in range(4):
                carry = step(4 * t4 + u, carry)
            return carry
        lax.fori_loop(0, seq_len // 4, body, init)
    elif seq_len % 2 == 0:
        def body(t2, carry):
            return step(2 * t2 + 1, step(2 * t2, carry))
        lax.fori_loop(0, seq_len // 2, body, init)
    else:
        lax.fori_loop(0, seq_len, step, init)

    # ---- projections, gate multiply, and final block projection -------------
    rnn_out = jnp.dot(hs1_ref[...], wp1_ref[...],
                      preferred_element_type=jnp.float32) + bp1_ref[...]
    gate_out = jnp.dot(hs2_ref[...], wp2_ref[...],
                       preferred_element_type=jnp.float32) + bp2_ref[...]
    gated = rnn_out * gate_out
    # cat([gated, x], -1) @ Wb + bb  ==  gated @ Wb[:D]  +  (x @ Wb[D:] + bb)
    # where the second term (xg_ref[:, 8H:]) was precomputed in the fused
    # input projection, off the epilogue critical path.
    out = (jnp.dot(gated, wbg_ref[...], preferred_element_type=jnp.float32)
           + xg_ref[:, H8:H8 + Dp])
    o_ref[0] = out.astype(o_ref.dtype)


_VMEM_LIMIT = 48 * 1024 * 1024     # above 16/32 MiB scoped defaults, < v7x 64 MiB
_VMEM_BUDGET = 28 * 1024 * 1024    # target working-set per batch tile


@jax.jit
def mulcat_block(x, params):
    """x: [B, T, D] float32; params from make_params (pre-transposed weights)."""
    B, T, D = x.shape
    H = params['whh1'].shape[0]

    # ---- lane/sublane friendly padded sizes (zero padding is exact) --------
    Dp = _round_up(D, 128)
    Hp = _round_up(H, 128)
    B8 = _round_up(B, 8)

    # ---- pick a batch tile that fits the VMEM budget ------------------------
    def vmem_bytes(bt):
        acts = 2 * 2 * T * bt * Dp * 4                        # x + out, double-buffered
        scratch = 4 * T * bt * (8 * Hp + Dp + 2 * Hp)         # xg + hs1 + hs2
        w_elems = (Dp * (8 * Hp + Dp) + (8 * Hp + Dp)         # fused W_ih + bias
                   + 2 * Hp * 4 * Hp                          # whh1 + whh2
                   + 2 * Hp * Dp + 2 * Dp                     # wp1/wp2 + bp1/bp2
                   + Dp * Dp)                                 # wbg
        return acts + scratch + 2 * 4 * w_elems               # weights conservatively x2

    b_tile = min(B8, 128)
    while b_tile > 8 and vmem_bytes(b_tile) > _VMEM_BUDGET:
        b_tile = max(8, _round_up(b_tile // 2, 8))
    Bp = _round_up(B8, b_tile)
    nt = Bp // b_tile

    # ---- pad & fuse parameters ----------------------------------------------
    wih1 = _pad_gates(jnp.pad(params['wih1'], ((0, Dp - D), (0, 0))), H, Hp)
    wih2 = _pad_gates(jnp.pad(params['wih2'], ((0, Dp - D), (0, 0))), H, Hp)
    wbx = jnp.pad(params['wb_x'], ((0, Dp - D), (0, Dp - D)))
    wih = jnp.concatenate([wih1, wih2, wbx], axis=1)                 # [Dp, 8Hp+Dp]
    bb = jnp.pad(params['bb'], ((0, 0), (0, Dp - D)))
    b = jnp.concatenate([_pad_gates(params['b1'], H, Hp),
                         _pad_gates(params['b2'], H, Hp),
                         bb], axis=1)                                # [1, 8Hp+Dp]
    whh1 = _pad_gates(jnp.pad(params['whh1'], ((0, Hp - H), (0, 0))), H, Hp)
    whh2 = _pad_gates(jnp.pad(params['whh2'], ((0, Hp - H), (0, 0))), H, Hp)
    wp1 = jnp.pad(params['wp1'], ((0, Hp - H), (0, Dp - D)))
    wp2 = jnp.pad(params['wp2'], ((0, Hp - H), (0, Dp - D)))
    bp1 = jnp.pad(params['bp1'], ((0, 0), (0, Dp - D)))
    bp2 = jnp.pad(params['bp2'], ((0, 0), (0, Dp - D)))
    wbg = jnp.pad(params['wb_g'], ((0, Dp - D), (0, Dp - D)))
    weights = [wih, b, whh1, whh2, wp1, bp1, wp2, bp2, wbg]

    # ---- time-major, batch-tile-contiguous activation layout ----------------
    xp = jnp.pad(x, ((0, Bp - B), (0, 0), (0, Dp - D)))              # [Bp, T, Dp]
    xt = (xp.reshape(nt, b_tile, T, Dp)
            .transpose(0, 2, 1, 3)                                   # [nt, T, bt, Dp]
            .reshape(nt, T * b_tile, Dp))

    def full_spec(a):
        return pl.BlockSpec(a.shape, lambda i: (0, 0))               # all weights are 2-D

    out_t = pl.pallas_call(
        functools.partial(_mulcat_kernel, seq_len=T, b_tile=b_tile),
        out_shape=jax.ShapeDtypeStruct((nt, T * b_tile, Dp), x.dtype),
        grid_spec=pltpu.PrefetchScalarGridSpec(
            num_scalar_prefetch=0,
            grid=(nt,),
            in_specs=([pl.BlockSpec((1, T * b_tile, Dp), lambda i: (i, 0, 0))]
                      + [full_spec(w) for w in weights]),
            out_specs=pl.BlockSpec((1, T * b_tile, Dp), lambda i: (i, 0, 0)),
            scratch_shapes=[
                pltpu.VMEM((T * b_tile, 8 * Hp + Dp), jnp.float32),  # gates + x@Wbx
                pltpu.VMEM((T * b_tile, Hp), jnp.float32),           # hs1
                pltpu.VMEM((T * b_tile, Hp), jnp.float32),           # hs2
            ]),
        compiler_params=pltpu.CompilerParams(
            dimension_semantics=("parallel",),
            vmem_limit_bytes=_VMEM_LIMIT),
    )(xt, *weights)

    out = (out_t.reshape(nt, T, b_tile, Dp)
                .transpose(0, 2, 1, 3)
                .reshape(Bp, T, Dp)[:B, :, :D])
    return out


# ---------------- pure-JAX reference (for correctness check) ----------------
def _lstm_ref(x_btd, wih, whh, b):
    H = whh.shape[0]

    def step(carry, xt):
        h, c = carry
        gates = xt @ wih + h @ whh + b
        i = jax.nn.sigmoid(gates[..., 0 * H:1 * H])
        f = jax.nn.sigmoid(gates[..., 1 * H:2 * H])
        g = jnp.tanh(gates[..., 2 * H:3 * H])
        o = jax.nn.sigmoid(gates[..., 3 * H:4 * H])
        c = f * c + i * g
        h = o * jnp.tanh(c)
        return (h, c), h

    B = x_btd.shape[0]
    init = (jnp.zeros((B, H), x_btd.dtype), jnp.zeros((B, H), x_btd.dtype))
    _, hs = lax.scan(step, init, jnp.swapaxes(x_btd, 0, 1))
    return jnp.swapaxes(hs, 0, 1)


def mulcat_ref(x, p):
    rnn = _lstm_ref(x, p['wih1'], p['whh1'], p['b1'][0]) @ p['wp1'] + p['bp1'][0]
    gate = _lstm_ref(x, p['wih2'], p['whh2'], p['b2'][0]) @ p['wp2'] + p['bp2'][0]
    gated = rnn * gate
    return gated @ p['wb_g'] + x @ p['wb_x'] + p['bb'][0]


# ---------------------------------------------------------------------------
def make_params(key, D, H):
    ks = jax.random.split(key, 13)

    def u(k, shape, scale):
        return jax.random.uniform(k, shape, jnp.float32, -scale, scale)

    kH = 1.0 / np.sqrt(H)       # LSTM + rnn_proj init scale (PyTorch default)
    k2D = 1.0 / np.sqrt(2 * D)  # block_projection init scale (fan_in = 2D)
    return dict(
        # rnn (LSTM 1); b1 = b_ih + b_hh folded together, stored as [1, 4H]
        wih1=u(ks[0], (D, 4 * H), kH), whh1=u(ks[1], (H, 4 * H), kH),
        b1=u(ks[2], (1, 4 * H), kH),
        wp1=u(ks[3], (H, D), kH), bp1=u(ks[4], (1, D), kH),
        # gate_rnn (LSTM 2)
        wih2=u(ks[5], (D, 4 * H), kH), whh2=u(ks[6], (H, 4 * H), kH),
        b2=u(ks[7], (1, 4 * H), kH),
        wp2=u(ks[8], (H, D), kH), bp2=u(ks[9], (1, D), kH),
        # block_projection, split into the "gated" half and the "input" half
        wb_g=u(ks[10], (D, D), k2D), wb_x=u(ks[11], (D, D), k2D),
        bb=u(ks[12], (1, D), k2D),
    )


if __name__ == "__main__":
    B, T, D, H = 2, 8, 16, 32   # batch, seq, input_size, hidden_size

    key = jax.random.PRNGKey(0)
    kx, kp = jax.random.split(key)
    params = make_params(kp, D, H)
    x = jax.random.normal(kx, (B, T, D), jnp.float32)

    out = mulcat_block(x, params)
    out = jax.block_until_ready(out)

    ref = mulcat_ref(x, params)
    np.testing.assert_allclose(np.asarray(out), np.asarray(ref),
                               rtol=2e-3, atol=2e-3)
    assert out.shape == (B, T, D) and out.dtype == jnp.float32
    print("KERNEL_OK")
</pallas_src>

<mosaic_0001>
module attributes {stable_mosaic.version = 11 : i64} {
  func.func @_mulcat_kernel(%arg0: i32, %arg1: memref<1x64x128xf32, #tpu.memory_space<vmem>>, %arg2: memref<128x1152xf32, #tpu.memory_space<vmem>>, %arg3: memref<1x1152xf32, #tpu.memory_space<vmem>>, %arg4: memref<128x512xf32, #tpu.memory_space<vmem>>, %arg5: memref<128x512xf32, #tpu.memory_space<vmem>>, %arg6: memref<128x128xf32, #tpu.memory_space<vmem>>, %arg7: memref<1x128xf32, #tpu.memory_space<vmem>>, %arg8: memref<128x128xf32, #tpu.memory_space<vmem>>, %arg9: memref<1x128xf32, #tpu.memory_space<vmem>>, %arg10: memref<128x128xf32, #tpu.memory_space<vmem>>, %arg11: memref<1x64x128xf32, #tpu.memory_space<vmem>>, %arg12: memref<64x1152xf32, #tpu.memory_space<vmem>>, %arg13: memref<64x128xf32, #tpu.memory_space<vmem>>, %arg14: memref<64x128xf32, #tpu.memory_space<vmem>>) attributes {dimension_semantics = [#tpu.dimension_semantics<parallel>], iteration_bounds = array<i64: 1>, scalar_prefetch = 0 : i64, scratch_operands = 3 : i64, tpu.core_type = #tpu.core_type<tc>, window_params = [{transform_indices = @transform_0, window_bounds = array<i64: 1, 64, 128>}, {pipeline_mode = #tpu.pipeline_mode<synchronous>, transform_indices = @transform_1, window_bounds = array<i64: 128, 1152>}, {pipeline_mode = #tpu.pipeline_mode<synchronous>, transform_indices = @transform_2, window_bounds = array<i64: 1, 1152>}, {pipeline_mode = #tpu.pipeline_mode<synchronous>, transform_indices = @transform_3, window_bounds = array<i64: 128, 512>}, {pipeline_mode = #tpu.pipeline_mode<synchronous>, transform_indices = @transform_4, window_bounds = array<i64: 128, 512>}, {pipeline_mode = #tpu.pipeline_mode<synchronous>, transform_indices = @transform_5, window_bounds = array<i64: 128, 128>}, {pipeline_mode = #tpu.pipeline_mode<synchronous>, transform_indices = @transform_6, window_bounds = array<i64: 1, 128>}, {pipeline_mode = #tpu.pipeline_mode<synchronous>, transform_indices = @transform_7, window_bounds = array<i64: 128, 128>}, {pipeline_mode = #tpu.pipeline_mode<synchronous>, transform_indices = @transform_8, window_bounds = array<i64: 1, 128>}, {pipeline_mode = #tpu.pipeline_mode<synchronous>, transform_indices = @transform_9, window_bounds = array<i64: 128, 128>}, {transform_indices = @transform_10, window_bounds = array<i64: 1, 64, 128>}]} {
    %c0 = arith.constant 0 : index
    %c0_0 = arith.constant 0 : index
    %c0_1 = arith.constant 0 : index
    %0 = vector.load %arg1[%c0, %c0_0, %c0_1] : memref<1x64x128xf32, #tpu.memory_space<vmem>>, vector<1x64x128xf32>
    %1 = vector.shape_cast %0 : vector<1x64x128xf32> to vector<64x128xf32>
    %c0_2 = arith.constant 0 : index
    %c0_3 = arith.constant 0 : index
    %2 = vector.load %arg2[%c0_2, %c0_3] : memref<128x1152xf32, #tpu.memory_space<vmem>>, vector<128x1152xf32>
    %cst = arith.constant dense<0.000000e+00> : vector<64x1152xf32>
    %3 = tpu.matmul %1, %2, %cst {dimension_numbers = #tpu.dot_dimension_numbers<[1], [0], [0], [1], [0, 0, 1, 1], [], []>} : vector<64x128xf32>, vector<128x1152xf32>, vector<64x1152xf32> -> vector<64x1152xf32>
    %c0_4 = arith.constant 0 : index
    %c0_5 = arith.constant 0 : index
    %4 = vector.load %arg3[%c0_4, %c0_5] : memref<1x1152xf32, #tpu.memory_space<vmem>>, vector<1x1152xf32>
    %5 = vector.broadcast %4 : vector<1x1152xf32> to vector<64x1152xf32>
    %6 = arith.addf %3, %5 : vector<64x1152xf32>
    %c0_6 = arith.constant 0 : index
    %c0_7 = arith.constant 0 : index
    %7 = vector.load %arg12[%c0_6, %c0_7] : memref<64x1152xf32, #tpu.memory_space<vmem>>, vector<64x1152xf32>
    tpu.vector_store %arg12[%c0_6, %c0_7], %6 {strides = array<i32>} : memref<64x1152xf32, #tpu.memory_space<vmem>>, vector<64x1152xf32>,
    %cst_8 = arith.constant 0.000000e+00 : f32
    %8 = vector.broadcast %cst_8 : f32 to vector<8x128xf32>
    %c0_i32 = arith.constant 0 : i32
    %c2_i32 = arith.constant 2 : i32
    %9 = arith.addi %c0_i32, %c2_i32 : i32
    %c1_i32 = arith.constant 1 : i32
    %10:4 = scf.for %arg15 = %c0_i32 to %9 step %c1_i32 iter_args(%arg16 = %8, %arg17 = %8, %arg18 = %8, %arg19 = %8) -> (vector<8x128xf32>, vector<8x128xf32>, vector<8x128xf32>, vector<8x128xf32>)  : i32 {
      %c4_i32 = arith.constant 4 : i32
      %31 = arith.muli %c4_i32, %arg15 : i32
      %c0_i32_31 = arith.constant 0 : i32
      %32 = arith.addi %31, %c0_i32_31 : i32
      %c8_i32 = arith.constant 8 : i32
      %33 = arith.muli %32, %c8_i32 : i32
      %34 = tpu.assume_multiple %33, 8 : i32
      %35 = arith.index_cast %34 : i32 to index
      %c0_32 = arith.constant 0 : index
      %36 = vector.load %arg12[%35, %c0_32] : memref<64x1152xf32, #tpu.memory_space<vmem>>, vector<8x512xf32>
      %c0_33 = arith.constant 0 : index
      %c0_34 = arith.constant 0 : index
      %37 = vector.load %arg4[%c0_33, %c0_34] : memref<128x512xf32, #tpu.memory_space<vmem>>, vector<128x512xf32>
      %cst_35 = arith.constant dense<0.000000e+00> : vector<8x512xf32>
      %38 = tpu.matmul %arg16, %37, %cst_35 {dimension_numbers = #tpu.dot_dimension_numbers<[1], [0], [0], [1], [0, 0, 1, 1], [], []>} : vector<8x128xf32>, vector<128x512xf32>, vector<8x512xf32> -> vector<8x512xf32>
      %39 = arith.addf %36, %38 : vector<8x512xf32>
      %40 = arith.index_cast %34 : i32 to index
      %c512 = arith.constant 512 : index
      %41 = vector.load %arg12[%40, %c512] : memref<64x1152xf32, #tpu.memory_space<vmem>>, vector<8x512xf32>
      %c0_36 = arith.constant 0 : index
      %c0_37 = arith.constant 0 : index
      %42 = vector.load %arg5[%c0_36, %c0_37] : memref<128x512xf32, #tpu.memory_space<vmem>>, vector<128x512xf32>
      %cst_38 = arith.constant dense<0.000000e+00> : vector<8x512xf32>
      %43 = tpu.matmul %arg18, %42, %cst_38 {dimension_numbers = #tpu.dot_dimension_numbers<[1], [0], [0], [1], [0, 0, 1, 1], [], []>} : vector<8x128xf32>, vector<128x512xf32>, vector<8x512xf32> -> vector<8x512xf32>
      %44 = arith.addf %41, %43 : vector<8x512xf32>
      %45 = vector.extract_strided_slice %39 {offsets = [0, 0], sizes = [8, 128], strides = [1, 1]} : vector<8x512xf32> to vector<8x128xf32>
      %46 = arith.negf %45 : vector<8x128xf32>
      %47 = math.exp %46 : vector<8x128xf32>
      %cst_39 = arith.constant 1.000000e+00 : f32
      %48 = vector.broadcast %cst_39 : f32 to vector<8x128xf32>
      %49 = arith.addf %48, %47 : vector<8x128xf32>
      %50 = arith.divf %48, %49 : vector<8x128xf32>
      %51 = vector.extract_strided_slice %39 {offsets = [0, 128], sizes = [8, 128], strides = [1, 1]} : vector<8x512xf32> to vector<8x128xf32>
      %52 = arith.negf %51 : vector<8x128xf32>
      %53 = math.exp %52 : vector<8x128xf32>
      %cst_40 = arith.constant 1.000000e+00 : f32
      %54 = vector.broadcast %cst_40 : f32 to vector<8x128xf32>
      %55 = arith.addf %54, %53 : vector<8x128xf32>
      %56 = arith.divf %54, %55 : vector<8x128xf32>
      %57 = vector.extract_strided_slice %39 {offsets = [0, 256], sizes = [8, 128], strides = [1, 1]} : vector<8x512xf32> to vector<8x128xf32>
      %58 = math.tanh %57 : vector<8x128xf32>
      %59 = vector.extract_strided_slice %39 {offsets = [0, 384], sizes = [8, 128], strides = [1, 1]} : vector<8x512xf32> to vector<8x128xf32>
      %60 = arith.negf %59 : vector<8x128xf32>
      %61 = math.exp %60 : vector<8x128xf32>
      %cst_41 = arith.constant 1.000000e+00 : f32
      %62 = vector.broadcast %cst_41 : f32 to vector<8x128xf32>
      %63 = arith.addf %62, %61 : vector<8x128xf32>
      %64 = arith.divf %62, %63 : vector<8x128xf32>
      %65 = arith.mulf %56, %arg17 : vector<8x128xf32>
      %66 = arith.mulf %50, %58 : vector<8x128xf32>
      %67 = arith.addf %65, %66 : vector<8x128xf32>
      %68 = math.tanh %67 : vector<8x128xf32>
      %69 = arith.mulf %64, %68 : vector<8x128xf32>
      %70 = vector.extract_strided_slice %44 {offsets = [0, 0], sizes = [8, 128], strides = [1, 1]} : vector<8x512xf32> to vector<8x128xf32>
      %71 = arith.negf %70 : vector<8x128xf32>
      %72 = math.exp %71 : vector<8x128xf32>
      %cst_42 = arith.constant 1.000000e+00 : f32
      %73 = vector.broadcast %cst_42 : f32 to vector<8x128xf32>
      %74 = arith.addf %73, %72 : vector<8x128xf32>
      %75 = arith.divf %73, %74 : vector<8x128xf32>
      %76 = vector.extract_strided_slice %44 {offsets = [0, 128], sizes = [8, 128], strides = [1, 1]} : vector<8x512xf32> to vector<8x128xf32>
      %77 = arith.negf %76 : vector<8x128xf32>
      %78 = math.exp %77 : vector<8x128xf32>
      %cst_43 = arith.constant 1.000000e+00 : f32
      %79 = vector.broadcast %cst_43 : f32 to vector<8x128xf32>
      %80 = arith.addf %79, %78 : vector<8x128xf32>
      %81 = arith.divf %79, %80 : vector<8x128xf32>
      %82 = vector.extract_strided_slice %44 {offsets = [0, 256], sizes = [8, 128], strides = [1, 1]} : vector<8x512xf32> to vector<8x128xf32>
      %83 = math.tanh %82 : vector<8x128xf32>
      %84 = vector.extract_strided_slice %44 {offsets = [0, 384], sizes = [8, 128], strides = [1, 1]} : vector<8x512xf32> to vector<8x128xf32>
      %85 = arith.negf %84 : vector<8x128xf32>
      %86 = math.exp %85 : vector<8x128xf32>
      %cst_44 = arith.constant 1.000000e+00 : f32
      %87 = vector.broadcast %cst_44 : f32 to vector<8x128xf32>
      %88 = arith.addf %87, %86 : vector<8x128xf32>
      %89 = arith.divf %87, %88 : vector<8x128xf32>
      %90 = arith.mulf %81, %arg19 : vector<8x128xf32>
      %91 = arith.mulf %75, %83 : vector<8x128xf32>
      %92 = arith.addf %90, %91 : vector<8x128xf32>
      %93 = math.tanh %92 : vector<8x128xf32>
      %94 = arith.mulf %89, %93 : vector<8x128xf32>
      %95 = arith.index_cast %34 : i32 to index
      %c0_45 = arith.constant 0 : index
      %96 = vector.load %arg13[%95, %c0_45] : memref<64x128xf32, #tpu.memory_space<vmem>>, vector<8x128xf32>
      tpu.vector_store %arg13[%95, %c0_45], %69 {strides = array<i32>} : memref<64x128xf32, #tpu.memory_space<vmem>>, vector<8x128xf32>,
      %97 = arith.index_cast %34 : i32 to index
      %c0_46 = arith.constant 0 : index
      %98 = vector.load %arg14[%97, %c0_46] : memref<64x128xf32, #tpu.memory_space<vmem>>, vector<8x128xf32>
      tpu.vector_store %arg14[%97, %c0_46], %94 {strides = array<i32>} : memref<64x128xf32, #tpu.memory_space<vmem>>, vector<8x128xf32>,
      %c4_i32_47 = arith.constant 4 : i32
      %99 = arith.muli %c4_i32_47, %arg15 : i32
      %c1_i32_48 = arith.constant 1 : i32
      %100 = arith.addi %99, %c1_i32_48 : i32
      %c8_i32_49 = arith.constant 8 : i32
      %101 = arith.muli %100, %c8_i32_49 : i32
      %102 = tpu.assume_multiple %101, 8 : i32
      %103 = arith.index_cast %102 : i32 to index
      %c0_50 = arith.constant 0 : index
      %104 = vector.load %arg12[%103, %c0_50] : memref<64x1152xf32, #tpu.memory_space<vmem>>, vector<8x512xf32>
      %c0_51 = arith.constant 0 : index
      %c0_52 = arith.constant 0 : index
      %105 = vector.load %arg4[%c0_51, %c0_52] : memref<128x512xf32, #tpu.memory_space<vmem>>, vector<128x512xf32>
      %cst_53 = arith.constant dense<0.000000e+00> : vector<8x512xf32>
      %106 = tpu.matmul %69, %105, %cst_53 {dimension_numbers = #tpu.dot_dimension_numbers<[1], [0], [0], [1], [0, 0, 1, 1], [], []>} : vector<8x128xf32>, vector<128x512xf32>, vector<8x512xf32> -> vector<8x512xf32>
      %107 = arith.addf %104, %106 : vector<8x512xf32>
      %108 = arith.index_cast %102 : i32 to index
      %c512_54 = arith.constant 512 : index
      %109 = vector.load %arg12[%108, %c512_54] : memref<64x1152xf32, #tpu.memory_space<vmem>>, vector<8x512xf32>
      %c0_55 = arith.constant 0 : index
      %c0_56 = arith.constant 0 : index
      %110 = vector.load %arg5[%c0_55, %c0_56] : memref<128x512xf32, #tpu.memory_space<vmem>>, vector<128x512xf32>
      %cst_57 = arith.constant dense<0.000000e+00> : vector<8x512xf32>
      %111 = tpu.matmul %94, %110, %cst_57 {dimension_numbers = #tpu.dot_dimension_numbers<[1], [0], [0], [1], [0, 0, 1, 1], [], []>} : vector<8x128xf32>, vector<128x512xf32>, vector<8x512xf32> -> vector<8x512xf32>
      %112 = arith.addf %109, %111 : vector<8x512xf32>
      %113 = vector.extract_strided_slice %107 {offsets = [0, 0], sizes = [8, 128], strides = [1, 1]} : vector<8x512xf32> to vector<8x128xf32>
      %114 = arith.negf %113 : vector<8x128xf32>
      %115 = math.exp %114 : vector<8x128xf32>
      %cst_58 = arith.constant 1.000000e+00 : f32
      %116 = vector.broadcast %cst_58 : f32 to vector<8x128xf32>
      %117 = arith.addf %116, %115 : vector<8x128xf32>
      %118 = arith.divf %116, %117 : vector<8x128xf32>
      %119 = vector.extract_strided_slice %107 {offsets = [0, 128], sizes = [8, 128], strides = [1, 1]} : vector<8x512xf32> to vector<8x128xf32>
      %120 = arith.negf %119 : vector<8x128xf32>
      %121 = math.exp %120 : vector<8x128xf32>
      %cst_59 = arith.constant 1.000000e+00 : f32
      %122 = vector.broadcast %cst_59 : f32 to vector<8x128xf32>
      %123 = arith.addf %122, %121 : vector<8x128xf32>
      %124 = arith.divf %122, %123 : vector<8x128xf32>
      %125 = vector.extract_strided_slice %107 {offsets = [0, 256], sizes = [8, 128], strides = [1, 1]} : vector<8x512xf32> to vector<8x128xf32>
      %126 = math.tanh %125 : vector<8x128xf32>
      %127 = vector.extract_strided_slice %107 {offsets = [0, 384], sizes = [8, 128], strides = [1, 1]} : vector<8x512xf32> to vector<8x128xf32>
      %128 = arith.negf %127 : vector<8x128xf32>
      %129 = math.exp %128 : vector<8x128xf32>
      %cst_60 = arith.constant 1.000000e+00 : f32
      %130 = vector.broadcast %cst_60 : f32 to vector<8x128xf32>
      %131 = arith.addf %130, %129 : vector<8x128xf32>
      %132 = arith.divf %130, %131 : vector<8x128xf32>
      %133 = arith.mulf %124, %67 : vector<8x128xf32>
      %134 = arith.mulf %118, %126 : vector<8x128xf32>
      %135 = arith.addf %133, %134 : vector<8x128xf32>
      %136 = math.tanh %135 : vector<8x128xf32>
      %137 = arith.mulf %132, %136 : vector<8x128xf32>
      %138 = vector.extract_strided_slice %112 {offsets = [0, 0], sizes = [8, 128], strides = [1, 1]} : vector<8x512xf32> to vector<8x128xf32>
      %139 = arith.negf %138 : vector<8x128xf32>
      %140 = math.exp %139 : vector<8x128xf32>
      %cst_61 = arith.constant 1.000000e+00 : f32
      %141 = vector.broadcast %cst_61 : f32 to vector<8x128xf32>
      %142 = arith.addf %141, %140 : vector<8x128xf32>
      %143 = arith.divf %141, %142 : vector<8x128xf32>
      %144 = vector.extract_strided_slice %112 {offsets = [0, 128], sizes = [8, 128], strides = [1, 1]} : vector<8x512xf32> to vector<8x128xf32>
      %145 = arith.negf %144 : vector<8x128xf32>
      %146 = math.exp %145 : vector<8x128xf32>
      %cst_62 = arith.constant 1.000000e+00 : f32
      %147 = vector.broadcast %cst_62 : f32 to vector<8x128xf32>
      %148 = arith.addf %147, %146 : vector<8x128xf32>
      %149 = arith.divf %147, %148 : vector<8x128xf32>
      %150 = vector.extract_strided_slice %112 {offsets = [0, 256], sizes = [8, 128], strides = [1, 1]} : vector<8x512xf32> to vector<8x128xf32>
      %151 = math.tanh %150 : vector<8x128xf32>
      %152 = vector.extract_strided_slice %112 {offsets = [0, 384], sizes = [8, 128], strides = [1, 1]} : vector<8x512xf32> to vector<8x128xf32>
      %153 = arith.negf %152 : vector<8x128xf32>
      %154 = math.exp %153 : vector<8x128xf32>
      %cst_63 = arith.constant 1.000000e+00 : f32
      %155 = vector.broadcast %cst_63 : f32 to vector<8x128xf32>
      %156 = arith.addf %155, %154 : vector<8x128xf32>
      %157 = arith.divf %155, %156 : vector<8x128xf32>
      %158 = arith.mulf %149, %92 : vector<8x128xf32>
      %159 = arith.mulf %143, %151 : vector<8x128xf32>
      %160 = arith.addf %158, %159 : vector<8x128xf32>
      %161 = math.tanh %160 : vector<8x128xf32>
      %162 = arith.mulf %157, %161 : vector<8x128xf32>
      %163 = arith.index_cast %102 : i32 to index
      %c0_64 = arith.constant 0 : index
      %164 = vector.load %arg13[%163, %c0_64] : memref<64x128xf32, #tpu.memory_space<vmem>>, vector<8x128xf32>
      tpu.vector_store %arg13[%163, %c0_64], %137 {strides = array<i32>} : memref<64x128xf32, #tpu.memory_space<vmem>>, vector<8x128xf32>,
      %165 = arith.index_cast %102 : i32 to index
      %c0_65 = arith.constant 0 : index
      %166 = vector.load %arg14[%165, %c0_65] : memref<64x128xf32, #tpu.memory_space<vmem>>, vector<8x128xf32>
      tpu.vector_store %arg14[%165, %c0_65], %162 {strides = array<i32>} : memref<64x128xf32, #tpu.memory_space<vmem>>, vector<8x128xf32>,
      %c4_i32_66 = arith.constant 4 : i32
      %167 = arith.muli %c4_i32_66, %arg15 : i32
      %c2_i32_67 = arith.constant 2 : i32
      %168 = arith.addi %167, %c2_i32_67 : i32
      %c8_i32_68 = arith.constant 8 : i32
      %169 = arith.muli %168, %c8_i32_68 : i32
      %170 = tpu.assume_multiple %169, 8 : i32
      %171 = arith.index_cast %170 : i32 to index
      %c0_69 = arith.constant 0 : index
      %172 = vector.load %arg12[%171, %c0_69] : memref<64x1152xf32, #tpu.memory_space<vmem>>, vector<8x512xf32>
      %c0_70 = arith.constant 0 : index
      %c0_71 = arith.constant 0 : index
      %173 = vector.load %arg4[%c0_70, %c0_71] : memref<128x512xf32, #tpu.memory_space<vmem>>, vector<128x512xf32>
      %cst_72 = arith.constant dense<0.000000e+00> : vector<8x512xf32>
      %174 = tpu.matmul %137, %173, %cst_72 {dimension_numbers = #tpu.dot_dimension_numbers<[1], [0], [0], [1], [0, 0, 1, 1], [], []>} : vector<8x128xf32>, vector<128x512xf32>, vector<8x512xf32> -> vector<8x512xf32>
      %175 = arith.addf %172, %174 : vector<8x512xf32>
      %176 = arith.index_cast %170 : i32 to index
      %c512_73 = arith.constant 512 : index
      %177 = vector.load %arg12[%176, %c512_73] : memref<64x1152xf32, #tpu.memory_space<vmem>>, vector<8x512xf32>
      %c0_74 = arith.constant 0 : index
      %c0_75 = arith.constant 0 : index
      %178 = vector.load %arg5[%c0_74, %c0_75] : memref<128x512xf32, #tpu.memory_space<vmem>>, vector<128x512xf32>
      %cst_76 = arith.constant dense<0.000000e+00> : vector<8x512xf32>
      %179 = tpu.matmul %162, %178, %cst_76 {dimension_numbers = #tpu.dot_dimension_numbers<[1], [0], [0], [1], [0, 0, 1, 1], [], []>} : vector<8x128xf32>, vector<128x512xf32>, vector<8x512xf32> -> vector<8x512xf32>
      %180 = arith.addf %177, %179 : vector<8x512xf32>
      %181 = vector.extract_strided_slice %175 {offsets = [0, 0], sizes = [8, 128], strides = [1, 1]} : vector<8x512xf32> to vector<8x128xf32>
      %182 = arith.negf %181 : vector<8x128xf32>
      %183 = math.exp %182 : vector<8x128xf32>
      %cst_77 = arith.constant 1.000000e+00 : f32
      %184 = vector.broadcast %cst_77 : f32 to vector<8x128xf32>
      %185 = arith.addf %184, %183 : vector<8x128xf32>
      %186 = arith.divf %184, %185 : vector<8x128xf32>
      %187 = vector.extract_strided_slice %175 {offsets = [0, 128], sizes = [8, 128], strides = [1, 1]} : vector<8x512xf32> to vector<8x128xf32>
      %188 = arith.negf %187 : vector<8x128xf32>
      %189 = math.exp %188 : vector<8x128xf32>
      %cst_78 = arith.constant 1.000000e+00 : f32
      %190 = vector.broadcast %cst_78 : f32 to vector<8x128xf32>
      %191 = arith.addf %190, %189 : vector<8x128xf32>
      %192 = arith.divf %190, %191 : vector<8x128xf32>
      %193 = vector.extract_strided_slice %175 {offsets = [0, 256], sizes = [8, 128], strides = [1, 1]} : vector<8x512xf32> to vector<8x128xf32>
      %194 = math.tanh %193 : vector<8x128xf32>
      %195 = vector.extract_strided_slice %175 {offsets = [0, 384], sizes = [8, 128], strides = [1, 1]} : vector<8x512xf32> to vector<8x128xf32>
      %196 = arith.negf %195 : vector<8x128xf32>
      %197 = math.exp %196 : vector<8x128xf32>
      %cst_79 = arith.constant 1.000000e+00 : f32
      %198 = vector.broadcast %cst_79 : f32 to vector<8x128xf32>
      %199 = arith.addf %198, %197 : vector<8x128xf32>
      %200 = arith.divf %198, %199 : vector<8x128xf32>
      %201 = arith.mulf %192, %135 : vector<8x128xf32>
      %202 = arith.mulf %186, %194 : vector<8x128xf32>
      %203 = arith.addf %201, %202 : vector<8x128xf32>
      %204 = math.tanh %203 : vector<8x128xf32>
      %205 = arith.mulf %200, %204 : vector<8x128xf32>
      %206 = vector.extract_strided_slice %180 {offsets = [0, 0], sizes = [8, 128], strides = [1, 1]} : vector<8x512xf32> to vector<8x128xf32>
      %207 = arith.negf %206 : vector<8x128xf32>
      %208 = math.exp %207 : vector<8x128xf32>
      %cst_80 = arith.constant 1.000000e+00 : f32
      %209 = vector.broadcast %cst_80 : f32 to vector<8x128xf32>
      %210 = arith.addf %209, %208 : vector<8x128xf32>
      %211 = arith.divf %209, %210 : vector<8x128xf32>
      %212 = vector.extract_strided_slice %180 {offsets = [0, 128], sizes = [8, 128], strides = [1, 1]} : vector<8x512xf32> to vector<8x128xf32>
      %213 = arith.negf %212 : vector<8x128xf32>
      %214 = math.exp %213 : vector<8x128xf32>
      %cst_81 = arith.constant 1.000000e+00 : f32
      %215 = vector.broadcast %cst_81 : f32 to vector<8x128xf32>
      %216 = arith.addf %215, %214 : vector<8x128xf32>
      %217 = arith.divf %215, %216 : vector<8x128xf32>
      %218 = vector.extract_strided_slice %180 {offsets = [0, 256], sizes = [8, 128], strides = [1, 1]} : vector<8x512xf32> to vector<8x128xf32>
      %219 = math.tanh %218 : vector<8x128xf32>
      %220 = vector.extract_strided_slice %180 {offsets = [0, 384], sizes = [8, 128], strides = [1, 1]} : vector<8x512xf32> to vector<8x128xf32>
      %221 = arith.negf %220 : vector<8x128xf32>
      %222 = math.exp %221 : vector<8x128xf32>
      %cst_82 = arith.constant 1.000000e+00 : f32
      %223 = vector.broadcast %cst_82 : f32 to vector<8x128xf32>
      %224 = arith.addf %223, %222 : vector<8x128xf32>
      %225 = arith.divf %223, %224 : vector<8x128xf32>
      %226 = arith.mulf %217, %160 : vector<8x128xf32>
      %227 = arith.mulf %211, %219 : vector<8x128xf32>
      %228 = arith.addf %226, %227 : vector<8x128xf32>
      %229 = math.tanh %228 : vector<8x128xf32>
      %230 = arith.mulf %225, %229 : vector<8x128xf32>
      %231 = arith.index_cast %170 : i32 to index
      %c0_83 = arith.constant 0 : index
      %232 = vector.load %arg13[%231, %c0_83] : memref<64x128xf32, #tpu.memory_space<vmem>>, vector<8x128xf32>
      tpu.vector_store %arg13[%231, %c0_83], %205 {strides = array<i32>} : memref<64x128xf32, #tpu.memory_space<vmem>>, vector<8x128xf32>,
      %233 = arith.index_cast %170 : i32 to index
      %c0_84 = arith.constant 0 : index
      %234 = vector.load %arg14[%233, %c0_84] : memref<64x128xf32, #tpu.memory_space<vmem>>, vector<8x128xf32>
      tpu.vector_store %arg14[%233, %c0_84], %230 {strides = array<i32>} : memref<64x128xf32, #tpu.memory_space<vmem>>, vector<8x128xf32>,
      %c4_i32_85 = arith.constant 4 : i32
      %235 = arith.muli %c4_i32_85, %arg15 : i32
      %c3_i32 = arith.constant 3 : i32
      %236 = arith.addi %235, %c3_i32 : i32
      %c8_i32_86 = arith.constant 8 : i32
      %237 = arith.muli %236, %c8_i32_86 : i32
      %238 = tpu.assume_multiple %237, 8 : i32
      %239 = arith.index_cast %238 : i32 to index
      %c0_87 = arith.constant 0 : index
      %240 = vector.load %arg12[%239, %c0_87] : memref<64x1152xf32, #tpu.memory_space<vmem>>, vector<8x512xf32>
      %c0_88 = arith.constant 0 : index
      %c0_89 = arith.constant 0 : index
      %241 = vector.load %arg4[%c0_88, %c0_89] : memref<128x512xf32, #tpu.memory_space<vmem>>, vector<128x512xf32>
      %cst_90 = arith.constant dense<0.000000e+00> : vector<8x512xf32>
      %242 = tpu.matmul %205, %241, %cst_90 {dimension_numbers = #tpu.dot_dimension_numbers<[1], [0], [0], [1], [0, 0, 1, 1], [], []>} : vector<8x128xf32>, vector<128x512xf32>, vector<8x512xf32> -> vector<8x512xf32>
      %243 = arith.addf %240, %242 : vector<8x512xf32>
      %244 = arith.index_cast %238 : i32 to index
      %c512_91 = arith.constant 512 : index
      %245 = vector.load %arg12[%244, %c512_91] : memref<64x1152xf32, #tpu.memory_space<vmem>>, vector<8x512xf32>
      %c0_92 = arith.constant 0 : index
      %c0_93 = arith.constant 0 : index
      %246 = vector.load %arg5[%c0_92, %c0_93] : memref<128x512xf32, #tpu.memory_space<vmem>>, vector<128x512xf32>
      %cst_94 = arith.constant dense<0.000000e+00> : vector<8x512xf32>
      %247 = tpu.matmul %230, %246, %cst_94 {dimension_numbers = #tpu.dot_dimension_numbers<[1], [0], [0], [1], [0, 0, 1, 1], [], []>} : vector<8x128xf32>, vector<128x512xf32>, vector<8x512xf32> -> vector<8x512xf32>
      %248 = arith.addf %245, %247 : vector<8x512xf32>
      %249 = vector.extract_strided_slice %243 {offsets = [0, 0], sizes = [8, 128], strides = [1, 1]} : vector<8x512xf32> to vector<8x128xf32>
      %250 = arith.negf %249 : vector<8x128xf32>
      %251 = math.exp %250 : vector<8x128xf32>
      %cst_95 = arith.constant 1.000000e+00 : f32
      %252 = vector.broadcast %cst_95 : f32 to vector<8x128xf32>
      %253 = arith.addf %252, %251 : vector<8x128xf32>
      %254 = arith.divf %252, %253 : vector<8x128xf32>
      %255 = vector.extract_strided_slice %243 {offsets = [0, 128], sizes = [8, 128], strides = [1, 1]} : vector<8x512xf32> to vector<8x128xf32>
      %256 = arith.negf %255 : vector<8x128xf32>
      %257 = math.exp %256 : vector<8x128xf32>
      %cst_96 = arith.constant 1.000000e+00 : f32
      %258 = vector.broadcast %cst_96 : f32 to vector<8x128xf32>
      %259 = arith.addf %258, %257 : vector<8x128xf32>
      %260 = arith.divf %258, %259 : vector<8x128xf32>
      %261 = vector.extract_strided_slice %243 {offsets = [0, 256], sizes = [8, 128], strides = [1, 1]} : vector<8x512xf32> to vector<8x128xf32>
      %262 = math.tanh %261 : vector<8x128xf32>
      %263 = vector.extract_strided_slice %243 {offsets = [0, 384], sizes = [8, 128], strides = [1, 1]} : vector<8x512xf32> to vector<8x128xf32>
      %264 = arith.negf %263 : vector<8x128xf32>
      %265 = math.exp %264 : vector<8x128xf32>
      %cst_97 = arith.constant 1.000000e+00 : f32
      %266 = vector.broadcast %cst_97 : f32 to vector<8x128xf32>
      %267 = arith.addf %266, %265 : vector<8x128xf32>
      %268 = arith.divf %266, %267 : vector<8x128xf32>
      %269 = arith.mulf %260, %203 : vector<8x128xf32>
      %270 = arith.mulf %254, %262 : vector<8x128xf32>
      %271 = arith.addf %269, %270 : vector<8x128xf32>
      %272 = math.tanh %271 : vector<8x128xf32>
      %273 = arith.mulf %268, %272 : vector<8x128xf32>
      %274 = vector.extract_strided_slice %248 {offsets = [0, 0], sizes = [8, 128], strides = [1, 1]} : vector<8x512xf32> to vector<8x128xf32>
      %275 = arith.negf %274 : vector<8x128xf32>
      %276 = math.exp %275 : vector<8x128xf32>
      %cst_98 = arith.constant 1.000000e+00 : f32
      %277 = vector.broadcast %cst_98 : f32 to vector<8x128xf32>
      %278 = arith.addf %277, %276 : vector<8x128xf32>
      %279 = arith.divf %277, %278 : vector<8x128xf32>
      %280 = vector.extract_strided_slice %248 {offsets = [0, 128], sizes = [8, 128], strides = [1, 1]} : vector<8x512xf32> to vector<8x128xf32>
      %281 = arith.negf %280 : vector<8x128xf32>
      %282 = math.exp %281 : vector<8x128xf32>
      %cst_99 = arith.constant 1.000000e+00 : f32
      %283 = vector.broadcast %cst_99 : f32 to vector<8x128xf32>
      %284 = arith.addf %283, %282 : vector<8x128xf32>
      %285 = arith.divf %283, %284 : vector<8x128xf32>
      %286 = vector.extract_strided_slice %248 {offsets = [0, 256], sizes = [8, 128], strides = [1, 1]} : vector<8x512xf32> to vector<8x128xf32>
      %287 = math.tanh %286 : vector<8x128xf32>
      %288 = vector.extract_strided_slice %248 {offsets = [0, 384], sizes = [8, 128], strides = [1, 1]} : vector<8x512xf32> to vector<8x128xf32>
      %289 = arith.negf %288 : vector<8x128xf32>
      %290 = math.exp %289 : vector<8x128xf32>
      %cst_100 = arith.constant 1.000000e+00 : f32
      %291 = vector.broadcast %cst_100 : f32 to vector<8x128xf32>
      %292 = arith.addf %291, %290 : vector<8x128xf32>
      %293 = arith.divf %291, %292 : vector<8x128xf32>
      %294 = arith.mulf %285, %228 : vector<8x128xf32>
      %295 = arith.mulf %279, %287 : vector<8x128xf32>
      %296 = arith.addf %294, %295 : vector<8x128xf32>
      %297 = math.tanh %296 : vector<8x128xf32>
      %298 = arith.mulf %293, %297 : vector<8x128xf32>
      %299 = arith.index_cast %238 : i32 to index
      %c0_101 = arith.constant 0 : index
      %300 = vector.load %arg13[%299, %c0_101] : memref<64x128xf32, #tpu.memory_space<vmem>>, vector<8x128xf32>
      tpu.vector_store %arg13[%299, %c0_101], %273 {strides = array<i32>} : memref<64x128xf32, #tpu.memory_space<vmem>>, vector<8x128xf32>,
      %301 = arith.index_cast %238 : i32 to index
      %c0_102 = arith.constant 0 : index
      %302 = vector.load %arg14[%301, %c0_102] : memref<64x128xf32, #tpu.memory_space<vmem>>, vector<8x128xf32>
      tpu.vector_store %arg14[%301, %c0_102], %298 {strides = array<i32>} : memref<64x128xf32, #tpu.memory_space<vmem>>, vector<8x128xf32>,
      scf.yield %273, %271, %298, %296 : vector<8x128xf32>, vector<8x128xf32>, vector<8x128xf32>, vector<8x128xf32>
    }
    %c2_i32_9 = arith.constant 2 : i32
    %c0_10 = arith.constant 0 : index
    %c0_11 = arith.constant 0 : index
    %11 = vector.load %arg13[%c0_10, %c0_11] : memref<64x128xf32, #tpu.memory_space<vmem>>, vector<64x128xf32>
    %c0_12 = arith.constant 0 : index
    %c0_13 = arith.constant 0 : index
    %12 = vector.load %arg6[%c0_12, %c0_13] : memref<128x128xf32, #tpu.memory_space<vmem>>, vector<128x128xf32>
    %cst_14 = arith.constant dense<0.000000e+00> : vector<64x128xf32>
    %13 = tpu.matmul %11, %12, %cst_14 {dimension_numbers = #tpu.dot_dimension_numbers<[1], [0], [0], [1], [0, 0, 1, 1], [], []>} : vector<64x128xf32>, vector<128x128xf32>, vector<64x128xf32> -> vector<64x128xf32>
    %c0_15 = arith.constant 0 : index
    %c0_16 = arith.constant 0 : index
    %14 = vector.load %arg7[%c0_15, %c0_16] : memref<1x128xf32, #tpu.memory_space<vmem>>, vector<1x128xf32>
    %15 = vector.broadcast %14 : vector<1x128xf32> to vector<64x128xf32>
    %16 = arith.addf %13, %15 : vector<64x128xf32>
    %c0_17 = arith.constant 0 : index
    %c0_18 = arith.constant 0 : index
    %17 = vector.load %arg14[%c0_17, %c0_18] : memref<64x128xf32, #tpu.memory_space<vmem>>, vector<64x128xf32>
    %c0_19 = arith.constant 0 : index
    %c0_20 = arith.constant 0 : index
    %18 = vector.load %arg8[%c0_19, %c0_20] : memref<128x128xf32, #tpu.memory_space<vmem>>, vector<128x128xf32>
    %cst_21 = arith.constant dense<0.000000e+00> : vector<64x128xf32>
    %19 = tpu.matmul %17, %18, %cst_21 {dimension_numbers = #tpu.dot_dimension_numbers<[1], [0], [0], [1], [0, 0, 1, 1], [], []>} : vector<64x128xf32>, vector<128x128xf32>, vector<64x128xf32> -> vector<64x128xf32>
    %c0_22 = arith.constant 0 : index
    %c0_23 = arith.constant 0 : index
    %20 = vector.load %arg9[%c0_22, %c0_23] : memref<1x128xf32, #tpu.memory_space<vmem>>, vector<1x128xf32>
    %21 = vector.broadcast %20 : vector<1x128xf32> to vector<64x128xf32>
    %22 = arith.addf %19, %21 : vector<64x128xf32>
    %23 = arith.mulf %16, %22 : vector<64x128xf32>
    %c0_24 = arith.constant 0 : index
    %c0_25 = arith.constant 0 : index
    %24 = vector.load %arg10[%c0_24, %c0_25] : memref<128x128xf32, #tpu.memory_space<vmem>>, vector<128x128xf32>
    %cst_26 = arith.constant dense<0.000000e+00> : vector<64x128xf32>
    %25 = tpu.matmul %23, %24, %cst_26 {dimension_numbers = #tpu.dot_dimension_numbers<[1], [0], [0], [1], [0, 0, 1, 1], [], []>} : vector<64x128xf32>, vector<128x128xf32>, vector<64x128xf32> -> vector<64x128xf32>
    %c0_27 = arith.constant 0 : index
    %c1024 = arith.constant 1024 : index
    %26 = vector.load %arg12[%c0_27, %c1024] : memref<64x1152xf32, #tpu.memory_space<vmem>>, vector<64x128xf32>
    %27 = arith.addf %25, %26 : vector<64x128xf32>
    %c0_28 = arith.constant 0 : index
    %c0_29 = arith.constant 0 : index
    %c0_30 = arith.constant 0 : index
    %28 = vector.load %arg11[%c0_28, %c0_29, %c0_30] : memref<1x64x128xf32, #tpu.memory_space<vmem>>, vector<1x64x128xf32>
    %29 = vector.shape_cast %28 : vector<1x64x128xf32> to vector<64x128xf32>
    %30 = vector.shape_cast %27 : vector<64x128xf32> to vector<1x64x128xf32>
    tpu.vector_store %arg11[%c0_28, %c0_29, %c0_30], %30 {strides = array<i32>} : memref<1x64x128xf32, #tpu.memory_space<vmem>>, vector<1x64x128xf32>,
    return
  }
  func.func @transform_0(%arg0: i32) -> (i32, i32, i32) {
    %c0_i32 = arith.constant 0 : i32
    %c0_i32_0 = arith.constant 0 : i32
    %c0_i32_1 = arith.constant 0 : i32
    return %arg0, %c0_i32, %c0_i32_0 : i32, i32, i32
  }
  func.func @transform_1(%arg0: i32) -> (i32, i32) {
    %c0_i32 = arith.constant 0 : i32
    %c0_i32_0 = arith.constant 0 : i32
    %c0_i32_1 = arith.constant 0 : i32
    return %c0_i32, %c0_i32_0 : i32, i32
  }
  func.func @transform_2(%arg0: i32) -> (i32, i32) {
    %c0_i32 = arith.constant 0 : i32
    %c0_i32_0 = arith.constant 0 : i32
    %c0_i32_1 = arith.constant 0 : i32
    return %c0_i32, %c0_i32_0 : i32, i32
  }
  func.func @transform_3(%arg0: i32) -> (i32, i32) {
    %c0_i32 = arith.constant 0 : i32
    %c0_i32_0 = arith.constant 0 : i32
    %c0_i32_1 = arith.constant 0 : i32
    return %c0_i32, %c0_i32_0 : i32, i32
  }
  func.func @transform_4(%arg0: i32) -> (i32, i32) {
    %c0_i32 = arith.constant 0 : i32
    %c0_i32_0 = arith.constant 0 : i32
    %c0_i32_1 = arith.constant 0 : i32
    return %c0_i32, %c0_i32_0 : i32, i32
  }
  func.func @transform_5(%arg0: i32) -> (i32, i32) {
    %c0_i32 = arith.constant 0 : i32
    %c0_i32_0 = arith.constant 0 : i32
    %c0_i32_1 = arith.constant 0 : i32
    return %c0_i32, %c0_i32_0 : i32, i32
  }
  func.func @transform_6(%arg0: i32) -> (i32, i32) {
    %c0_i32 = arith.constant 0 : i32
    %c0_i32_0 = arith.constant 0 : i32
    %c0_i32_1 = arith.constant 0 : i32
    return %c0_i32, %c0_i32_0 : i32, i32
  }
  func.func @transform_7(%arg0: i32) -> (i32, i32) {
    %c0_i32 = arith.constant 0 : i32
    %c0_i32_0 = arith.constant 0 : i32
    %c0_i32_1 = arith.constant 0 : i32
    return %c0_i32, %c0_i32_0 : i32, i32
  }
  func.func @transform_8(%arg0: i32) -> (i32, i32) {
    %c0_i32 = arith.constant 0 : i32
    %c0_i32_0 = arith.constant 0 : i32
    %c0_i32_1 = arith.constant 0 : i32
    return %c0_i32, %c0_i32_0 : i32, i32
  }
  func.func @transform_9(%arg0: i32) -> (i32, i32) {
    %c0_i32 = arith.constant 0 : i32
    %c0_i32_0 = arith.constant 0 : i32
    %c0_i32_1 = arith.constant 0 : i32
    return %c0_i32, %c0_i32_0 : i32, i32
  }
  func.func @transform_10(%arg0: i32) -> (i32, i32, i32) {
    %c0_i32 = arith.constant 0 : i32
    %c0_i32_0 = arith.constant 0 : i32
    %c0_i32_1 = arith.constant 0 : i32
    return %arg0, %c0_i32, %c0_i32_0 : i32, i32, i32
  }
}

</mosaic_0001>

<llo_original>
// kernel: mulcat_block.1
$region0: #{mulcat_block.1}
  #allocation0 [shape = 'u32[]', space=smem, size = 0x4, offset = 0x4, fixed_abs, tag = 'smem constant byte address 0x4 - core index']
  #allocation1 [shape = 'u32[72,128]{1,0:T(1,128)}', space=vmem, size = 0x9000, scoped, tag = 'internal scratch']
  #allocation2 [shape = 'f32[64,1152]{1,0:T(8,128)}', space=vmem, size = 0x48000, scoped, tag = 'scratch operand']
  #allocation3 [shape = 'f32[64,128]{1,0:T(8,128)}', space=vmem, size = 0x8000, scoped, tag = 'scratch operand']
  #allocation4 [shape = 'f32[64,128]{1,0:T(8,128)}', space=vmem, size = 0x8000, scoped, tag = 'scratch operand']
  %s0 = inlined_call_operand.vmem [shape: f32[1,64,128], index: 0, kind: input, shape index: {}]
  %s1 = inlined_call_operand.vmem [shape: f32[128,1152], index: 1, kind: input, shape index: {}]
  %s2 = inlined_call_operand.vmem [shape: f32[1,1152], index: 2, kind: input, shape index: {}]
  %s3 = inlined_call_operand.vmem [shape: f32[128,512], index: 3, kind: input, shape index: {}]
  %s4 = inlined_call_operand.vmem [shape: f32[128,512], index: 4, kind: input, shape index: {}]
  %s5 = inlined_call_operand.vmem [shape: f32[128,128], index: 5, kind: input, shape index: {}]
  %s6 = inlined_call_operand.vmem [shape: f32[1,128], index: 6, kind: input, shape index: {}]
  %s7 = inlined_call_operand.vmem [shape: f32[128,128], index: 7, kind: input, shape index: {}]
  %s8 = inlined_call_operand.vmem [shape: f32[1,128], index: 8, kind: input, shape index: {}]
  %s9 = inlined_call_operand.vmem [shape: f32[128,128], index: 9, kind: input, shape index: {}]
  %s10 = inlined_call_operand.vmem [shape: f32[1,64,128], index: 10, kind: output, shape index: {}]
  %s11 = sld [smem:[#allocation0]]
  $region57: #{mulcat_block.1} parent=0
    _
  %s13 = ssub.s32 1, %s11
  %s14 = scalar_select 0, %s13, %s11
  // Predicated region
  $region2: #{mulcat_block.1} parent=0 // pred_check
    _
  $region3: #{mulcat_block.1} parent=0 // pred_check_branch
    %16 = sbr.rel (0) target = $region5
  $region4: #{mulcat_block.1} parent=0 // pred_region
    _
  $region5: #{mulcat_block.1} parent=0 // pred_fallthru
    _
  // Predicated region
  $region6: #{mulcat_block.1} parent=0 // pred_check
    _
  $region7: #{mulcat_block.1} parent=0 // pred_check_branch
    %18 = sbr.rel (0) target = $region9
  $region8: #{mulcat_block.1} parent=0 // pred_region
    _
  $region9: #{mulcat_block.1} parent=0 // pred_fallthru
    _
  // Predicated region
  $region10: #{mulcat_block.1} parent=0 // pred_check
    _
  $region11: #{mulcat_block.1} parent=0 // pred_check_branch
    %20 = sbr.rel (0) target = $region13
  $region12: #{mulcat_block.1} parent=0 // pred_region
    _
  $region13: #{mulcat_block.1} parent=0 // pred_fallthru
    _
  // Predicated region
  $region14: #{mulcat_block.1} parent=0 // pred_check
    _
  $region15: #{mulcat_block.1} parent=0 // pred_check_branch
    %22 = sbr.rel (0) target = $region17
  $region16: #{mulcat_block.1} parent=0 // pred_region
    _
  $region17: #{mulcat_block.1} parent=0 // pred_fallthru
    _
  // Predicated region
  $region18: #{mulcat_block.1} parent=0 // pred_check
    _
  $region19: #{mulcat_block.1} parent=0 // pred_check_branch
    %24 = sbr.rel (0) target = $region21
  $region20: #{mulcat_block.1} parent=0 // pred_region
    _
  $region21: #{mulcat_block.1} parent=0 // pred_fallthru
    _
  // Predicated region
  $region22: #{mulcat_block.1} parent=0 // pred_check
    _
  $region23: #{mulcat_block.1} parent=0 // pred_check_branch
    %26 = sbr.rel (0) target = $region25
  $region24: #{mulcat_block.1} parent=0 // pred_region
    _
  $region25: #{mulcat_block.1} parent=0 // pred_fallthru
    _
  // Predicated region
  $region26: #{mulcat_block.1} parent=0 // pred_check
    _
  $region27: #{mulcat_block.1} parent=0 // pred_check_branch
    %28 = sbr.rel (0) target = $region29
  $region28: #{mulcat_block.1} parent=0 // pred_region
    _
  $region29: #{mulcat_block.1} parent=0 // pred_fallthru
    _
  // Predicated region
  $region30: #{mulcat_block.1} parent=0 // pred_check
    _
  $region31: #{mulcat_block.1} parent=0 // pred_check_branch
    %30 = sbr.rel (0) target = $region33
  $region32: #{mulcat_block.1} parent=0 // pred_region
    _
  $region33: #{mulcat_block.1} parent=0 // pred_fallthru
    _
  // Predicated region
  $region34: #{mulcat_block.1} parent=0 // pred_check
    _
  $region35: #{mulcat_block.1} parent=0 // pred_check_branch
    %32 = sbr.rel (0) target = $region37
  $region36: #{mulcat_block.1} parent=0 // pred_region
    _
  $region37: #{mulcat_block.1} parent=0 // pred_fallthru
    _
  // Predicated region
  $region38: #{mulcat_block.1} parent=0 // pred_check
    _
  $region39: #{mulcat_block.1} parent=0 // pred_check_branch
    %34 = sbr.rel (0) target = $region41
  $region40: #{mulcat_block.1} parent=0 // pred_region
    _
  $region41: #{mulcat_block.1} parent=0 // pred_fallthru
    _
  %v35 = vld [vmem:[%s0] sm:$0xff]
  %v36 = vld [vmem:[%s0 + $0x8] sm:$0xff]
  %v37 = vld [vmem:[%s0 + $0x10] sm:$0xff]
  %v38 = vld [vmem:[%s0 + $0x18] sm:$0xff]
  %v39 = vld [vmem:[%s0 + $0x20] sm:$0xff]
  %v40 = vld [vmem:[%s0 + $0x28] sm:$0xff]
  %v41 = vld [vmem:[%s0 + $0x30] sm:$0xff]
  %v42 = vld [vmem:[%s0 + $0x38] sm:$0xff]
  %v43 = vld [vmem:[%s1] sm:$0xff]
  %v44 = vld [vmem:[%s1 + $0x8] sm:$0xff]
  %v45 = vld [vmem:[%s1 + $0x10] sm:$0xff]
  %v46 = vld [vmem:[%s1 + $0x18] sm:$0xff]
  %v47 = vld [vmem:[%s1 + $0x20] sm:$0xff]
  %v48 = vld [vmem:[%s1 + $0x28] sm:$0xff]
  %v49 = vld [vmem:[%s1 + $0x30] sm:$0xff]
  %v50 = vld [vmem:[%s1 + $0x38] sm:$0xff]
  %v51 = vld [vmem:[%s1 + $0x40] sm:$0xff]
  %v52 = vld [vmem:[%s1 + $0x48] sm:$0xff]
  %v53 = vld [vmem:[%s1 + $0x50] sm:$0xff]
  %v54 = vld [vmem:[%s1 + $0x58] sm:$0xff]
  %v55 = vld [vmem:[%s1 + $0x60] sm:$0xff]
  %v56 = vld [vmem:[%s1 + $0x68] sm:$0xff]
  %v57 = vld [vmem:[%s1 + $0x70] sm:$0xff]
  %v58 = vld [vmem:[%s1 + $0x78] sm:$0xff]
  %v59 = vld [vmem:[%s1 + $0x80] sm:$0xff]
  %v60 = vld [vmem:[%s1 + $0x88] sm:$0xff]
  %v61 = vld [vmem:[%s1 + $0x90] sm:$0xff]
  %v62 = vld [vmem:[%s1 + $0x98] sm:$0xff]
  %v63 = vld [vmem:[%s1 + $0xa0] sm:$0xff]
  %v64 = vld [vmem:[%s1 + $0xa8] sm:$0xff]
  %v65 = vld [vmem:[%s1 + $0xb0] sm:$0xff]
  %v66 = vld [vmem:[%s1 + $0xb8] sm:$0xff]
  %v67 = vld [vmem:[%s1 + $0xc0] sm:$0xff]
  %v68 = vld [vmem:[%s1 + $0xc8] sm:$0xff]
  %v69 = vld [vmem:[%s1 + $0xd0] sm:$0xff]
  %v70 = vld [vmem:[%s1 + $0xd8] sm:$0xff]
  %v71 = vld [vmem:[%s1 + $0xe0] sm:$0xff]
  %v72 = vld [vmem:[%s1 + $0xe8] sm:$0xff]
  %v73 = vld [vmem:[%s1 + $0xf0] sm:$0xff]
  %v74 = vld [vmem:[%s1 + $0xf8] sm:$0xff]
  %v75 = vld [vmem:[%s1 + $0x100] sm:$0xff]
  %v76 = vld [vmem:[%s1 + $0x108] sm:$0xff]
  %v77 = vld [vmem:[%s1 + $0x110] sm:$0xff]
  %v78 = vld [vmem:[%s1 + $0x118] sm:$0xff]
  %v79 = vld [vmem:[%s1 + $0x120] sm:$0xff]
  %v80 = vld [vmem:[%s1 + $0x128] sm:$0xff]
  %v81 = vld [vmem:[%s1 + $0x130] sm:$0xff]
  %v82 = vld [vmem:[%s1 + $0x138] sm:$0xff]
  %v83 = vld [vmem:[%s1 + $0x140] sm:$0xff]
  %v84 = vld [vmem:[%s1 + $0x148] sm:$0xff]
  %v85 = vld [vmem:[%s1 + $0x150] sm:$0xff]
  %v86 = vld [vmem:[%s1 + $0x158] sm:$0xff]
  %v87 = vld [vmem:[%s1 + $0x160] sm:$0xff]
  %v88 = vld [vmem:[%s1 + $0x168] sm:$0xff]
  %v89 = vld [vmem:[%s1 + $0x170] sm:$0xff]
  %v90 = vld [vmem:[%s1 + $0x178] sm:$0xff]
  %v91 = vld [vmem:[%s1 + $0x180] sm:$0xff]
  %v92 = vld [vmem:[%s1 + $0x188] sm:$0xff]
  %v93 = vld [vmem:[%s1 + $0x190] sm:$0xff]
  %v94 = vld [vmem:[%s1 + $0x198] sm:$0xff]
  %v95 = vld [vmem:[%s1 + $0x1a0] sm:$0xff]
  %v96 = vld [vmem:[%s1 + $0x1a8] sm:$0xff]
  %v97 = vld [vmem:[%s1 + $0x1b0] sm:$0xff]
  %v98 = vld [vmem:[%s1 + $0x1b8] sm:$0xff]
  %v99 = vld [vmem:[%s1 + $0x1c0] sm:$0xff]
  %v100 = vld [vmem:[%s1 + $0x1c8] sm:$0xff]
  %v101 = vld [vmem:[%s1 + $0x1d0] sm:$0xff]
  %v102 = vld [vmem:[%s1 + $0x1d8] sm:$0xff]
  %v103 = vld [vmem:[%s1 + $0x1e0] sm:$0xff]
  %v104 = vld [vmem:[%s1 + $0x1e8] sm:$0xff]
  %v105 = vld [vmem:[%s1 + $0x1f0] sm:$0xff]
  %v106 = vld [vmem:[%s1 + $0x1f8] sm:$0xff]
  %v107 = vld [vmem:[%s1 + $0x200] sm:$0xff]
  %v108 = vld [vmem:[%s1 + $0x208] sm:$0xff]
  %v109 = vld [vmem:[%s1 + $0x210] sm:$0xff]
  %v110 = vld [vmem:[%s1 + $0x218] sm:$0xff]
  %v111 = vld [vmem:[%s1 + $0x220] sm:$0xff]
  %v112 = vld [vmem:[%s1 + $0x228] sm:$0xff]
  %v113 = vld [vmem:[%s1 + $0x230] sm:$0xff]
  %v114 = vld [vmem:[%s1 + $0x238] sm:$0xff]
  %v115 = vld [vmem:[%s1 + $0x240] sm:$0xff]
  %v116 = vld [vmem:[%s1 + $0x248] sm:$0xff]
  %v117 = vld [vmem:[%s1 + $0x250] sm:$0xff]
  %v118 = vld [vmem:[%s1 + $0x258] sm:$0xff]
  %v119 = vld [vmem:[%s1 + $0x260] sm:$0xff]
  %v120 = vld [vmem:[%s1 + $0x268] sm:$0xff]
  %v121 = vld [vmem:[%s1 + $0x270] sm:$0xff]
  %v122 = vld [vmem:[%s1 + $0x278] sm:$0xff]
  %v123 = vld [vmem:[%s1 + $0x280] sm:$0xff]
  %v124 = vld [vmem:[%s1 + $0x288] sm:$0xff]
  %v125 = vld [vmem:[%s1 + $0x290] sm:$0xff]
  %v126 = vld [vmem:[%s1 + $0x298] sm:$0xff]
  %v127 = vld [vmem:[%s1 + $0x2a0] sm:$0xff]
  %v128 = vld [vmem:[%s1 + $0x2a8] sm:$0xff]
  %v129 = vld [vmem:[%s1 + $0x2b0] sm:$0xff]
  %v130 = vld [vmem:[%s1 + $0x2b8] sm:$0xff]
  %v131 = vld [vmem:[%s1 + $0x2c0] sm:$0xff]
  %v132 = vld [vmem:[%s1 + $0x2c8] sm:$0xff]
  %v133 = vld [vmem:[%s1 + $0x2d0] sm:$0xff]
  %v134 = vld [vmem:[%s1 + $0x2d8] sm:$0xff]
  %v135 = vld [vmem:[%s1 + $0x2e0] sm:$0xff]
  %v136 = vld [vmem:[%s1 + $0x2e8] sm:$0xff]
  %v137 = vld [vmem:[%s1 + $0x2f0] sm:$0xff]
  %v138 = vld [vmem:[%s1 + $0x2f8] sm:$0xff]
  %v139 = vld [vmem:[%s1 + $0x300] sm:$0xff]
  %v140 = vld [vmem:[%s1 + $0x308] sm:$0xff]
  %v141 = vld [vmem:[%s1 + $0x310] sm:$0xff]
  %v142 = vld [vmem:[%s1 + $0x318] sm:$0xff]
  %v143 = vld [vmem:[%s1 + $0x320] sm:$0xff]
  %v144 = vld [vmem:[%s1 + $0x328] sm:$0xff]
  %v145 = vld [vmem:[%s1 + $0x330] sm:$0xff]
  %v146 = vld [vmem:[%s1 + $0x338] sm:$0xff]
  %v147 = vld [vmem:[%s1 + $0x340] sm:$0xff]
  %v148 = vld [vmem:[%s1 + $0x348] sm:$0xff]
  %v149 = vld [vmem:[%s1 + $0x350] sm:$0xff]
  %v150 = vld [vmem:[%s1 + $0x358] sm:$0xff]
  %v151 = vld [vmem:[%s1 + $0x360] sm:$0xff]
  %v152 = vld [vmem:[%s1 + $0x368] sm:$0xff]
  %v153 = vld [vmem:[%s1 + $0x370] sm:$0xff]
  %v154 = vld [vmem:[%s1 + $0x378] sm:$0xff]
  %v155 = vld [vmem:[%s1 + $0x380] sm:$0xff]
  %v156 = vld [vmem:[%s1 + $0x388] sm:$0xff]
  %v157 = vld [vmem:[%s1 + $0x390] sm:$0xff]
  %v158 = vld [vmem:[%s1 + $0x398] sm:$0xff]
  %v159 = vld [vmem:[%s1 + $0x3a0] sm:$0xff]
  %v160 = vld [vmem:[%s1 + $0x3a8] sm:$0xff]
  %v161 = vld [vmem:[%s1 + $0x3b0] sm:$0xff]
  %v162 = vld [vmem:[%s1 + $0x3b8] sm:$0xff]
  %v163 = vld [vmem:[%s1 + $0x3c0] sm:$0xff]
  %v164 = vld [vmem:[%s1 + $0x3c8] sm:$0xff]
  %v165 = vld [vmem:[%s1 + $0x3d0] sm:$0xff]
  %v166 = vld [vmem:[%s1 + $0x3d8] sm:$0xff]
  %v167 = vld [vmem:[%s1 + $0x3e0] sm:$0xff]
  %v168 = vld [vmem:[%s1 + $0x3e8] sm:$0xff]
  %v169 = vld [vmem:[%s1 + $0x3f0] sm:$0xff]
  %v170 = vld [vmem:[%s1 + $0x3f8] sm:$0xff]
  %v171 = vld [vmem:[%s1 + $0x400] sm:$0xff]
  %v172 = vld [vmem:[%s1 + $0x408] sm:$0xff]
  %v173 = vld [vmem:[%s1 + $0x410] sm:$0xff]
  %v174 = vld [vmem:[%s1 + $0x418] sm:$0xff]
  %v175 = vld [vmem:[%s1 + $0x420] sm:$0xff]
  %v176 = vld [vmem:[%s1 + $0x428] sm:$0xff]
  %v177 = vld [vmem:[%s1 + $0x430] sm:$0xff]
  %v178 = vld [vmem:[%s1 + $0x438] sm:$0xff]
  %v179 = vld [vmem:[%s1 + $0x440] sm:$0xff]
  %v180 = vld [vmem:[%s1 + $0x448] sm:$0xff]
  %v181 = vld [vmem:[%s1 + $0x450] sm:$0xff]
  %v182 = vld [vmem:[%s1 + $0x458] sm:$0xff]
  %v183 = vld [vmem:[%s1 + $0x460] sm:$0xff]
  %v184 = vld [vmem:[%s1 + $0x468] sm:$0xff]
  %v185 = vld [vmem:[%s1 + $0x470] sm:$0xff]
  %v186 = vld [vmem:[%s1 + $0x478] sm:$0xff]
  %v187 = vld [vmem:[%s2] sm:$0xff]
  %v188 = vld [vmem:[%s2 + $0x8] sm:$0x1]
  %v191 = vperm.slane %v187, 0
  %v192 = vperm.slane %v187, 1
  %v193 = vperm.slane %v187, 2
  %v194 = vperm.slane %v187, 3
  %v195 = vperm.slane %v187, 4
  %v196 = vperm.slane %v187, 5
  %v197 = vperm.slane %v187, 6
  %v198 = vperm.slane %v187, 7
  %v199 = vperm.slane %v188, 0
  %209 = vmatpush.msra.mxu0 %v178
  %210 = vmatpush.msra.mxu0 %v169
  %211 = vmatpush.msra.mxu0 %v160
  %212 = vmatpush.msra.mxu0 %v151
  %213 = vmatpush.msra.mxu0 %v142
  %214 = vmatpush.msra.mxu0 %v133
  %215 = vmatpush.msra.mxu0 %v124
  %216 = vmatpush.msra.mxu0 %v115
  %217 = vmatpush.msra.mxu0 %v106
  %218 = vmatpush.msra.mxu0 %v97
  %219 = vmatpush.msra.mxu0 %v88
  %220 = vmatpush.msra.mxu0 %v79
  %221 = vmatpush.msra.mxu0 %v70
  %222 = vmatpush.msra.mxu0 %v61
  %223 = vmatpush.msra.mxu0 %v52
  %224 = vmatpush.msra.mxu0 %v43
  %225 = vmatmul.f32.gmra.mxu0 %v35
  %v226 = vpop.f32.mrf.mxu0
  %v227 = vadd.f32 %v191, %v226
  %228 = vmatmul.f32.gmra.mxu0 %v36
  %v229 = vpop.f32.mrf.mxu0
  %v230 = vadd.f32 %v191, %v229
  %231 = vmatmul.f32.gmra.mxu0 %v37
  %v232 = vpop.f32.mrf.mxu0
  %v233 = vadd.f32 %v191, %v232
  %234 = vmatmul.f32.gmra.mxu0 %v38
  %v235 = vpop.f32.mrf.mxu0
  %v236 = vadd.f32 %v191, %v235
  %237 = vmatmul.f32.gmra.mxu0 %v39
  %v238 = vpop.f32.mrf.mxu0
  %v239 = vadd.f32 %v191, %v238
  %240 = vmatmul.f32.gmra.mxu0 %v40
  %v241 = vpop.f32.mrf.mxu0
  %v242 = vadd.f32 %v191, %v241
  %243 = vmatmul.f32.gmra.mxu0 %v41
  %v244 = vpop.f32.mrf.mxu0
  %v245 = vadd.f32 %v191, %v244
  %246 = vmatmul.f32.gmra.mxu0 %v42
  %v247 = vpop.f32.mrf.mxu0
  %v248 = vadd.f32 %v191, %v247
  %249 = vdwg.mxu0
  %250 = vmatpush.msra.mxu0 %v179
  %251 = vmatpush.msra.mxu0 %v170
  %252 = vmatpush.msra.mxu0 %v161
  %253 = vmatpush.msra.mxu0 %v152
  %254 = vmatpush.msra.mxu0 %v143
  %255 = vmatpush.msra.mxu0 %v134
  %256 = vmatpush.msra.mxu0 %v125
  %257 = vmatpush.msra.mxu0 %v116
  %258 = vmatpush.msra.mxu0 %v107
  %259 = vmatpush.msra.mxu0 %v98
  %260 = vmatpush.msra.mxu0 %v89
  %261 = vmatpush.msra.mxu0 %v80
  %262 = vmatpush.msra.mxu0 %v71
  %263 = vmatpush.msra.mxu0 %v62
  %264 = vmatpush.msra.mxu0 %v53
  %265 = vmatpush.msra.mxu0 %v44
  %266 = vmatmul.f32.gmra.mxu0 %v35
  %v267 = vpop.f32.mrf.mxu0
  %v268 = vadd.f32 %v192, %v267
  %269 = vmatmul.f32.gmra.mxu0 %v36
  %v270 = vpop.f32.mrf.mxu0
  %v271 = vadd.f32 %v192, %v270
  %272 = vmatmul.f32.gmra.mxu0 %v37
  %v273 = vpop.f32.mrf.mxu0
  %v274 = vadd.f32 %v192, %v273
  %275 = vmatmul.f32.gmra.mxu0 %v38
  %v276 = vpop.f32.mrf.mxu0
  %v277 = vadd.f32 %v192, %v276
  %278 = vmatmul.f32.gmra.mxu0 %v39
  %v279 = vpop.f32.mrf.mxu0
  %v280 = vadd.f32 %v192, %v279
  %281 = vmatmul.f32.gmra.mxu0 %v40
  %v282 = vpop.f32.mrf.mxu0
  %v283 = vadd.f32 %v192, %v282
  %284 = vmatmul.f32.gmra.mxu0 %v41
  %v285 = vpop.f32.mrf.mxu0
  %v286 = vadd.f32 %v192, %v285
  %287 = vmatmul.f32.gmra.mxu0 %v42
  %v288 = vpop.f32.mrf.mxu0
  %v289 = vadd.f32 %v192, %v288
  %290 = vdwg.mxu0
  %291 = vmatpush.msra.mxu0 %v180
  %292 = vmatpush.msra.mxu0 %v171
  %293 = vmatpush.msra.mxu0 %v162
  %294 = vmatpush.msra.mxu0 %v153
  %295 = vmatpush.msra.mxu0 %v144
  %296 = vmatpush.msra.mxu0 %v135
  %297 = vmatpush.msra.mxu0 %v126
  %298 = vmatpush.msra.mxu0 %v117
  %299 = vmatpush.msra.mxu0 %v108
  %300 = vmatpush.msra.mxu0 %v99
  %301 = vmatpush.msra.mxu0 %v90
  %302 = vmatpush.msra.mxu0 %v81
  %303 = vmatpush.msra.mxu0 %v72
  %304 = vmatpush.msra.mxu0 %v63
  %305 = vmatpush.msra.mxu0 %v54
  %306 = vmatpush.msra.mxu0 %v45
  %307 = vmatmul.f32.gmra.mxu0 %v35
  %v308 = vpop.f32.mrf.mxu0
  %v309 = vadd.f32 %v193, %v308
  %310 = vmatmul.f32.gmra.mxu0 %v36
  %v311 = vpop.f32.mrf.mxu0
  %v312 = vadd.f32 %v193, %v311
  %313 = vmatmul.f32.gmra.mxu0 %v37
  %v314 = vpop.f32.mrf.mxu0
  %v315 = vadd.f32 %v193, %v314
  %316 = vmatmul.f32.gmra.mxu0 %v38
  %v317 = vpop.f32.mrf.mxu0
  %v318 = vadd.f32 %v193, %v317
  %319 = vmatmul.f32.gmra.mxu0 %v39
  %v320 = vpop.f32.mrf.mxu0
  %v321 = vadd.f32 %v193, %v320
  %322 = vmatmul.f32.gmra.mxu0 %v40
  %v323 = vpop.f32.mrf.mxu0
  %v324 = vadd.f32 %v193, %v323
  %325 = vmatmul.f32.gmra.mxu0 %v41
  %v326 = vpop.f32.mrf.mxu0
  %v327 = vadd.f32 %v193, %v326
  %328 = vmatmul.f32.gmra.mxu0 %v42
  %v329 = vpop.f32.mrf.mxu0
  %v330 = vadd.f32 %v193, %v329
  %331 = vdwg.mxu0
  %332 = vmatpush.msra.mxu0 %v181
  %333 = vmatpush.msra.mxu0 %v172
  %334 = vmatpush.msra.mxu0 %v163
  %335 = vmatpush.msra.mxu0 %v154
  %336 = vmatpush.msra.mxu0 %v145
  %337 = vmatpush.msra.mxu0 %v136
  %338 = vmatpush.msra.mxu0 %v127
  %339 = vmatpush.msra.mxu0 %v118
  %340 = vmatpush.msra.mxu0 %v109
  %341 = vmatpush.msra.mxu0 %v100
  %342 = vmatpush.msra.mxu0 %v91
  %343 = vmatpush.msra.mxu0 %v82
  %344 = vmatpush.msra.mxu0 %v73
  %345 = vmatpush.msra.mxu0 %v64
  %346 = vmatpush.msra.mxu0 %v55
  %347 = vmatpush.msra.mxu0 %v46
  %348 = vmatmul.f32.gmra.mxu0 %v35
  %v349 = vpop.f32.mrf.mxu0
  %v350 = vadd.f32 %v194, %v349
  %351 = vmatmul.f32.gmra.mxu0 %v36
  %v352 = vpop.f32.mrf.mxu0
  %v353 = vadd.f32 %v194, %v352
  %354 = vmatmul.f32.gmra.mxu0 %v37
  %v355 = vpop.f32.mrf.mxu0
  %v356 = vadd.f32 %v194, %v355
  %357 = vmatmul.f32.gmra.mxu0 %v38
  %v358 = vpop.f32.mrf.mxu0
  %v359 = vadd.f32 %v194, %v358
  %360 = vmatmul.f32.gmra.mxu0 %v39
  %v361 = vpop.f32.mrf.mxu0
  %v362 = vadd.f32 %v194, %v361
  %363 = vmatmul.f32.gmra.mxu0 %v40
  %v364 = vpop.f32.mrf.mxu0
  %v365 = vadd.f32 %v194, %v364
  %366 = vmatmul.f32.gmra.mxu0 %v41
  %v367 = vpop.f32.mrf.mxu0
  %v368 = vadd.f32 %v194, %v367
  %369 = vmatmul.f32.gmra.mxu0 %v42
  %v370 = vpop.f32.mrf.mxu0
  %v371 = vadd.f32 %v194, %v370
  %372 = vdwg.mxu0
  %373 = vmatpush.msra.mxu0 %v182
  %374 = vmatpush.msra.mxu0 %v173
  %375 = vmatpush.msra.mxu0 %v164
  %376 = vmatpush.msra.mxu0 %v155
  %377 = vmatpush.msra.mxu0 %v146
  %378 = vmatpush.msra.mxu0 %v137
  %379 = vmatpush.msra.mxu0 %v128
  %380 = vmatpush.msra.mxu0 %v119
  %381 = vmatpush.msra.mxu0 %v110
  %382 = vmatpush.msra.mxu0 %v101
  %383 = vmatpush.msra.mxu0 %v92
  %384 = vmatpush.msra.mxu0 %v83
  %385 = vmatpush.msra.mxu0 %v74
  %386 = vmatpush.msra.mxu0 %v65
  %387 = vmatpush.msra.mxu0 %v56
  %388 = vmatpush.msra.mxu0 %v47
  %389 = vmatmul.f32.gmra.mxu0 %v35
  %v390 = vpop.f32.mrf.mxu0
  %v391 = vadd.f32 %v195, %v390
  %392 = vmatmul.f32.gmra.mxu0 %v36
  %v393 = vpop.f32.mrf.mxu0
  %v394 = vadd.f32 %v195, %v393
  %395 = vmatmul.f32.gmra.mxu0 %v37
  %v396 = vpop.f32.mrf.mxu0
  %v397 = vadd.f32 %v195, %v396
  %398 = vmatmul.f32.gmra.mxu0 %v38
  %v399 = vpop.f32.mrf.mxu0
  %v400 = vadd.f32 %v195, %v399
  %401 = vmatmul.f32.gmra.mxu0 %v39
  %v402 = vpop.f32.mrf.mxu0
  %v403 = vadd.f32 %v195, %v402
  %404 = vmatmul.f32.gmra.mxu0 %v40
  %v405 = vpop.f32.mrf.mxu0
  %v406 = vadd.f32 %v195, %v405
  %407 = vmatmul.f32.gmra.mxu0 %v41
  %v408 = vpop.f32.mrf.mxu0
  %v409 = vadd.f32 %v195, %v408
  %410 = vmatmul.f32.gmra.mxu0 %v42
  %v411 = vpop.f32.mrf.mxu0
  %v412 = vadd.f32 %v195, %v411
  %413 = vdwg.mxu0
  %414 = vmatpush.msra.mxu0 %v183
  %415 = vmatpush.msra.mxu0 %v174
  %416 = vmatpush.msra.mxu0 %v165
  %417 = vmatpush.msra.mxu0 %v156
  %418 = vmatpush.msra.mxu0 %v147
  %419 = vmatpush.msra.mxu0 %v138
  %420 = vmatpush.msra.mxu0 %v129
  %421 = vmatpush.msra.mxu0 %v120
  %422 = vmatpush.msra.mxu0 %v111
  %423 = vmatpush.msra.mxu0 %v102
  %424 = vmatpush.msra.mxu0 %v93
  %425 = vmatpush.msra.mxu0 %v84
  %426 = vmatpush.msra.mxu0 %v75
  %427 = vmatpush.msra.mxu0 %v66
  %428 = vmatpush.msra.mxu0 %v57
  %429 = vmatpush.msra.mxu0 %v48
  %430 = vmatmul.f32.gmra.mxu0 %v35
  %v431 = vpop.f32.mrf.mxu0
  %v432 = vadd.f32 %v196, %v431
  %433 = vmatmul.f32.gmra.mxu0 %v36
  %v434 = vpop.f32.mrf.mxu0
  %v435 = vadd.f32 %v196, %v434
  %436 = vmatmul.f32.gmra.mxu0 %v37
  %v437 = vpop.f32.mrf.mxu0
  %v438 = vadd.f32 %v196, %v437
  %439 = vmatmul.f32.gmra.mxu0 %v38
  %v440 = vpop.f32.mrf.mxu0
  %v441 = vadd.f32 %v196, %v440
  %442 = vmatmul.f32.gmra.mxu0 %v39
  %v443 = vpop.f32.mrf.mxu0
  %v444 = vadd.f32 %v196, %v443
  %445 = vmatmul.f32.gmra.mxu0 %v40
  %v446 = vpop.f32.mrf.mxu0
  %v447 = vadd.f32 %v196, %v446
  %448 = vmatmul.f32.gmra.mxu0 %v41
  %v449 = vpop.f32.mrf.mxu0
  %v450 = vadd.f32 %v196, %v449
  %451 = vmatmul.f32.gmra.mxu0 %v42
  %v452 = vpop.f32.mrf.mxu0
  %v453 = vadd.f32 %v196, %v452
  %454 = vdwg.mxu0
  %455 = vmatpush.msra.mxu0 %v184
  %456 = vmatpush.msra.mxu0 %v175
  %457 = vmatpush.msra.mxu0 %v166
  %458 = vmatpush.msra.mxu0 %v157
  %459 = vmatpush.msra.mxu0 %v148
  %460 = vmatpush.msra.mxu0 %v139
  %461 = vmatpush.msra.mxu0 %v130
  %462 = vmatpush.msra.mxu0 %v121
  %463 = vmatpush.msra.mxu0 %v112
  %464 = vmatpush.msra.mxu0 %v103
  %465 = vmatpush.msra.mxu0 %v94
  %466 = vmatpush.msra.mxu0 %v85
  %467 = vmatpush.msra.mxu0 %v76
  %468 = vmatpush.msra.mxu0 %v67
  %469 = vmatpush.msra.mxu0 %v58
  %470 = vmatpush.msra.mxu0 %v49
  %471 = vmatmul.f32.gmra.mxu0 %v35
  %v472 = vpop.f32.mrf.mxu0
  %v473 = vadd.f32 %v197, %v472
  %474 = vmatmul.f32.gmra.mxu0 %v36
  %v475 = vpop.f32.mrf.mxu0
  %v476 = vadd.f32 %v197, %v475
  %477 = vmatmul.f32.gmra.mxu0 %v37
  %v478 = vpop.f32.mrf.mxu0
  %v479 = vadd.f32 %v197, %v478
  %480 = vmatmul.f32.gmra.mxu0 %v38
  %v481 = vpop.f32.mrf.mxu0
  %v482 = vadd.f32 %v197, %v481
  %483 = vmatmul.f32.gmra.mxu0 %v39
  %v484 = vpop.f32.mrf.mxu0
  %v485 = vadd.f32 %v197, %v484
  %486 = vmatmul.f32.gmra.mxu0 %v40
  %v487 = vpop.f32.mrf.mxu0
  %v488 = vadd.f32 %v197, %v487
  %489 = vmatmul.f32.gmra.mxu0 %v41
  %v490 = vpop.f32.mrf.mxu0
  %v491 = vadd.f32 %v197, %v490
  %492 = vmatmul.f32.gmra.mxu0 %v42
  %v493 = vpop.f32.mrf.mxu0
  %v494 = vadd.f32 %v197, %v493
  %495 = vdwg.mxu0
  %496 = vmatpush.msra.mxu0 %v185
  %497 = vmatpush.msra.mxu0 %v176
  %498 = vmatpush.msra.mxu0 %v167
  %499 = vmatpush.msra.mxu0 %v158
  %500 = vmatpush.msra.mxu0 %v149
  %501 = vmatpush.msra.mxu0 %v140
  %502 = vmatpush.msra.mxu0 %v131
  %503 = vmatpush.msra.mxu0 %v122
  %504 = vmatpush.msra.mxu0 %v113
  %505 = vmatpush.msra.mxu0 %v104
  %506 = vmatpush.msra.mxu0 %v95
  %507 = vmatpush.msra.mxu0 %v86
  %508 = vmatpush.msra.mxu0 %v77
  %509 = vmatpush.msra.mxu0 %v68
  %510 = vmatpush.msra.mxu0 %v59
  %511 = vmatpush.msra.mxu0 %v50
  %512 = vmatmul.f32.gmra.mxu0 %v35
  %v513 = vpop.f32.mrf.mxu0
  %v514 = vadd.f32 %v198, %v513
  %515 = vmatmul.f32.gmra.mxu0 %v36
  %v516 = vpop.f32.mrf.mxu0
  %v517 = vadd.f32 %v198, %v516
  %518 = vmatmul.f32.gmra.mxu0 %v37
  %v519 = vpop.f32.mrf.mxu0
  %v520 = vadd.f32 %v198, %v519
  %521 = vmatmul.f32.gmra.mxu0 %v38
  %v522 = vpop.f32.mrf.mxu0
  %v523 = vadd.f32 %v198, %v522
  %524 = vmatmul.f32.gmra.mxu0 %v39
  %v525 = vpop.f32.mrf.mxu0
  %v526 = vadd.f32 %v198, %v525
  %527 = vmatmul.f32.gmra.mxu0 %v40
  %v528 = vpop.f32.mrf.mxu0
  %v529 = vadd.f32 %v198, %v528
  %530 = vmatmul.f32.gmra.mxu0 %v41
  %v531 = vpop.f32.mrf.mxu0
  %v532 = vadd.f32 %v198, %v531
  %533 = vmatmul.f32.gmra.mxu0 %v42
  %v534 = vpop.f32.mrf.mxu0
  %v535 = vadd.f32 %v198, %v534
  %536 = vdwg.mxu0
  %537 = vmatpush.msra.mxu0 %v186
  %538 = vmatpush.msra.mxu0 %v177
  %539 = vmatpush.msra.mxu0 %v168
  %540 = vmatpush.msra.mxu0 %v159
  %541 = vmatpush.msra.mxu0 %v150
  %542 = vmatpush.msra.mxu0 %v141
  %543 = vmatpush.msra.mxu0 %v132
  %544 = vmatpush.msra.mxu0 %v123
  %545 = vmatpush.msra.mxu0 %v114
  %546 = vmatpush.msra.mxu0 %v105
  %547 = vmatpush.msra.mxu0 %v96
  %548 = vmatpush.msra.mxu0 %v87
  %549 = vmatpush.msra.mxu0 %v78
  %550 = vmatpush.msra.mxu0 %v69
  %551 = vmatpush.msra.mxu0 %v60
  %552 = vmatpush.msra.mxu0 %v51
  %553 = vmatmul.f32.gmra.mxu0 %v35
  %v554 = vpop.f32.mrf.mxu0
  %v555 = vadd.f32 %v199, %v554
  %556 = vmatmul.f32.gmra.mxu0 %v36
  %v557 = vpop.f32.mrf.mxu0
  %v558 = vadd.f32 %v199, %v557
  %559 = vmatmul.f32.gmra.mxu0 %v37
  %v560 = vpop.f32.mrf.mxu0
  %v561 = vadd.f32 %v199, %v560
  %562 = vmatmul.f32.gmra.mxu0 %v38
  %v563 = vpop.f32.mrf.mxu0
  %v564 = vadd.f32 %v199, %v563
  %565 = vmatmul.f32.gmra.mxu0 %v39
  %v566 = vpop.f32.mrf.mxu0
  %v567 = vadd.f32 %v199, %v566
  %568 = vmatmul.f32.gmra.mxu0 %v40
  %v569 = vpop.f32.mrf.mxu0
  %v570 = vadd.f32 %v199, %v569
  %571 = vmatmul.f32.gmra.mxu0 %v41
  %v572 = vpop.f32.mrf.mxu0
  %v573 = vadd.f32 %v199, %v572
  %574 = vmatmul.f32.gmra.mxu0 %v42
  %v575 = vpop.f32.mrf.mxu0
  %v576 = vadd.f32 %v199, %v575
  %577 = vdwg.mxu0
  %578 = vst [vmem:[#allocation2] sm:$0xff] %v227
  %579 = vst [vmem:[#allocation2 + $0x8] sm:$0xff] %v268
  %580 = vst [vmem:[#allocation2 + $0x10] sm:$0xff] %v309
  %581 = vst [vmem:[#allocation2 + $0x18] sm:$0xff] %v350
  %582 = vst [vmem:[#allocation2 + $0x20] sm:$0xff] %v391
  %583 = vst [vmem:[#allocation2 + $0x28] sm:$0xff] %v432
  %584 = vst [vmem:[#allocation2 + $0x30] sm:$0xff] %v473
  %585 = vst [vmem:[#allocation2 + $0x38] sm:$0xff] %v514
  %586 = vst [vmem:[#allocation2 + $0x40] sm:$0xff] %v555
  %587 = vst [vmem:[#allocation2 + $0x48] sm:$0xff] %v230
  %588 = vst [vmem:[#allocation2 + $0x50] sm:$0xff] %v271
  %589 = vst [vmem:[#allocation2 + $0x58] sm:$0xff] %v312
  %590 = vst [vmem:[#allocation2 + $0x60] sm:$0xff] %v353
  %591 = vst [vmem:[#allocation2 + $0x68] sm:$0xff] %v394
  %592 = vst [vmem:[#allocation2 + $0x70] sm:$0xff] %v435
  %593 = vst [vmem:[#allocation2 + $0x78] sm:$0xff] %v476
  %594 = vst [vmem:[#allocation2 + $0x80] sm:$0xff] %v517
  %595 = vst [vmem:[#allocation2 + $0x88] sm:$0xff] %v558
  %596 = vst [vmem:[#allocation2 + $0x90] sm:$0xff] %v233
  %597 = vst [vmem:[#allocation2 + $0x98] sm:$0xff] %v274
  %598 = vst [vmem:[#allocation2 + $0xa0] sm:$0xff] %v315
  %599 = vst [vmem:[#allocation2 + $0xa8] sm:$0xff] %v356
  %600 = vst [vmem:[#allocation2 + $0xb0] sm:$0xff] %v397
  %601 = vst [vmem:[#allocation2 + $0xb8] sm:$0xff] %v438
  %602 = vst [vmem:[#allocation2 + $0xc0] sm:$0xff] %v479
  %603 = vst [vmem:[#allocation2 + $0xc8] sm:$0xff] %v520
  %604 = vst [vmem:[#allocation2 + $0xd0] sm:$0xff] %v561
  %605 = vst [vmem:[#allocation2 + $0xd8] sm:$0xff] %v236
  %606 = vst [vmem:[#allocation2 + $0xe0] sm:$0xff] %v277
  %607 = vst [vmem:[#allocation2 + $0xe8] sm:$0xff] %v318
  %608 = vst [vmem:[#allocation2 + $0xf0] sm:$0xff] %v359
  %609 = vst [vmem:[#allocation2 + $0xf8] sm:$0xff] %v400
  %610 = vst [vmem:[#allocation2 + $0x100] sm:$0xff] %v441
  %611 = vst [vmem:[#allocation2 + $0x108] sm:$0xff] %v482
  %612 = vst [vmem:[#allocation2 + $0x110] sm:$0xff] %v523
  %613 = vst [vmem:[#allocation2 + $0x118] sm:$0xff] %v564
  %614 = vst [vmem:[#allocation2 + $0x120] sm:$0xff] %v239
  %615 = vst [vmem:[#allocation2 + $0x128] sm:$0xff] %v280
  %616 = vst [vmem:[#allocation2 + $0x130] sm:$0xff] %v321
  %617 = vst [vmem:[#allocation2 + $0x138] sm:$0xff] %v362
  %618 = vst [vmem:[#allocation2 + $0x140] sm:$0xff] %v403
  %619 = vst [vmem:[#allocation2 + $0x148] sm:$0xff] %v444
  %620 = vst [vmem:[#allocation2 + $0x150] sm:$0xff] %v485
  %621 = vst [vmem:[#allocation2 + $0x158] sm:$0xff] %v526
  %622 = vst [vmem:[#allocation2 + $0x160] sm:$0xff] %v567
  %623 = vst [vmem:[#allocation2 + $0x168] sm:$0xff] %v242
  %624 = vst [vmem:[#allocation2 + $0x170] sm:$0xff] %v283
  %625 = vst [vmem:[#allocation2 + $0x178] sm:$0xff] %v324
  %626 = vst [vmem:[#allocation2 + $0x180] sm:$0xff] %v365
  %627 = vst [vmem:[#allocation2 + $0x188] sm:$0xff] %v406
  %628 = vst [vmem:[#allocation2 + $0x190] sm:$0xff] %v447
  %629 = vst [vmem:[#allocation2 + $0x198] sm:$0xff] %v488
  %630 = vst [vmem:[#allocation2 + $0x1a0] sm:$0xff] %v529
  %631 = vst [vmem:[#allocation2 + $0x1a8] sm:$0xff] %v570
  %632 = vst [vmem:[#allocation2 + $0x1b0] sm:$0xff] %v245
  %633 = vst [vmem:[#allocation2 + $0x1b8] sm:$0xff] %v286
  %634 = vst [vmem:[#allocation2 + $0x1c0] sm:$0xff] %v327
  %635 = vst [vmem:[#allocation2 + $0x1c8] sm:$0xff] %v368
  %636 = vst [vmem:[#allocation2 + $0x1d0] sm:$0xff] %v409
  %637 = vst [vmem:[#allocation2 + $0x1d8] sm:$0xff] %v450
  %638 = vst [vmem:[#allocation2 + $0x1e0] sm:$0xff] %v491
  %639 = vst [vmem:[#allocation2 + $0x1e8] sm:$0xff] %v532
  %640 = vst [vmem:[#allocation2 + $0x1f0] sm:$0xff] %v573
  %641 = vst [vmem:[#allocation2 + $0x1f8] sm:$0xff] %v248
  %642 = vst [vmem:[#allocation2 + $0x200] sm:$0xff] %v289
  %643 = vst [vmem:[#allocation2 + $0x208] sm:$0xff] %v330
  %644 = vst [vmem:[#allocation2 + $0x210] sm:$0xff] %v371
  %645 = vst [vmem:[#allocation2 + $0x218] sm:$0xff] %v412
  %646 = vst [vmem:[#allocation2 + $0x220] sm:$0xff] %v453
  %647 = vst [vmem:[#allocation2 + $0x228] sm:$0xff] %v494
  %648 = vst [vmem:[#allocation2 + $0x230] sm:$0xff] %v535
  %649 = vst [vmem:[#allocation2 + $0x238] sm:$0xff] %v576
  loop: start=0, step=1, limit=2
  $region42: #{mulcat_block.1} parent=0 // loop_pre_header
    _
  $region43: #{mulcat_block.1} parent=0 // loop_header
    %s651 = sphi 0, %s655
    %p652 = scmp.ge.s32.totalorder %s651, 2
    %v656 = vphi 0.0, %v2356
    %v657 = vphi 0.0, %v2354
    %v658 = vphi 0.0, %v2419
    %v659 = vphi 0.0, %v2417
  $region44: #{mulcat_block.1} parent=0 // loop_header_branch
    %654 = sbr.rel (%p652) target = $region48
  $region45: #{mulcat_block.1} parent=0 // loop_body
    %s660 = smul.u32 %s651, 32
    %s661 = sshra.s32 %s660, 3
    %s662 = sand.u32 %s660, 7
    %s663 = smul.u32 %s661, 9
    %s664 = smul.addr %s663, 8
    %s665 = scalar_lea.vmem [#allocation2], %s664
    %v666 = vld [vmem:[%s665] sm:$0xff]
    %v667 = vld [vmem:[%s665 + $0x8] sm:$0xff]
    %v668 = vld [vmem:[%s665 + $0x10] sm:$0xff]
    %v669 = vld [vmem:[%s665 + $0x18] sm:$0xff]
    %v670 = vld [vmem:[%s3] sm:$0xff]
    %v671 = vld [vmem:[%s3 + $0x8] sm:$0xff]
    %v672 = vld [vmem:[%s3 + $0x10] sm:$0xff]
    %v673 = vld [vmem:[%s3 + $0x18] sm:$0xff]
    %v674 = vld [vmem:[%s3 + $0x20] sm:$0xff]
    %v675 = vld [vmem:[%s3 + $0x28] sm:$0xff]
    %v676 = vld [vmem:[%s3 + $0x30] sm:$0xff]
    %v677 = vld [vmem:[%s3 + $0x38] sm:$0xff]
    %v678 = vld [vmem:[%s3 + $0x40] sm:$0xff]
    %v679 = vld [vmem:[%s3 + $0x48] sm:$0xff]
    %v680 = vld [vmem:[%s3 + $0x50] sm:$0xff]
    %v681 = vld [vmem:[%s3 + $0x58] sm:$0xff]
    %v682 = vld [vmem:[%s3 + $0x60] sm:$0xff]
    %v683 = vld [vmem:[%s3 + $0x68] sm:$0xff]
    %v684 = vld [vmem:[%s3 + $0x70] sm:$0xff]
    %v685 = vld [vmem:[%s3 + $0x78] sm:$0xff]
    %v686 = vld [vmem:[%s3 + $0x80] sm:$0xff]
    %v687 = vld [vmem:[%s3 + $0x88] sm:$0xff]
    %v688 = vld [vmem:[%s3 + $0x90] sm:$0xff]
    %v689 = vld [vmem:[%s3 + $0x98] sm:$0xff]
    %v690 = vld [vmem:[%s3 + $0xa0] sm:$0xff]
    %v691 = vld [vmem:[%s3 + $0xa8] sm:$0xff]
    %v692 = vld [vmem:[%s3 + $0xb0] sm:$0xff]
    %v693 = vld [vmem:[%s3 + $0xb8] sm:$0xff]
    %v694 = vld [vmem:[%s3 + $0xc0] sm:$0xff]
    %v695 = vld [vmem:[%s3 + $0xc8] sm:$0xff]
    %v696 = vld [vmem:[%s3 + $0xd0] sm:$0xff]
    %v697 = vld [vmem:[%s3 + $0xd8] sm:$0xff]
    %v698 = vld [vmem:[%s3 + $0xe0] sm:$0xff]
    %v699 = vld [vmem:[%s3 + $0xe8] sm:$0xff]
    %v700 = vld [vmem:[%s3 + $0xf0] sm:$0xff]
    %v701 = vld [vmem:[%s3 + $0xf8] sm:$0xff]
    %v702 = vld [vmem:[%s3 + $0x100] sm:$0xff]
    %v703 = vld [vmem:[%s3 + $0x108] sm:$0xff]
    %v704 = vld [vmem:[%s3 + $0x110] sm:$0xff]
    %v705 = vld [vmem:[%s3 + $0x118] sm:$0xff]
    %v706 = vld [vmem:[%s3 + $0x120] sm:$0xff]
    %v707 = vld [vmem:[%s3 + $0x128] sm:$0xff]
    %v708 = vld [vmem:[%s3 + $0x130] sm:$0xff]
    %v709 = vld [vmem:[%s3 + $0x138] sm:$0xff]
    %v710 = vld [vmem:[%s3 + $0x140] sm:$0xff]
    %v711 = vld [vmem:[%s3 + $0x148] sm:$0xff]
    %v712 = vld [vmem:[%s3 + $0x150] sm:$0xff]
    %v713 = vld [vmem:[%s3 + $0x158] sm:$0xff]
    %v714 = vld [vmem:[%s3 + $0x160] sm:$0xff]
    %v715 = vld [vmem:[%s3 + $0x168] sm:$0xff]
    %v716 = vld [vmem:[%s3 + $0x170] sm:$0xff]
    %v717 = vld [vmem:[%s3 + $0x178] sm:$0xff]
    %v718 = vld [vmem:[%s3 + $0x180] sm:$0xff]
    %v719 = vld [vmem:[%s3 + $0x188] sm:$0xff]
    %v720 = vld [vmem:[%s3 + $0x190] sm:$0xff]
    %v721 = vld [vmem:[%s3 + $0x198] sm:$0xff]
    %v722 = vld [vmem:[%s3 + $0x1a0] sm:$0xff]
    %v723 = vld [vmem:[%s3 + $0x1a8] sm:$0xff]
    %v724 = vld [vmem:[%s3 + $0x1b0] sm:$0xff]
    %v725 = vld [vmem:[%s3 + $0x1b8] sm:$0xff]
    %v726 = vld [vmem:[%s3 + $0x1c0] sm:$0xff]
    %v727 = vld [vmem:[%s3 + $0x1c8] sm:$0xff]
    %v728 = vld [vmem:[%s3 + $0x1d0] sm:$0xff]
    %v729 = vld [vmem:[%s3 + $0x1d8] sm:$0xff]
    %v730 = vld [vmem:[%s3 + $0x1e0] sm:$0xff]
    %v731 = vld [vmem:[%s3 + $0x1e8] sm:$0xff]
    %v732 = vld [vmem:[%s3 + $0x1f0] sm:$0xff]
    %v733 = vld [vmem:[%s3 + $0x1f8] sm:$0xff]
    %734 = vmatpush.msra.mxu0 %v730
    %735 = vmatpush.msra.mxu0 %v726
    %736 = vmatpush.msra.mxu0 %v722
    %737 = vmatpush.msra.mxu0 %v718
    %738 = vmatpush.msra.mxu0 %v714
    %739 = vmatpush.msra.mxu0 %v710
    %740 = vmatpush.msra.mxu0 %v706
    %741 = vmatpush.msra.mxu0 %v702
    %742 = vmatpush.msra.mxu0 %v698
    %743 = vmatpush.msra.mxu0 %v694
    %744 = vmatpush.msra.mxu0 %v690
    %745 = vmatpush.msra.mxu0 %v686
    %746 = vmatpush.msra.mxu0 %v682
    %747 = vmatpush.msra.mxu0 %v678
    %748 = vmatpush.msra.mxu0 %v674
    %749 = vmatpush.msra.mxu0 %v670
    %750 = vmatmul.f32.gmra.mxu0 %v656
    %v751 = vpop.f32.mrf.mxu0
    %v752 = vadd.f32 0.0, %v751
    %753 = vdwg.mxu0
    %754 = vmatpush.msra.mxu0 %v731
    %755 = vmatpush.msra.mxu0 %v727
    %756 = vmatpush.msra.mxu0 %v723
    %757 = vmatpush.msra.mxu0 %v719
    %758 = vmatpush.msra.mxu0 %v715
    %759 = vmatpush.msra.mxu0 %v711
    %760 = vmatpush.msra.mxu0 %v707
    %761 = vmatpush.msra.mxu0 %v703
    %762 = vmatpush.msra.mxu0 %v699
    %763 = vmatpush.msra.mxu0 %v695
    %764 = vmatpush.msra.mxu0 %v691
    %765 = vmatpush.msra.mxu0 %v687
    %766 = vmatpush.msra.mxu0 %v683
    %767 = vmatpush.msra.mxu0 %v679
    %768 = vmatpush.msra.mxu0 %v675
    %769 = vmatpush.msra.mxu0 %v671
    %770 = vmatmul.f32.gmra.mxu0 %v656
    %v771 = vpop.f32.mrf.mxu0
    %v772 = vadd.f32 0.0, %v771
    %773 = vdwg.mxu0
    %774 = vmatpush.msra.mxu0 %v732
    %775 = vmatpush.msra.mxu0 %v728
    %776 = vmatpush.msra.mxu0 %v724
    %777 = vmatpush.msra.mxu0 %v720
    %778 = vmatpush.msra.mxu0 %v716
    %779 = vmatpush.msra.mxu0 %v712
    %780 = vmatpush.msra.mxu0 %v708
    %781 = vmatpush.msra.mxu0 %v704
    %782 = vmatpush.msra.mxu0 %v700
    %783 = vmatpush.msra.mxu0 %v696
    %784 = vmatpush.msra.mxu0 %v692
    %785 = vmatpush.msra.mxu0 %v688
    %786 = vmatpush.msra.mxu0 %v684
    %787 = vmatpush.msra.mxu0 %v680
    %788 = vmatpush.msra.mxu0 %v676
    %789 = vmatpush.msra.mxu0 %v672
    %790 = vmatmul.f32.gmra.mxu0 %v656
    %v791 = vpop.f32.mrf.mxu0
    %v792 = vadd.f32 0.0, %v791
    %793 = vdwg.mxu0
    %794 = vmatpush.msra.mxu0 %v733
    %795 = vmatpush.msra.mxu0 %v729
    %796 = vmatpush.msra.mxu0 %v725
    %797 = vmatpush.msra.mxu0 %v721
    %798 = vmatpush.msra.mxu0 %v717
    %799 = vmatpush.msra.mxu0 %v713
    %800 = vmatpush.msra.mxu0 %v709
    %801 = vmatpush.msra.mxu0 %v705
    %802 = vmatpush.msra.mxu0 %v701
    %803 = vmatpush.msra.mxu0 %v697
    %804 = vmatpush.msra.mxu0 %v693
    %805 = vmatpush.msra.mxu0 %v689
    %806 = vmatpush.msra.mxu0 %v685
    %807 = vmatpush.msra.mxu0 %v681
    %808 = vmatpush.msra.mxu0 %v677
    %809 = vmatpush.msra.mxu0 %v673
    %810 = vmatmul.f32.gmra.mxu0 %v656
    %v811 = vpop.f32.mrf.mxu0
    %v812 = vadd.f32 0.0, %v811
    %813 = vdwg.mxu0
    %v814 = vadd.f32 %v666, %v752
    %v815 = vadd.f32 %v667, %v772
    %v816 = vadd.f32 %v668, %v792
    %v817 = vadd.f32 %v669, %v812
    %v818 = vld [vmem:[%s665 + $0x20] sm:$0xff]
    %v819 = vld [vmem:[%s665 + $0x28] sm:$0xff]
    %v820 = vld [vmem:[%s665 + $0x30] sm:$0xff]
    %v821 = vld [vmem:[%s665 + $0x38] sm:$0xff]
    %v822 = vld [vmem:[%s4] sm:$0xff]
    %v823 = vld [vmem:[%s4 + $0x8] sm:$0xff]
    %v824 = vld [vmem:[%s4 + $0x10] sm:$0xff]
    %v825 = vld [vmem:[%s4 + $0x18] sm:$0xff]
    %v826 = vld [vmem:[%s4 + $0x20] sm:$0xff]
    %v827 = vld [vmem:[%s4 + $0x28] sm:$0xff]
    %v828 = vld [vmem:[%s4 + $0x30] sm:$0xff]
    %v829 = vld [vmem:[%s4 + $0x38] sm:$0xff]
    %v830 = vld [vmem:[%s4 + $0x40] sm:$0xff]
    %v831 = vld [vmem:[%s4 + $0x48] sm:$0xff]
    %v832 = vld [vmem:[%s4 + $0x50] sm:$0xff]
    %v833 = vld [vmem:[%s4 + $0x58] sm:$0xff]
    %v834 = vld [vmem:[%s4 + $0x60] sm:$0xff]
    %v835 = vld [vmem:[%s4 + $0x68] sm:$0xff]
    %v836 = vld [vmem:[%s4 + $0x70] sm:$0xff]
    %v837 = vld [vmem:[%s4 + $0x78] sm:$0xff]
    %v838 = vld [vmem:[%s4 + $0x80] sm:$0xff]
    %v839 = vld [vmem:[%s4 + $0x88] sm:$0xff]
    %v840 = vld [vmem:[%s4 + $0x90] sm:$0xff]
    %v841 = vld [vmem:[%s4 + $0x98] sm:$0xff]
    %v842 = vld [vmem:[%s4 + $0xa0] sm:$0xff]
    %v843 = vld [vmem:[%s4 + $0xa8] sm:$0xff]
    %v844 = vld [vmem:[%s4 + $0xb0] sm:$0xff]
    %v845 = vld [vmem:[%s4 + $0xb8] sm:$0xff]
    %v846 = vld [vmem:[%s4 + $0xc0] sm:$0xff]
    %v847 = vld [vmem:[%s4 + $0xc8] sm:$0xff]
    %v848 = vld [vmem:[%s4 + $0xd0] sm:$0xff]
    %v849 = vld [vmem:[%s4 + $0xd8] sm:$0xff]
    %v850 = vld [vmem:[%s4 + $0xe0] sm:$0xff]
    %v851 = vld [vmem:[%s4 + $0xe8] sm:$0xff]
    %v852 = vld [vmem:[%s4 + $0xf0] sm:$0xff]
    %v853 = vld [vmem:[%s4 + $0xf8] sm:$0xff]
    %v854 = vld [vmem:[%s4 + $0x100] sm:$0xff]
    %v855 = vld [vmem:[%s4 + $0x108] sm:$0xff]
    %v856 = vld [vmem:[%s4 + $0x110] sm:$0xff]
    %v857 = vld [vmem:[%s4 + $0x118] sm:$0xff]
    %v858 = vld [vmem:[%s4 + $0x120] sm:$0xff]
    %v859 = vld [vmem:[%s4 + $0x128] sm:$0xff]
    %v860 = vld [vmem:[%s4 + $0x130] sm:$0xff]
    %v861 = vld [vmem:[%s4 + $0x138] sm:$0xff]
    %v862 = vld [vmem:[%s4 + $0x140] sm:$0xff]
    %v863 = vld [vmem:[%s4 + $0x148] sm:$0xff]
    %v864 = vld [vmem:[%s4 + $0x150] sm:$0xff]
    %v865 = vld [vmem:[%s4 + $0x158] sm:$0xff]
    %v866 = vld [vmem:[%s4 + $0x160] sm:$0xff]
    %v867 = vld [vmem:[%s4 + $0x168] sm:$0xff]
    %v868 = vld [vmem:[%s4 + $0x170] sm:$0xff]
    %v869 = vld [vmem:[%s4 + $0x178] sm:$0xff]
    %v870 = vld [vmem:[%s4 + $0x180] sm:$0xff]
    %v871 = vld [vmem:[%s4 + $0x188] sm:$0xff]
    %v872 = vld [vmem:[%s4 + $0x190] sm:$0xff]
    %v873 = vld [vmem:[%s4 + $0x198] sm:$0xff]
    %v874 = vld [vmem:[%s4 + $0x1a0] sm:$0xff]
    %v875 = vld [vmem:[%s4 + $0x1a8] sm:$0xff]
    %v876 = vld [vmem:[%s4 + $0x1b0] sm:$0xff]
    %v877 = vld [vmem:[%s4 + $0x1b8] sm:$0xff]
    %v878 = vld [vmem:[%s4 + $0x1c0] sm:$0xff]
    %v879 = vld [vmem:[%s4 + $0x1c8] sm:$0xff]
    %v880 = vld [vmem:[%s4 + $0x1d0] sm:$0xff]
    %v881 = vld [vmem:[%s4 + $0x1d8] sm:$0xff]
    %v882 = vld [vmem:[%s4 + $0x1e0] sm:$0xff]
    %v883 = vld [vmem:[%s4 + $0x1e8] sm:$0xff]
    %v884 = vld [vmem:[%s4 + $0x1f0] sm:$0xff]
    %v885 = vld [vmem:[%s4 + $0x1f8] sm:$0xff]
    %886 = vmatpush.msra.mxu0 %v882
    %887 = vmatpush.msra.mxu0 %v878
    %888 = vmatpush.msra.mxu0 %v874
    %889 = vmatpush.msra.mxu0 %v870
    %890 = vmatpush.msra.mxu0 %v866
    %891 = vmatpush.msra.mxu0 %v862
    %892 = vmatpush.msra.mxu0 %v858
    %893 = vmatpush.msra.mxu0 %v854
    %894 = vmatpush.msra.mxu0 %v850
    %895 = vmatpush.msra.mxu0 %v846
    %896 = vmatpush.msra.mxu0 %v842
    %897 = vmatpush.msra.mxu0 %v838
    %898 = vmatpush.msra.mxu0 %v834
    %899 = vmatpush.msra.mxu0 %v830
    %900 = vmatpush.msra.mxu0 %v826
    %901 = vmatpush.msra.mxu0 %v822
    %902 = vmatmul.f32.gmra.mxu0 %v658
    %v903 = vpop.f32.mrf.mxu0
    %v904 = vadd.f32 0.0, %v903
    %905 = vdwg.mxu0
    %906 = vmatpush.msra.mxu0 %v883
    %907 = vmatpush.msra.mxu0 %v879
    %908 = vmatpush.msra.mxu0 %v875
    %909 = vmatpush.msra.mxu0 %v871
    %910 = vmatpush.msra.mxu0 %v867
    %911 = vmatpush.msra.mxu0 %v863
    %912 = vmatpush.msra.mxu0 %v859
    %913 = vmatpush.msra.mxu0 %v855
    %914 = vmatpush.msra.mxu0 %v851
    %915 = vmatpush.msra.mxu0 %v847
    %916 = vmatpush.msra.mxu0 %v843
    %917 = vmatpush.msra.mxu0 %v839
    %918 = vmatpush.msra.mxu0 %v835
    %919 = vmatpush.msra.mxu0 %v831
    %920 = vmatpush.msra.mxu0 %v827
    %921 = vmatpush.msra.mxu0 %v823
    %922 = vmatmul.f32.gmra.mxu0 %v658
    %v923 = vpop.f32.mrf.mxu0
    %v924 = vadd.f32 0.0, %v923
    %925 = vdwg.mxu0
    %926 = vmatpush.msra.mxu0 %v884
    %927 = vmatpush.msra.mxu0 %v880
    %928 = vmatpush.msra.mxu0 %v876
    %929 = vmatpush.msra.mxu0 %v872
    %930 = vmatpush.msra.mxu0 %v868
    %931 = vmatpush.msra.mxu0 %v864
    %932 = vmatpush.msra.mxu0 %v860
    %933 = vmatpush.msra.mxu0 %v856
    %934 = vmatpush.msra.mxu0 %v852
    %935 = vmatpush.msra.mxu0 %v848
    %936 = vmatpush.msra.mxu0 %v844
    %937 = vmatpush.msra.mxu0 %v840
    %938 = vmatpush.msra.mxu0 %v836
    %939 = vmatpush.msra.mxu0 %v832
    %940 = vmatpush.msra.mxu0 %v828
    %941 = vmatpush.msra.mxu0 %v824
    %942 = vmatmul.f32.gmra.mxu0 %v658
    %v943 = vpop.f32.mrf.mxu0
    %v944 = vadd.f32 0.0, %v943
    %945 = vdwg.mxu0
    %946 = vmatpush.msra.mxu0 %v885
    %947 = vmatpush.msra.mxu0 %v881
    %948 = vmatpush.msra.mxu0 %v877
    %949 = vmatpush.msra.mxu0 %v873
    %950 = vmatpush.msra.mxu0 %v869
    %951 = vmatpush.msra.mxu0 %v865
    %952 = vmatpush.msra.mxu0 %v861
    %953 = vmatpush.msra.mxu0 %v857
    %954 = vmatpush.msra.mxu0 %v853
    %955 = vmatpush.msra.mxu0 %v849
    %956 = vmatpush.msra.mxu0 %v845
    %957 = vmatpush.msra.mxu0 %v841
    %958 = vmatpush.msra.mxu0 %v837
    %959 = vmatpush.msra.mxu0 %v833
    %960 = vmatpush.msra.mxu0 %v829
    %961 = vmatpush.msra.mxu0 %v825
    %962 = vmatmul.f32.gmra.mxu0 %v658
    %v963 = vpop.f32.mrf.mxu0
    %v964 = vadd.f32 0.0, %v963
    %965 = vdwg.mxu0
    %v966 = vadd.f32 %v818, %v904
    %v967 = vadd.f32 %v819, %v924
    %v968 = vadd.f32 %v820, %v944
    %v969 = vadd.f32 %v821, %v964
    %v970 = vxor.u32 %v814, 2147483648
    %v971 = vmul.f32 %v970, 1.442695
    %v972 = vpow.pop %v971
    %v973 = vadd.f32 %v972, 1.0
    %v974 = vrcp.pop %v973
    %v975 = vmul.f32 %v973, %v974
    %v976 = vsub.f32 1.0, %v975
    %v977 = vmul.f32 %v974, %v976
    %v978 = vadd.f32 %v974, %v977
    %vm979 = vweird.f32 %v973
    %vm980 = vweird.f32 %v974
    %vm981 = vmor %vm979, %vm980
    %v982 = vsel %vm981, %v974, %v978
    %v983 = vand.u32 2147483647, %v973
    %vm984 = vcmp.eq.f32.partialorder %v983, 8.507059e+37
    %v985 = vand.u32 %v973, 2147483648
    %v986 = vor.u32 1.1754944e-38, %v985
    %v987 = vsel %vm984, %v986, %v982
    %v988 = vmul.f32 1.0, %v987
    %v989 = vxor.u32 %v815, 2147483648
    %v990 = vmul.f32 %v989, 1.442695
    %v991 = vpow.pop %v990
    %v992 = vadd.f32 %v991, 1.0
    %v993 = vrcp.pop %v992
    %v994 = vmul.f32 %v992, %v993
    %v995 = vsub.f32 1.0, %v994
    %v996 = vmul.f32 %v993, %v995
    %v997 = vadd.f32 %v993, %v996
    %vm998 = vweird.f32 %v992
    %vm999 = vweird.f32 %v993
    %vm1000 = vmor %vm998, %vm999
    %v1001 = vsel %vm1000, %v993, %v997
    %v1002 = vand.u32 2147483647, %v992
    %vm1003 = vcmp.eq.f32.partialorder %v1002, 8.507059e+37
    %v1004 = vand.u32 %v992, 2147483648
    %v1005 = vor.u32 1.1754944e-38, %v1004
    %v1006 = vsel %vm1003, %v1005, %v1001
    %v1007 = vmul.f32 1.0, %v1006
    %v1008 = vtanh.pop %v816
    %v1009 = vxor.u32 %v817, 2147483648
    %v1010 = vmul.f32 %v1009, 1.442695
    %v1011 = vpow.pop %v1010
    %v1012 = vadd.f32 %v1011, 1.0
    %v1013 = vrcp.pop %v1012
    %v1014 = vmul.f32 %v1012, %v1013
    %v1015 = vsub.f32 1.0, %v1014
    %v1016 = vmul.f32 %v1013, %v1015
    %v1017 = vadd.f32 %v1013, %v1016
    %vm1018 = vweird.f32 %v1012
    %vm1019 = vweird.f32 %v1013
    %vm1020 = vmor %vm1018, %vm1019
    %v1021 = vsel %vm1020, %v1013, %v1017
    %v1022 = vand.u32 2147483647, %v1012
    %vm1023 = vcmp.eq.f32.partialorder %v1022, 8.507059e+37
    %v1024 = vand.u32 %v1012, 2147483648
    %v1025 = vor.u32 1.1754944e-38, %v1024
    %v1026 = vsel %vm1023, %v1025, %v1021
    %v1027 = vmul.f32 1.0, %v1026
    %v1028 = vmul.f32 %v1007, %v657
    %v1029 = vmul.f32 %v988, %v1008
    %v1030 = vadd.f32 %v1028, %v1029
    %v1031 = vtanh.pop %v1030
    %v1032 = vmul.f32 %v1027, %v1031
    %v1033 = vxor.u32 %v966, 2147483648
    %v1034 = vmul.f32 %v1033, 1.442695
    %v1035 = vpow.pop %v1034
    %v1036 = vadd.f32 %v1035, 1.0
    %v1037 = vrcp.pop %v1036
    %v1038 = vmul.f32 %v1036, %v1037
    %v1039 = vsub.f32 1.0, %v1038
    %v1040 = vmul.f32 %v1037, %v1039
    %v1041 = vadd.f32 %v1037, %v1040
    %vm1042 = vweird.f32 %v1036
    %vm1043 = vweird.f32 %v1037
    %vm1044 = vmor %vm1042, %vm1043
    %v1045 = vsel %vm1044, %v1037, %v1041
    %v1046 = vand.u32 2147483647, %v1036
    %vm1047 = vcmp.eq.f32.partialorder %v1046, 8.507059e+37
    %v1048 = vand.u32 %v1036, 2147483648
    %v1049 = vor.u32 1.1754944e-38, %v1048
    %v1050 = vsel %vm1047, %v1049, %v1045
    %v1051 = vmul.f32 1.0, %v1050
    %v1052 = vxor.u32 %v967, 2147483648
    %v1053 = vmul.f32 %v1052, 1.442695
    %v1054 = vpow.pop %v1053
    %v1055 = vadd.f32 %v1054, 1.0
    %v1056 = vrcp.pop %v1055
    %v1057 = vmul.f32 %v1055, %v1056
    %v1058 = vsub.f32 1.0, %v1057
    %v1059 = vmul.f32 %v1056, %v1058
    %v1060 = vadd.f32 %v1056, %v1059
    %vm1061 = vweird.f32 %v1055
    %vm1062 = vweird.f32 %v1056
    %vm1063 = vmor %vm1061, %vm1062
    %v1064 = vsel %vm1063, %v1056, %v1060
    %v1065 = vand.u32 2147483647, %v1055
    %vm1066 = vcmp.eq.f32.partialorder %v1065, 8.507059e+37
    %v1067 = vand.u32 %v1055, 2147483648
    %v1068 = vor.u32 1.1754944e-38, %v1067
    %v1069 = vsel %vm1066, %v1068, %v1064
    %v1070 = vmul.f32 1.0, %v1069
    %v1071 = vtanh.pop %v968
    %v1072 = vxor.u32 %v969, 2147483648
    %v1073 = vmul.f32 %v1072, 1.442695
    %v1074 = vpow.pop %v1073
    %v1075 = vadd.f32 %v1074, 1.0
    %v1076 = vrcp.pop %v1075
    %v1077 = vmul.f32 %v1075, %v1076
    %v1078 = vsub.f32 1.0, %v1077
    %v1079 = vmul.f32 %v1076, %v1078
    %v1080 = vadd.f32 %v1076, %v1079
    %vm1081 = vweird.f32 %v1075
    %vm1082 = vweird.f32 %v1076
    %vm1083 = vmor %vm1081, %vm1082
    %v1084 = vsel %vm1083, %v1076, %v1080
    %v1085 = vand.u32 2147483647, %v1075
    %vm1086 = vcmp.eq.f32.partialorder %v1085, 8.507059e+37
    %v1087 = vand.u32 %v1075, 2147483648
    %v1088 = vor.u32 1.1754944e-38, %v1087
    %v1089 = vsel %vm1086, %v1088, %v1084
    %v1090 = vmul.f32 1.0, %v1089
    %v1091 = vmul.f32 %v1070, %v659
    %v1092 = vmul.f32 %v1051, %v1071
    %v1093 = vadd.f32 %v1091, %v1092
    %v1094 = vtanh.pop %v1093
    %v1095 = vmul.f32 %v1090, %v1094
    %s1096 = scalar_lea.vmem [#allocation3], %s660
    %1097 = vst [vmem:[%s1096] sm:$0xff] %v1032
    %s1098 = scalar_lea.vmem [#allocation4], %s660
    %1099 = vst [vmem:[%s1098] sm:$0xff] %v1095
    %s1100 = smul.u32 %s651, 4
    %s1101 = sadd.s32 %s1100, 1
    %s1102 = smul.u32 %s1101, 8
    %s1103 = sshra.s32 %s1102, 3
    %s1104 = sand.u32 %s1102, 7
    %s1105 = smul.u32 %s1103, 9
    %s1106 = smul.addr %s1105, 8
    %s1107 = scalar_lea.vmem [#allocation2], %s1106
    %v1108 = vld [vmem:[%s1107] sm:$0xff]
    %v1109 = vld [vmem:[%s1107 + $0x8] sm:$0xff]
    %v1110 = vld [vmem:[%s1107 + $0x10] sm:$0xff]
    %v1111 = vld [vmem:[%s1107 + $0x18] sm:$0xff]
    %v1112 = vld [vmem:[%s3] sm:$0xff]
    %v1113 = vld [vmem:[%s3 + $0x8] sm:$0xff]
    %v1114 = vld [vmem:[%s3 + $0x10] sm:$0xff]
    %v1115 = vld [vmem:[%s3 + $0x18] sm:$0xff]
    %v1116 = vld [vmem:[%s3 + $0x20] sm:$0xff]
    %v1117 = vld [vmem:[%s3 + $0x28] sm:$0xff]
    %v1118 = vld [vmem:[%s3 + $0x30] sm:$0xff]
    %v1119 = vld [vmem:[%s3 + $0x38] sm:$0xff]
    %v1120 = vld [vmem:[%s3 + $0x40] sm:$0xff]
    %v1121 = vld [vmem:[%s3 + $0x48] sm:$0xff]
    %v1122 = vld [vmem:[%s3 + $0x50] sm:$0xff]
    %v1123 = vld [vmem:[%s3 + $0x58] sm:$0xff]
    %v1124 = vld [vmem:[%s3 + $0x60] sm:$0xff]
    %v1125 = vld [vmem:[%s3 + $0x68] sm:$0xff]
    %v1126 = vld [vmem:[%s3 + $0x70] sm:$0xff]
    %v1127 = vld [vmem:[%s3 + $0x78] sm:$0xff]
    %v1128 = vld [vmem:[%s3 + $0x80] sm:$0xff]
    %v1129 = vld [vmem:[%s3 + $0x88] sm:$0xff]
    %v1130 = vld [vmem:[%s3 + $0x90] sm:$0xff]
    %v1131 = vld [vmem:[%s3 + $0x98] sm:$0xff]
    %v1132 = vld [vmem:[%s3 + $0xa0] sm:$0xff]
    %v1133 = vld [vmem:[%s3 + $0xa8] sm:$0xff]
    %v1134 = vld [vmem:[%s3 + $0xb0] sm:$0xff]
    %v1135 = vld [vmem:[%s3 + $0xb8] sm:$0xff]
    %v1136 = vld [vmem:[%s3 + $0xc0] sm:$0xff]
    %v1137 = vld [vmem:[%s3 + $0xc8] sm:$0xff]
    %v1138 = vld [vmem:[%s3 + $0xd0] sm:$0xff]
    %v1139 = vld [vmem:[%s3 + $0xd8] sm:$0xff]
    %v1140 = vld [vmem:[%s3 + $0xe0] sm:$0xff]
    %v1141 = vld [vmem:[%s3 + $0xe8] sm:$0xff]
    %v1142 = vld [vmem:[%s3 + $0xf0] sm:$0xff]
    %v1143 = vld [vmem:[%s3 + $0xf8] sm:$0xff]
    %v1144 = vld [vmem:[%s3 + $0x100] sm:$0xff]
    %v1145 = vld [vmem:[%s3 + $0x108] sm:$0xff]
    %v1146 = vld [vmem:[%s3 + $0x110] sm:$0xff]
    %v1147 = vld [vmem:[%s3 + $0x118] sm:$0xff]
    %v1148 = vld [vmem:[%s3 + $0x120] sm:$0xff]
    %v1149 = vld [vmem:[%s3 + $0x128] sm:$0xff]
    %v1150 = vld [vmem:[%s3 + $0x130] sm:$0xff]
    %v1151 = vld [vmem:[%s3 + $0x138] sm:$0xff]
    %v1152 = vld [vmem:[%s3 + $0x140] sm:$0xff]
    %v1153 = vld [vmem:[%s3 + $0x148] sm:$0xff]
    %v1154 = vld [vmem:[%s3 + $0x150] sm:$0xff]
    %v1155 = vld [vmem:[%s3 + $0x158] sm:$0xff]
    %v1156 = vld [vmem:[%s3 + $0x160] sm:$0xff]
    %v1157 = vld [vmem:[%s3 + $0x168] sm:$0xff]
    %v1158 = vld [vmem:[%s3 + $0x170] sm:$0xff]
    %v1159 = vld [vmem:[%s3 + $0x178] sm:$0xff]
    %v1160 = vld [vmem:[%s3 + $0x180] sm:$0xff]
    %v1161 = vld [vmem:[%s3 + $0x188] sm:$0xff]
    %v1162 = vld [vmem:[%s3 + $0x190] sm:$0xff]
    %v1163 = vld [vmem:[%s3 + $0x198] sm:$0xff]
    %v1164 = vld [vmem:[%s3 + $0x1a0] sm:$0xff]
    %v1165 = vld [vmem:[%s3 + $0x1a8] sm:$0xff]
    %v1166 = vld [vmem:[%s3 + $0x1b0] sm:$0xff]
    %v1167 = vld [vmem:[%s3 + $0x1b8] sm:$0xff]
    %v1168 = vld [vmem:[%s3 + $0x1c0] sm:$0xff]
    %v1169 = vld [vmem:[%s3 + $0x1c8] sm:$0xff]
    %v1170 = vld [vmem:[%s3 + $0x1d0] sm:$0xff]
    %v1171 = vld [vmem:[%s3 + $0x1d8] sm:$0xff]
    %v1172 = vld [vmem:[%s3 + $0x1e0] sm:$0xff]
    %v1173 = vld [vmem:[%s3 + $0x1e8] sm:$0xff]
    %v1174 = vld [vmem:[%s3 + $0x1f0] sm:$0xff]
    %v1175 = vld [vmem:[%s3 + $0x1f8] sm:$0xff]
    %1176 = vmatpush.msra.mxu0 %v1172
    %1177 = vmatpush.msra.mxu0 %v1168
    %1178 = vmatpush.msra.mxu0 %v1164
    %1179 = vmatpush.msra.mxu0 %v1160
    %1180 = vmatpush.msra.mxu0 %v1156
    %1181 = vmatpush.msra.mxu0 %v1152
    %1182 = vmatpush.msra.mxu0 %v1148
    %1183 = vmatpush.msra.mxu0 %v1144
    %1184 = vmatpush.msra.mxu0 %v1140
    %1185 = vmatpush.msra.mxu0 %v1136
    %1186 = vmatpush.msra.mxu0 %v1132
    %1187 = vmatpush.msra.mxu0 %v1128
    %1188 = vmatpush.msra.mxu0 %v1124
    %1189 = vmatpush.msra.mxu0 %v1120
    %1190 = vmatpush.msra.mxu0 %v1116
    %1191 = vmatpush.msra.mxu0 %v1112
    %1192 = vmatmul.f32.gmra.mxu0 %v1032
    %v1193 = vpop.f32.mrf.mxu0
    %v1194 = vadd.f32 0.0, %v1193
    %1195 = vdwg.mxu0
    %1196 = vmatpush.msra.mxu0 %v1173
    %1197 = vmatpush.msra.mxu0 %v1169
    %1198 = vmatpush.msra.mxu0 %v1165
    %1199 = vmatpush.msra.mxu0 %v1161
    %1200 = vmatpush.msra.mxu0 %v1157
    %1201 = vmatpush.msra.mxu0 %v1153
    %1202 = vmatpush.msra.mxu0 %v1149
    %1203 = vmatpush.msra.mxu0 %v1145
    %1204 = vmatpush.msra.mxu0 %v1141
    %1205 = vmatpush.msra.mxu0 %v1137
    %1206 = vmatpush.msra.mxu0 %v1133
    %1207 = vmatpush.msra.mxu0 %v1129
    %1208 = vmatpush.msra.mxu0 %v1125
    %1209 = vmatpush.msra.mxu0 %v1121
    %1210 = vmatpush.msra.mxu0 %v1117
    %1211 = vmatpush.msra.mxu0 %v1113
    %1212 = vmatmul.f32.gmra.mxu0 %v1032
    %v1213 = vpop.f32.mrf.mxu0
    %v1214 = vadd.f32 0.0, %v1213
    %1215 = vdwg.mxu0
    %1216 = vmatpush.msra.mxu0 %v1174
    %1217 = vmatpush.msra.mxu0 %v1170
    %1218 = vmatpush.msra.mxu0 %v1166
    %1219 = vmatpush.msra.mxu0 %v1162
    %1220 = vmatpush.msra.mxu0 %v1158
    %1221 = vmatpush.msra.mxu0 %v1154
    %1222 = vmatpush.msra.mxu0 %v1150
    %1223 = vmatpush.msra.mxu0 %v1146
    %1224 = vmatpush.msra.mxu0 %v1142
    %1225 = vmatpush.msra.mxu0 %v1138
    %1226 = vmatpush.msra.mxu0 %v1134
    %1227 = vmatpush.msra.mxu0 %v1130
    %1228 = vmatpush.msra.mxu0 %v1126
    %1229 = vmatpush.msra.mxu0 %v1122
    %1230 = vmatpush.msra.mxu0 %v1118
    %1231 = vmatpush.msra.mxu0 %v1114
    %1232 = vmatmul.f32.gmra.mxu0 %v1032
    %v1233 = vpop.f32.mrf.mxu0
    %v1234 = vadd.f32 0.0, %v1233
    %1235 = vdwg.mxu0
    %1236 = vmatpush.msra.mxu0 %v1175
    %1237 = vmatpush.msra.mxu0 %v1171
    %1238 = vmatpush.msra.mxu0 %v1167
    %1239 = vmatpush.msra.mxu0 %v1163
    %1240 = vmatpush.msra.mxu0 %v1159
    %1241 = vmatpush.msra.mxu0 %v1155
    %1242 = vmatpush.msra.mxu0 %v1151
    %1243 = vmatpush.msra.mxu0 %v1147
    %1244 = vmatpush.msra.mxu0 %v1143
    %1245 = vmatpush.msra.mxu0 %v1139
    %1246 = vmatpush.msra.mxu0 %v1135
    %1247 = vmatpush.msra.mxu0 %v1131
    %1248 = vmatpush.msra.mxu0 %v1127
    %1249 = vmatpush.msra.mxu0 %v1123
    %1250 = vmatpush.msra.mxu0 %v1119
    %1251 = vmatpush.msra.mxu0 %v1115
    %1252 = vmatmul.f32.gmra.mxu0 %v1032
    %v1253 = vpop.f32.mrf.mxu0
    %v1254 = vadd.f32 0.0, %v1253
    %1255 = vdwg.mxu0
    %v1256 = vadd.f32 %v1108, %v1194
    %v1257 = vadd.f32 %v1109, %v1214
    %v1258 = vadd.f32 %v1110, %v1234
    %v1259 = vadd.f32 %v1111, %v1254
    %v1260 = vld [vmem:[%s1107 + $0x20] sm:$0xff]
    %v1261 = vld [vmem:[%s1107 + $0x28] sm:$0xff]
    %v1262 = vld [vmem:[%s1107 + $0x30] sm:$0xff]
    %v1263 = vld [vmem:[%s1107 + $0x38] sm:$0xff]
    %v1264 = vld [vmem:[%s4] sm:$0xff]
    %v1265 = vld [vmem:[%s4 + $0x8] sm:$0xff]
    %v1266 = vld [vmem:[%s4 + $0x10] sm:$0xff]
    %v1267 = vld [vmem:[%s4 + $0x18] sm:$0xff]
    %v1268 = vld [vmem:[%s4 + $0x20] sm:$0xff]
    %v1269 = vld [vmem:[%s4 + $0x28] sm:$0xff]
    %v1270 = vld [vmem:[%s4 + $0x30] sm:$0xff]
    %v1271 = vld [vmem:[%s4 + $0x38] sm:$0xff]
    %v1272 = vld [vmem:[%s4 + $0x40] sm:$0xff]
    %v1273 = vld [vmem:[%s4 + $0x48] sm:$0xff]
    %v1274 = vld [vmem:[%s4 + $0x50] sm:$0xff]
    %v1275 = vld [vmem:[%s4 + $0x58] sm:$0xff]
    %v1276 = vld [vmem:[%s4 + $0x60] sm:$0xff]
    %v1277 = vld [vmem:[%s4 + $0x68] sm:$0xff]
    %v1278 = vld [vmem:[%s4 + $0x70] sm:$0xff]
    %v1279 = vld [vmem:[%s4 + $0x78] sm:$0xff]
    %v1280 = vld [vmem:[%s4 + $0x80] sm:$0xff]
    %v1281 = vld [vmem:[%s4 + $0x88] sm:$0xff]
    %v1282 = vld [vmem:[%s4 + $0x90] sm:$0xff]
    %v1283 = vld [vmem:[%s4 + $0x98] sm:$0xff]
    %v1284 = vld [vmem:[%s4 + $0xa0] sm:$0xff]
    %v1285 = vld [vmem:[%s4 + $0xa8] sm:$0xff]
    %v1286 = vld [vmem:[%s4 + $0xb0] sm:$0xff]
    %v1287 = vld [vmem:[%s4 + $0xb8] sm:$0xff]
    %v1288 = vld [vmem:[%s4 + $0xc0] sm:$0xff]
    %v1289 = vld [vmem:[%s4 + $0xc8] sm:$0xff]
    %v1290 = vld [vmem:[%s4 + $0xd0] sm:$0xff]
    %v1291 = vld [vmem:[%s4 + $0xd8] sm:$0xff]
    %v1292 = vld [vmem:[%s4 + $0xe0] sm:$0xff]
    %v1293 = vld [vmem:[%s4 + $0xe8] sm:$0xff]
    %v1294 = vld [vmem:[%s4 + $0xf0] sm:$0xff]
    %v1295 = vld [vmem:[%s4 + $0xf8] sm:$0xff]
    %v1296 = vld [vmem:[%s4 + $0x100] sm:$0xff]
    %v1297 = vld [vmem:[%s4 + $0x108] sm:$0xff]
    %v1298 = vld [vmem:[%s4 + $0x110] sm:$0xff]
    %v1299 = vld [vmem:[%s4 + $0x118] sm:$0xff]
    %v1300 = vld [vmem:[%s4 + $0x120] sm:$0xff]
    %v1301 = vld [vmem:[%s4 + $0x128] sm:$0xff]
    %v1302 = vld [vmem:[%s4 + $0x130] sm:$0xff]
    %v1303 = vld [vmem:[%s4 + $0x138] sm:$0xff]
    %v1304 = vld [vmem:[%s4 + $0x140] sm:$0xff]
    %v1305 = vld [vmem:[%s4 + $0x148] sm:$0xff]
    %v1306 = vld [vmem:[%s4 + $0x150] sm:$0xff]
    %v1307 = vld [vmem:[%s4 + $0x158] sm:$0xff]
    %v1308 = vld [vmem:[%s4 + $0x160] sm:$0xff]
    %v1309 = vld [vmem:[%s4 + $0x168] sm:$0xff]
    %v1310 = vld [vmem:[%s4 + $0x170] sm:$0xff]
    %v1311 = vld [vmem:[%s4 + $0x178] sm:$0xff]
    %v1312 = vld [vmem:[%s4 + $0x180] sm:$0xff]
    %v1313 = vld [vmem:[%s4 + $0x188] sm:$0xff]
    %v1314 = vld [vmem:[%s4 + $0x190] sm:$0xff]
    %v1315 = vld [vmem:[%s4 + $0x198] sm:$0xff]
    %v1316 = vld [vmem:[%s4 + $0x1a0] sm:$0xff]
    %v1317 = vld [vmem:[%s4 + $0x1a8] sm:$0xff]
    %v1318 = vld [vmem:[%s4 + $0x1b0] sm:$0xff]
    %v1319 = vld [vmem:[%s4 + $0x1b8] sm:$0xff]
    %v1320 = vld [vmem:[%s4 + $0x1c0] sm:$0xff]
    %v1321 = vld [vmem:[%s4 + $0x1c8] sm:$0xff]
    %v1322 = vld [vmem:[%s4 + $0x1d0] sm:$0xff]
    %v1323 = vld [vmem:[%s4 + $0x1d8] sm:$0xff]
    %v1324 = vld [vmem:[%s4 + $0x1e0] sm:$0xff]
    %v1325 = vld [vmem:[%s4 + $0x1e8] sm:$0xff]
    %v1326 = vld [vmem:[%s4 + $0x1f0] sm:$0xff]
    %v1327 = vld [vmem:[%s4 + $0x1f8] sm:$0xff]
    %1328 = vmatpush.msra.mxu0 %v1324
    %1329 = vmatpush.msra.mxu0 %v1320
    %1330 = vmatpush.msra.mxu0 %v1316
    %1331 = vmatpush.msra.mxu0 %v1312
    %1332 = vmatpush.msra.mxu0 %v1308
    %1333 = vmatpush.msra.mxu0 %v1304
    %1334 = vmatpush.msra.mxu0 %v1300
    %1335 = vmatpush.msra.mxu0 %v1296
    %1336 = vmatpush.msra.mxu0 %v1292
    %1337 = vmatpush.msra.mxu0 %v1288
    %1338 = vmatpush.msra.mxu0 %v1284
    %1339 = vmatpush.msra.mxu0 %v1280
    %1340 = vmatpush.msra.mxu0 %v1276
    %1341 = vmatpush.msra.mxu0 %v1272
    %1342 = vmatpush.msra.mxu0 %v1268
    %1343 = vmatpush.msra.mxu0 %v1264
    %1344 = vmatmul.f32.gmra.mxu0 %v1095
    %v1345 = vpop.f32.mrf.mxu0
    %v1346 = vadd.f32 0.0, %v1345
    %1347 = vdwg.mxu0
    %1348 = vmatpush.msra.mxu0 %v1325
    %1349 = vmatpush.msra.mxu0 %v1321
    %1350 = vmatpush.msra.mxu0 %v1317
    %1351 = vmatpush.msra.mxu0 %v1313
    %1352 = vmatpush.msra.mxu0 %v1309
    %1353 = vmatpush.msra.mxu0 %v1305
    %1354 = vmatpush.msra.mxu0 %v1301
    %1355 = vmatpush.msra.mxu0 %v1297
    %1356 = vmatpush.msra.mxu0 %v1293
    %1357 = vmatpush.msra.mxu0 %v1289
    %1358 = vmatpush.msra.mxu0 %v1285
    %1359 = vmatpush.msra.mxu0 %v1281
    %1360 = vmatpush.msra.mxu0 %v1277
    %1361 = vmatpush.msra.mxu0 %v1273
    %1362 = vmatpush.msra.mxu0 %v1269
    %1363 = vmatpush.msra.mxu0 %v1265
    %1364 = vmatmul.f32.gmra.mxu0 %v1095
    %v1365 = vpop.f32.mrf.mxu0
    %v1366 = vadd.f32 0.0, %v1365
    %1367 = vdwg.mxu0
    %1368 = vmatpush.msra.mxu0 %v1326
    %1369 = vmatpush.msra.mxu0 %v1322
    %1370 = vmatpush.msra.mxu0 %v1318
    %1371 = vmatpush.msra.mxu0 %v1314
    %1372 = vmatpush.msra.mxu0 %v1310
    %1373 = vmatpush.msra.mxu0 %v1306
    %1374 = vmatpush.msra.mxu0 %v1302
    %1375 = vmatpush.msra.mxu0 %v1298
    %1376 = vmatpush.msra.mxu0 %v1294
    %1377 = vmatpush.msra.mxu0 %v1290
    %1378 = vmatpush.msra.mxu0 %v1286
    %1379 = vmatpush.msra.mxu0 %v1282
    %1380 = vmatpush.msra.mxu0 %v1278
    %1381 = vmatpush.msra.mxu0 %v1274
    %1382 = vmatpush.msra.mxu0 %v1270
    %1383 = vmatpush.msra.mxu0 %v1266
    %1384 = vmatmul.f32.gmra.mxu0 %v1095
    %v1385 = vpop.f32.mrf.mxu0
    %v1386 = vadd.f32 0.0, %v1385
    %1387 = vdwg.mxu0
    %1388 = vmatpush.msra.mxu0 %v1327
    %1389 = vmatpush.msra.mxu0 %v1323
    %1390 = vmatpush.msra.mxu0 %v1319
    %1391 = vmatpush.msra.mxu0 %v1315
    %1392 = vmatpush.msra.mxu0 %v1311
    %1393 = vmatpush.msra.mxu0 %v1307
    %1394 = vmatpush.msra.mxu0 %v1303
    %1395 = vmatpush.msra.mxu0 %v1299
    %1396 = vmatpush.msra.mxu0 %v1295
    %1397 = vmatpush.msra.mxu0 %v1291
    %1398 = vmatpush.msra.mxu0 %v1287
    %1399 = vmatpush.msra.mxu0 %v1283
    %1400 = vmatpush.msra.mxu0 %v1279
    %1401 = vmatpush.msra.mxu0 %v1275
    %1402 = vmatpush.msra.mxu0 %v1271
    %1403 = vmatpush.msra.mxu0 %v1267
    %1404 = vmatmul.f32.gmra.mxu0 %v1095
    %v1405 = vpop.f32.mrf.mxu0
    %v1406 = vadd.f32 0.0, %v1405
    %1407 = vdwg.mxu0
    %v1408 = vadd.f32 %v1260, %v1346
    %v1409 = vadd.f32 %v1261, %v1366
    %v1410 = vadd.f32 %v1262, %v1386
    %v1411 = vadd.f32 %v1263, %v1406
    %v1412 = vxor.u32 %v1256, 2147483648
    %v1413 = vmul.f32 %v1412, 1.442695
    %v1414 = vpow.pop %v1413
    %v1415 = vadd.f32 %v1414, 1.0
    %v1416 = vrcp.pop %v1415
    %v1417 = vmul.f32 %v1415, %v1416
    %v1418 = vsub.f32 1.0, %v1417
    %v1419 = vmul.f32 %v1416, %v1418
    %v1420 = vadd.f32 %v1416, %v1419
    %vm1421 = vweird.f32 %v1415
    %vm1422 = vweird.f32 %v1416
    %vm1423 = vmor %vm1421, %vm1422
    %v1424 = vsel %vm1423, %v1416, %v1420
    %v1425 = vand.u32 2147483647, %v1415
    %vm1426 = vcmp.eq.f32.partialorder %v1425, 8.507059e+37
    %v1427 = vand.u32 %v1415, 2147483648
    %v1428 = vor.u32 1.1754944e-38, %v1427
    %v1429 = vsel %vm1426, %v1428, %v1424
    %v1430 = vmul.f32 1.0, %v1429
    %v1431 = vxor.u32 %v1257, 2147483648
    %v1432 = vmul.f32 %v1431, 1.442695
    %v1433 = vpow.pop %v1432
    %v1434 = vadd.f32 %v1433, 1.0
    %v1435 = vrcp.pop %v1434
    %v1436 = vmul.f32 %v1434, %v1435
    %v1437 = vsub.f32 1.0, %v1436
    %v1438 = vmul.f32 %v1435, %v1437
    %v1439 = vadd.f32 %v1435, %v1438
    %vm1440 = vweird.f32 %v1434
    %vm1441 = vweird.f32 %v1435
    %vm1442 = vmor %vm1440, %vm1441
    %v1443 = vsel %vm1442, %v1435, %v1439
    %v1444 = vand.u32 2147483647, %v1434
    %vm1445 = vcmp.eq.f32.partialorder %v1444, 8.507059e+37
    %v1446 = vand.u32 %v1434, 2147483648
    %v1447 = vor.u32 1.1754944e-38, %v1446
    %v1448 = vsel %vm1445, %v1447, %v1443
    %v1449 = vmul.f32 1.0, %v1448
    %v1450 = vtanh.pop %v1258
    %v1451 = vxor.u32 %v1259, 2147483648
    %v1452 = vmul.f32 %v1451, 1.442695
    %v1453 = vpow.pop %v1452
    %v1454 = vadd.f32 %v1453, 1.0
    %v1455 = vrcp.pop %v1454
    %v1456 = vmul.f32 %v1454, %v1455
    %v1457 = vsub.f32 1.0, %v1456
    %v1458 = vmul.f32 %v1455, %v1457
    %v1459 = vadd.f32 %v1455, %v1458
    %vm1460 = vweird.f32 %v1454
    %vm1461 = vweird.f32 %v1455
    %vm1462 = vmor %vm1460, %vm1461
    %v1463 = vsel %vm1462, %v1455, %v1459
    %v1464 = vand.u32 2147483647, %v1454
    %vm1465 = vcmp.eq.f32.partialorder %v1464, 8.507059e+37
    %v1466 = vand.u32 %v1454, 2147483648
    %v1467 = vor.u32 1.1754944e-38, %v1466
    %v1468 = vsel %vm1465, %v1467, %v1463
    %v1469 = vmul.f32 1.0, %v1468
    %v1470 = vmul.f32 %v1449, %v1030
    %v1471 = vmul.f32 %v1430, %v1450
    %v1472 = vadd.f32 %v1470, %v1471
    %v1473 = vtanh.pop %v1472
    %v1474 = vmul.f32 %v1469, %v1473
    %v1475 = vxor.u32 %v1408, 2147483648
    %v1476 = vmul.f32 %v1475, 1.442695
    %v1477 = vpow.pop %v1476
    %v1478 = vadd.f32 %v1477, 1.0
    %v1479 = vrcp.pop %v1478
    %v1480 = vmul.f32 %v1478, %v1479
    %v1481 = vsub.f32 1.0, %v1480
    %v1482 = vmul.f32 %v1479, %v1481
    %v1483 = vadd.f32 %v1479, %v1482
    %vm1484 = vweird.f32 %v1478
    %vm1485 = vweird.f32 %v1479
    %vm1486 = vmor %vm1484, %vm1485
    %v1487 = vsel %vm1486, %v1479, %v1483
    %v1488 = vand.u32 2147483647, %v1478
    %vm1489 = vcmp.eq.f32.partialorder %v1488, 8.507059e+37
    %v1490 = vand.u32 %v1478, 2147483648
    %v1491 = vor.u32 1.1754944e-38, %v1490
    %v1492 = vsel %vm1489, %v1491, %v1487
    %v1493 = vmul.f32 1.0, %v1492
    %v1494 = vxor.u32 %v1409, 2147483648
    %v1495 = vmul.f32 %v1494, 1.442695
    %v1496 = vpow.pop %v1495
    %v1497 = vadd.f32 %v1496, 1.0
    %v1498 = vrcp.pop %v1497
    %v1499 = vmul.f32 %v1497, %v1498
    %v1500 = vsub.f32 1.0, %v1499
    %v1501 = vmul.f32 %v1498, %v1500
    %v1502 = vadd.f32 %v1498, %v1501
    %vm1503 = vweird.f32 %v1497
    %vm1504 = vweird.f32 %v1498
    %vm1505 = vmor %vm1503, %vm1504
    %v1506 = vsel %vm1505, %v1498, %v1502
    %v1507 = vand.u32 2147483647, %v1497
    %vm1508 = vcmp.eq.f32.partialorder %v1507, 8.507059e+37
    %v1509 = vand.u32 %v1497, 2147483648
    %v1510 = vor.u32 1.1754944e-38, %v1509
    %v1511 = vsel %vm1508, %v1510, %v1506
    %v1512 = vmul.f32 1.0, %v1511
    %v1513 = vtanh.pop %v1410
    %v1514 = vxor.u32 %v1411, 2147483648
    %v1515 = vmul.f32 %v1514, 1.442695
    %v1516 = vpow.pop %v1515
    %v1517 = vadd.f32 %v1516, 1.0
    %v1518 = vrcp.pop %v1517
    %v1519 = vmul.f32 %v1517, %v1518
    %v1520 = vsub.f32 1.0, %v1519
    %v1521 = vmul.f32 %v1518, %v1520
    %v1522 = vadd.f32 %v1518, %v1521
    %vm1523 = vweird.f32 %v1517
    %vm1524 = vweird.f32 %v1518
    %vm1525 = vmor %vm1523, %vm1524
    %v1526 = vsel %vm1525, %v1518, %v1522
    %v1527 = vand.u32 2147483647, %v1517
    %vm1528 = vcmp.eq.f32.partialorder %v1527, 8.507059e+37
    %v1529 = vand.u32 %v1517, 2147483648
    %v1530 = vor.u32 1.1754944e-38, %v1529
    %v1531 = vsel %vm1528, %v1530, %v1526
    %v1532 = vmul.f32 1.0, %v1531
    %v1533 = vmul.f32 %v1512, %v1093
    %v1534 = vmul.f32 %v1493, %v1513
    %v1535 = vadd.f32 %v1533, %v1534
    %v1536 = vtanh.pop %v1535
    %v1537 = vmul.f32 %v1532, %v1536
    %s1538 = scalar_lea.vmem [#allocation3], %s1102
    %1539 = vst [vmem:[%s1538] sm:$0xff] %v1474
    %s1540 = scalar_lea.vmem [#allocation4], %s1102
    %1541 = vst [vmem:[%s1540] sm:$0xff] %v1537
    %s1542 = sadd.s32 %s1100, 2
    %s1543 = smul.u32 %s1542, 8
    %s1544 = sshra.s32 %s1543, 3
    %s1545 = sand.u32 %s1543, 7
    %s1546 = smul.u32 %s1544, 9
    %s1547 = smul.addr %s1546, 8
    %s1548 = scalar_lea.vmem [#allocation2], %s1547
    %v1549 = vld [vmem:[%s1548] sm:$0xff]
    %v1550 = vld [vmem:[%s1548 + $0x8] sm:$0xff]
    %v1551 = vld [vmem:[%s1548 + $0x10] sm:$0xff]
    %v1552 = vld [vmem:[%s1548 + $0x18] sm:$0xff]
    %v1553 = vld [vmem:[%s3] sm:$0xff]
    %v1554 = vld [vmem:[%s3 + $0x8] sm:$0xff]
    %v1555 = vld [vmem:[%s3 + $0x10] sm:$0xff]
    %v1556 = vld [vmem:[%s3 + $0x18] sm:$0xff]
    %v1557 = vld [vmem:[%s3 + $0x20] sm:$0xff]
    %v1558 = vld [vmem:[%s3 + $0x28] sm:$0xff]
    %v1559 = vld [vmem:[%s3 + $0x30] sm:$0xff]
    %v1560 = vld [vmem:[%s3 + $0x38] sm:$0xff]
    %v1561 = vld [vmem:[%s3 + $0x40] sm:$0xff]
    %v1562 = vld [vmem:[%s3 + $0x48] sm:$0xff]
    %v1563 = vld [vmem:[%s3 + $0x50] sm:$0xff]
    %v1564 = vld [vmem:[%s3 + $0x58] sm:$0xff]
    %v1565 = vld [vmem:[%s3 + $0x60] sm:$0xff]
    %v1566 = vld [vmem:[%s3 + $0x68] sm:$0xff]
    %v1567 = vld [vmem:[%s3 + $0x70] sm:$0xff]
    %v1568 = vld [vmem:[%s3 + $0x78] sm:$0xff]
    %v1569 = vld [vmem:[%s3 + $0x80] sm:$0xff]
    %v1570 = vld [vmem:[%s3 + $0x88] sm:$0xff]
    %v1571 = vld [vmem:[%s3 + $0x90] sm:$0xff]
    %v1572 = vld [vmem:[%s3 + $0x98] sm:$0xff]
    %v1573 = vld [vmem:[%s3 + $0xa0] sm:$0xff]
    %v1574 = vld [vmem:[%s3 + $0xa8] sm:$0xff]
    %v1575 = vld [vmem:[%s3 + $0xb0] sm:$0xff]
    %v1576 = vld [vmem:[%s3 + $0xb8] sm:$0xff]
    %v1577 = vld [vmem:[%s3 + $0xc0] sm:$0xff]
    %v1578 = vld [vmem:[%s3 + $0xc8] sm:$0xff]
    %v1579 = vld [vmem:[%s3 + $0xd0] sm:$0xff]
    %v1580 = vld [vmem:[%s3 + $0xd8] sm:$0xff]
    %v1581 = vld [vmem:[%s3 + $0xe0] sm:$0xff]
    %v1582 = vld [vmem:[%s3 + $0xe8] sm:$0xff]
    %v1583 = vld [vmem:[%s3 + $0xf0] sm:$0xff]
    %v1584 = vld [vmem:[%s3 + $0xf8] sm:$0xff]
    %v1585 = vld [vmem:[%s3 + $0x100] sm:$0xff]
    %v1586 = vld [vmem:[%s3 + $0x108] sm:$0xff]
    %v1587 = vld [vmem:[%s3 + $0x110] sm:$0xff]
    %v1588 = vld [vmem:[%s3 + $0x118] sm:$0xff]
    %v1589 = vld [vmem:[%s3 + $0x120] sm:$0xff]
    %v1590 = vld [vmem:[%s3 + $0x128] sm:$0xff]
    %v1591 = vld [vmem:[%s3 + $0x130] sm:$0xff]
    %v1592 = vld [vmem:[%s3 + $0x138] sm:$0xff]
    %v1593 = vld [vmem:[%s3 + $0x140] sm:$0xff]
    %v1594 = vld [vmem:[%s3 + $0x148] sm:$0xff]
    %v1595 = vld [vmem:[%s3 + $0x150] sm:$0xff]
    %v1596 = vld [vmem:[%s3 + $0x158] sm:$0xff]
    %v1597 = vld [vmem:[%s3 + $0x160] sm:$0xff]
    %v1598 = vld [vmem:[%s3 + $0x168] sm:$0xff]
    %v1599 = vld [vmem:[%s3 + $0x170] sm:$0xff]
    %v1600 = vld [vmem:[%s3 + $0x178] sm:$0xff]
    %v1601 = vld [vmem:[%s3 + $0x180] sm:$0xff]
    %v1602 = vld [vmem:[%s3 + $0x188] sm:$0xff]
    %v1603 = vld [vmem:[%s3 + $0x190] sm:$0xff]
    %v1604 = vld [vmem:[%s3 + $0x198] sm:$0xff]
    %v1605 = vld [vmem:[%s3 + $0x1a0] sm:$0xff]
    %v1606 = vld [vmem:[%s3 + $0x1a8] sm:$0xff]
    %v1607 = vld [vmem:[%s3 + $0x1b0] sm:$0xff]
    %v1608 = vld [vmem:[%s3 + $0x1b8] sm:$0xff]
    %v1609 = vld [vmem:[%s3 + $0x1c0] sm:$0xff]
    %v1610 = vld [vmem:[%s3 + $0x1c8] sm:$0xff]
    %v1611 = vld [vmem:[%s3 + $0x1d0] sm:$0xff]
    %v1612 = vld [vmem:[%s3 + $0x1d8] sm:$0xff]
    %v1613 = vld [vmem:[%s3 + $0x1e0] sm:$0xff]
    %v1614 = vld [vmem:[%s3 + $0x1e8] sm:$0xff]
    %v1615 = vld [vmem:[%s3 + $0x1f0] sm:$0xff]
    %v1616 = vld [vmem:[%s3 + $0x1f8] sm:$0xff]
    %1617 = vmatpush.msra.mxu0 %v1613
    %1618 = vmatpush.msra.mxu0 %v1609
    %1619 = vmatpush.msra.mxu0 %v1605
    %1620 = vmatpush.msra.mxu0 %v1601
    %1621 = vmatpush.msra.mxu0 %v1597
    %1622 = vmatpush.msra.mxu0 %v1593
    %1623 = vmatpush.msra.mxu0 %v1589
    %1624 = vmatpush.msra.mxu0 %v1585
    %1625 = vmatpush.msra.mxu0 %v1581
    %1626 = vmatpush.msra.mxu0 %v1577
    %1627 = vmatpush.msra.mxu0 %v1573
    %1628 = vmatpush.msra.mxu0 %v1569
    %1629 = vmatpush.msra.mxu0 %v1565
    %1630 = vmatpush.msra.mxu0 %v1561
    %1631 = vmatpush.msra.mxu0 %v1557
    %1632 = vmatpush.msra.mxu0 %v1553
    %1633 = vmatmul.f32.gmra.mxu0 %v1474
    %v1634 = vpop.f32.mrf.mxu0
    %v1635 = vadd.f32 0.0, %v1634
    %1636 = vdwg.mxu0
    %1637 = vmatpush.msra.mxu0 %v1614
    %1638 = vmatpush.msra.mxu0 %v1610
    %1639 = vmatpush.msra.mxu0 %v1606
    %1640 = vmatpush.msra.mxu0 %v1602
    %1641 = vmatpush.msra.mxu0 %v1598
    %1642 = vmatpush.msra.mxu0 %v1594
    %1643 = vmatpush.msra.mxu0 %v1590
    %1644 = vmatpush.msra.mxu0 %v1586
    %1645 = vmatpush.msra.mxu0 %v1582
    %1646 = vmatpush.msra.mxu0 %v1578
    %1647 = vmatpush.msra.mxu0 %v1574
    %1648 = vmatpush.msra.mxu0 %v1570
    %1649 = vmatpush.msra.mxu0 %v1566
    %1650 = vmatpush.msra.mxu0 %v1562
    %1651 = vmatpush.msra.mxu0 %v1558
    %1652 = vmatpush.msra.mxu0 %v1554
    %1653 = vmatmul.f32.gmra.mxu0 %v1474
    %v1654 = vpop.f32.mrf.mxu0
    %v1655 = vadd.f32 0.0, %v1654
    %1656 = vdwg.mxu0
    %1657 = vmatpush.msra.mxu0 %v1615
    %1658 = vmatpush.msra.mxu0 %v1611
    %1659 = vmatpush.msra.mxu0 %v1607
    %1660 = vmatpush.msra.mxu0 %v1603
    %1661 = vmatpush.msra.mxu0 %v1599
    %1662 = vmatpush.msra.mxu0 %v1595
    %1663 = vmatpush.msra.mxu0 %v1591
    %1664 = vmatpush.msra.mxu0 %v1587
    %1665 = vmatpush.msra.mxu0 %v1583
    %1666 = vmatpush.msra.mxu0 %v1579
    %1667 = vmatpush.msra.mxu0 %v1575
    %1668 = vmatpush.msra.mxu0 %v1571
    %1669 = vmatpush.msra.mxu0 %v1567
    %1670 = vmatpush.msra.mxu0 %v1563
    %1671 = vmatpush.msra.mxu0 %v1559
    %1672 = vmatpush.msra.mxu0 %v1555
    %1673 = vmatmul.f32.gmra.mxu0 %v1474
    %v1674 = vpop.f32.mrf.mxu0
    %v1675 = vadd.f32 0.0, %v1674
    %1676 = vdwg.mxu0
    %1677 = vmatpush.msra.mxu0 %v1616
    %1678 = vmatpush.msra.mxu0 %v1612
    %1679 = vmatpush.msra.mxu0 %v1608
    %1680 = vmatpush.msra.mxu0 %v1604
    %1681 = vmatpush.msra.mxu0 %v1600
    %1682 = vmatpush.msra.mxu0 %v1596
    %1683 = vmatpush.msra.mxu0 %v1592
    %1684 = vmatpush.msra.mxu0 %v1588
    %1685 = vmatpush.msra.mxu0 %v1584
    %1686 = vmatpush.msra.mxu0 %v1580
    %1687 = vmatpush.msra.mxu0 %v1576
    %1688 = vmatpush.msra.mxu0 %v1572
    %1689 = vmatpush.msra.mxu0 %v1568
    %1690 = vmatpush.msra.mxu0 %v1564
    %1691 = vmatpush.msra.mxu0 %v1560
    %1692 = vmatpush.msra.mxu0 %v1556
    %1693 = vmatmul.f32.gmra.mxu0 %v1474
    %v1694 = vpop.f32.mrf.mxu0
    %v1695 = vadd.f32 0.0, %v1694
    %1696 = vdwg.mxu0
    %v1697 = vadd.f32 %v1549, %v1635
    %v1698 = vadd.f32 %v1550, %v1655
    %v1699 = vadd.f32 %v1551, %v1675
    %v1700 = vadd.f32 %v1552, %v1695
    %v1701 = vld [vmem:[%s1548 + $0x20] sm:$0xff]
    %v1702 = vld [vmem:[%s1548 + $0x28] sm:$0xff]
    %v1703 = vld [vmem:[%s1548 + $0x30] sm:$0xff]
    %v1704 = vld [vmem:[%s1548 + $0x38] sm:$0xff]
    %v1705 = vld [vmem:[%s4] sm:$0xff]
    %v1706 = vld [vmem:[%s4 + $0x8] sm:$0xff]
    %v1707 = vld [vmem:[%s4 + $0x10] sm:$0xff]
    %v1708 = vld [vmem:[%s4 + $0x18] sm:$0xff]
    %v1709 = vld [vmem:[%s4 + $0x20] sm:$0xff]
    %v1710 = vld [vmem:[%s4 + $0x28] sm:$0xff]
    %v1711 = vld [vmem:[%s4 + $0x30] sm:$0xff]
    %v1712 = vld [vmem:[%s4 + $0x38] sm:$0xff]
    %v1713 = vld [vmem:[%s4 + $0x40] sm:$0xff]
    %v1714 = vld [vmem:[%s4 + $0x48] sm:$0xff]
    %v1715 = vld [vmem:[%s4 + $0x50] sm:$0xff]
    %v1716 = vld [vmem:[%s4 + $0x58] sm:$0xff]
    %v1717 = vld [vmem:[%s4 + $0x60] sm:$0xff]
    %v1718 = vld [vmem:[%s4 + $0x68] sm:$0xff]
    %v1719 = vld [vmem:[%s4 + $0x70] sm:$0xff]
    %v1720 = vld [vmem:[%s4 + $0x78] sm:$0xff]
    %v1721 = vld [vmem:[%s4 + $0x80] sm:$0xff]
    %v1722 = vld [vmem:[%s4 + $0x88] sm:$0xff]
    %v1723 = vld [vmem:[%s4 + $0x90] sm:$0xff]
    %v1724 = vld [vmem:[%s4 + $0x98] sm:$0xff]
    %v1725 = vld [vmem:[%s4 + $0xa0] sm:$0xff]
    %v1726 = vld [vmem:[%s4 + $0xa8] sm:$0xff]
    %v1727 = vld [vmem:[%s4 + $0xb0] sm:$0xff]
    %v1728 = vld [vmem:[%s4 + $0xb8] sm:$0xff]
    %v1729 = vld [vmem:[%s4 + $0xc0] sm:$0xff]
    %v1730 = vld [vmem:[%s4 + $0xc8] sm:$0xff]
    %v1731 = vld [vmem:[%s4 + $0xd0] sm:$0xff]
    %v1732 = vld [vmem:[%s4 + $0xd8] sm:$0xff]
    %v1733 = vld [vmem:[%s4 + $0xe0] sm:$0xff]
    %v1734 = vld [vmem:[%s4 + $0xe8] sm:$0xff]
    %v1735 = vld [vmem:[%s4 + $0xf0] sm:$0xff]
    %v1736 = vld [vmem:[%s4 + $0xf8] sm:$0xff]
    %v1737 = vld [vmem:[%s4 + $0x100] sm:$0xff]
    %v1738 = vld [vmem:[%s4 + $0x108] sm:$0xff]
    %v1739 = vld [vmem:[%s4 + $0x110] sm:$0xff]
    %v1740 = vld [vmem:[%s4 + $0x118] sm:$0xff]
    %v1741 = vld [vmem:[%s4 + $0x120] sm:$0xff]
    %v1742 = vld [vmem:[%s4 + $0x128] sm:$0xff]
    %v1743 = vld [vmem:[%s4 + $0x130] sm:$0xff]
    %v1744 = vld [vmem:[%s4 + $0x138] sm:$0xff]
    %v1745 = vld [vmem:[%s4 + $0x140] sm:$0xff]
    %v1746 = vld [vmem:[%s4 + $0x148] sm:$0xff]
    %v1747 = vld [vmem:[%s4 + $0x150] sm:$0xff]
    %v1748 = vld [vmem:[%s4 + $0x158] sm:$0xff]
    %v1749 = vld [vmem:[%s4 + $0x160] sm:$0xff]
    %v1750 = vld [vmem:[%s4 + $0x168] sm:$0xff]
    %v1751 = vld [vmem:[%s4 + $0x170] sm:$0xff]
    %v1752 = vld [vmem:[%s4 + $0x178] sm:$0xff]
    %v1753 = vld [vmem:[%s4 + $0x180] sm:$0xff]
    %v1754 = vld [vmem:[%s4 + $0x188] sm:$0xff]
    %v1755 = vld [vmem:[%s4 + $0x190] sm:$0xff]
    %v1756 = vld [vmem:[%s4 + $0x198] sm:$0xff]
    %v1757 = vld [vmem:[%s4 + $0x1a0] sm:$0xff]
    %v1758 = vld [vmem:[%s4 + $0x1a8] sm:$0xff]
    %v1759 = vld [vmem:[%s4 + $0x1b0] sm:$0xff]
    %v1760 = vld [vmem:[%s4 + $0x1b8] sm:$0xff]
    %v1761 = vld [vmem:[%s4 + $0x1c0] sm:$0xff]
    %v1762 = vld [vmem:[%s4 + $0x1c8] sm:$0xff]
    %v1763 = vld [vmem:[%s4 + $0x1d0] sm:$0xff]
    %v1764 = vld [vmem:[%s4 + $0x1d8] sm:$0xff]
    %v1765 = vld [vmem:[%s4 + $0x1e0] sm:$0xff]
    %v1766 = vld [vmem:[%s4 + $0x1e8] sm:$0xff]
    %v1767 = vld [vmem:[%s4 + $0x1f0] sm:$0xff]
    %v1768 = vld [vmem:[%s4 + $0x1f8] sm:$0xff]
    %1769 = vmatpush.msra.mxu0 %v1765
    %1770 = vmatpush.msra.mxu0 %v1761
    %1771 = vmatpush.msra.mxu0 %v1757
    %1772 = vmatpush.msra.mxu0 %v1753
    %1773 = vmatpush.msra.mxu0 %v1749
    %1774 = vmatpush.msra.mxu0 %v1745
    %1775 = vmatpush.msra.mxu0 %v1741
    %1776 = vmatpush.msra.mxu0 %v1737
    %1777 = vmatpush.msra.mxu0 %v1733
    %1778 = vmatpush.msra.mxu0 %v1729
    %1779 = vmatpush.msra.mxu0 %v1725
    %1780 = vmatpush.msra.mxu0 %v1721
    %1781 = vmatpush.msra.mxu0 %v1717
    %1782 = vmatpush.msra.mxu0 %v1713
    %1783 = vmatpush.msra.mxu0 %v1709
    %1784 = vmatpush.msra.mxu0 %v1705
    %1785 = vmatmul.f32.gmra.mxu0 %v1537
    %v1786 = vpop.f32.mrf.mxu0
    %v1787 = vadd.f32 0.0, %v1786
    %1788 = vdwg.mxu0
    %1789 = vmatpush.msra.mxu0 %v1766
    %1790 = vmatpush.msra.mxu0 %v1762
    %1791 = vmatpush.msra.mxu0 %v1758
    %1792 = vmatpush.msra.mxu0 %v1754
    %1793 = vmatpush.msra.mxu0 %v1750
    %1794 = vmatpush.msra.mxu0 %v1746
    %1795 = vmatpush.msra.mxu0 %v1742
    %1796 = vmatpush.msra.mxu0 %v1738
    %1797 = vmatpush.msra.mxu0 %v1734
    %1798 = vmatpush.msra.mxu0 %v1730
    %1799 = vmatpush.msra.mxu0 %v1726
    %1800 = vmatpush.msra.mxu0 %v1722
    %1801 = vmatpush.msra.mxu0 %v1718
    %1802 = vmatpush.msra.mxu0 %v1714
    %1803 = vmatpush.msra.mxu0 %v1710
    %1804 = vmatpush.msra.mxu0 %v1706
    %1805 = vmatmul.f32.gmra.mxu0 %v1537
    %v1806 = vpop.f32.mrf.mxu0
    %v1807 = vadd.f32 0.0, %v1806
    %1808 = vdwg.mxu0
    %1809 = vmatpush.msra.mxu0 %v1767
    %1810 = vmatpush.msra.mxu0 %v1763
    %1811 = vmatpush.msra.mxu0 %v1759
    %1812 = vmatpush.msra.mxu0 %v1755
    %1813 = vmatpush.msra.mxu0 %v1751
    %1814 = vmatpush.msra.mxu0 %v1747
    %1815 = vmatpush.msra.mxu0 %v1743
    %1816 = vmatpush.msra.mxu0 %v1739
    %1817 = vmatpush.msra.mxu0 %v1735
    %1818 = vmatpush.msra.mxu0 %v1731
    %1819 = vmatpush.msra.mxu0 %v1727
    %1820 = vmatpush.msra.mxu0 %v1723
    %1821 = vmatpush.msra.mxu0 %v1719
    %1822 = vmatpush.msra.mxu0 %v1715
    %1823 = vmatpush.msra.mxu0 %v1711
    %1824 = vmatpush.msra.mxu0 %v1707
    %1825 = vmatmul.f32.gmra.mxu0 %v1537
    %v1826 = vpop.f32.mrf.mxu0
    %v1827 = vadd.f32 0.0, %v1826
    %1828 = vdwg.mxu0
    %1829 = vmatpush.msra.mxu0 %v1768
    %1830 = vmatpush.msra.mxu0 %v1764
    %1831 = vmatpush.msra.mxu0 %v1760
    %1832 = vmatpush.msra.mxu0 %v1756
    %1833 = vmatpush.msra.mxu0 %v1752
    %1834 = vmatpush.msra.mxu0 %v1748
    %1835 = vmatpush.msra.mxu0 %v1744
    %1836 = vmatpush.msra.mxu0 %v1740
    %1837 = vmatpush.msra.mxu0 %v1736
    %1838 = vmatpush.msra.mxu0 %v1732
    %1839 = vmatpush.msra.mxu0 %v1728
    %1840 = vmatpush.msra.mxu0 %v1724
    %1841 = vmatpush.msra.mxu0 %v1720
    %1842 = vmatpush.msra.mxu0 %v1716
    %1843 = vmatpush.msra.mxu0 %v1712
    %1844 = vmatpush.msra.mxu0 %v1708
    %1845 = vmatmul.f32.gmra.mxu0 %v1537
    %v1846 = vpop.f32.mrf.mxu0
    %v1847 = vadd.f32 0.0, %v1846
    %1848 = vdwg.mxu0
    %v1849 = vadd.f32 %v1701, %v1787
    %v1850 = vadd.f32 %v1702, %v1807
    %v1851 = vadd.f32 %v1703, %v1827
    %v1852 = vadd.f32 %v1704, %v1847
    %v1853 = vxor.u32 %v1697, 2147483648
    %v1854 = vmul.f32 %v1853, 1.442695
    %v1855 = vpow.pop %v1854
    %v1856 = vadd.f32 %v1855, 1.0
    %v1857 = vrcp.pop %v1856
    %v1858 = vmul.f32 %v1856, %v1857
    %v1859 = vsub.f32 1.0, %v1858
    %v1860 = vmul.f32 %v1857, %v1859
    %v1861 = vadd.f32 %v1857, %v1860
    %vm1862 = vweird.f32 %v1856
    %vm1863 = vweird.f32 %v1857
    %vm1864 = vmor %vm1862, %vm1863
    %v1865 = vsel %vm1864, %v1857, %v1861
    %v1866 = vand.u32 2147483647, %v1856
    %vm1867 = vcmp.eq.f32.partialorder %v1866, 8.507059e+37
    %v1868 = vand.u32 %v1856, 2147483648
    %v1869 = vor.u32 1.1754944e-38, %v1868
    %v1870 = vsel %vm1867, %v1869, %v1865
    %v1871 = vmul.f32 1.0, %v1870
    %v1872 = vxor.u32 %v1698, 2147483648
    %v1873 = vmul.f32 %v1872, 1.442695
    %v1874 = vpow.pop %v1873
    %v1875 = vadd.f32 %v1874, 1.0
    %v1876 = vrcp.pop %v1875
    %v1877 = vmul.f32 %v1875, %v1876
    %v1878 = vsub.f32 1.0, %v1877
    %v1879 = vmul.f32 %v1876, %v1878
    %v1880 = vadd.f32 %v1876, %v1879
    %vm1881 = vweird.f32 %v1875
    %vm1882 = vweird.f32 %v1876
    %vm1883 = vmor %vm1881, %vm1882
    %v1884 = vsel %vm1883, %v1876, %v1880
    %v1885 = vand.u32 2147483647, %v1875
    %vm1886 = vcmp.eq.f32.partialorder %v1885, 8.507059e+37
    %v1887 = vand.u32 %v1875, 2147483648
    %v1888 = vor.u32 1.1754944e-38, %v1887
    %v1889 = vsel %vm1886, %v1888, %v1884
    %v1890 = vmul.f32 1.0, %v1889
    %v1891 = vtanh.pop %v1699
    %v1892 = vxor.u32 %v1700, 2147483648
    %v1893 = vmul.f32 %v1892, 1.442695
    %v1894 = vpow.pop %v1893
    %v1895 = vadd.f32 %v1894, 1.0
    %v1896 = vrcp.pop %v1895
    %v1897 = vmul.f32 %v1895, %v1896
    %v1898 = vsub.f32 1.0, %v1897
    %v1899 = vmul.f32 %v1896, %v1898
    %v1900 = vadd.f32 %v1896, %v1899
    %vm1901 = vweird.f32 %v1895
    %vm1902 = vweird.f32 %v1896
    %vm1903 = vmor %vm1901, %vm1902
    %v1904 = vsel %vm1903, %v1896, %v1900
    %v1905 = vand.u32 2147483647, %v1895
    %vm1906 = vcmp.eq.f32.partialorder %v1905, 8.507059e+37
    %v1907 = vand.u32 %v1895, 2147483648
    %v1908 = vor.u32 1.1754944e-38, %v1907
    %v1909 = vsel %vm1906, %v1908, %v1904
    %v1910 = vmul.f32 1.0, %v1909
    %v1911 = vmul.f32 %v1890, %v1472
    %v1912 = vmul.f32 %v1871, %v1891
    %v1913 = vadd.f32 %v1911, %v1912
    %v1914 = vtanh.pop %v1913
    %v1915 = vmul.f32 %v1910, %v1914
    %v1916 = vxor.u32 %v1849, 2147483648
    %v1917 = vmul.f32 %v1916, 1.442695
    %v1918 = vpow.pop %v1917
    %v1919 = vadd.f32 %v1918, 1.0
    %v1920 = vrcp.pop %v1919
    %v1921 = vmul.f32 %v1919, %v1920
    %v1922 = vsub.f32 1.0, %v1921
    %v1923 = vmul.f32 %v1920, %v1922
    %v1924 = vadd.f32 %v1920, %v1923
    %vm1925 = vweird.f32 %v1919
    %vm1926 = vweird.f32 %v1920
    %vm1927 = vmor %vm1925, %vm1926
    %v1928 = vsel %vm1927, %v1920, %v1924
    %v1929 = vand.u32 2147483647, %v1919
    %vm1930 = vcmp.eq.f32.partialorder %v1929, 8.507059e+37
    %v1931 = vand.u32 %v1919, 2147483648
    %v1932 = vor.u32 1.1754944e-38, %v1931
    %v1933 = vsel %vm1930, %v1932, %v1928
    %v1934 = vmul.f32 1.0, %v1933
    %v1935 = vxor.u32 %v1850, 2147483648
    %v1936 = vmul.f32 %v1935, 1.442695
    %v1937 = vpow.pop %v1936
    %v1938 = vadd.f32 %v1937, 1.0
    %v1939 = vrcp.pop %v1938
    %v1940 = vmul.f32 %v1938, %v1939
    %v1941 = vsub.f32 1.0, %v1940
    %v1942 = vmul.f32 %v1939, %v1941
    %v1943 = vadd.f32 %v1939, %v1942
    %vm1944 = vweird.f32 %v1938
    %vm1945 = vweird.f32 %v1939
    %vm1946 = vmor %vm1944, %vm1945
    %v1947 = vsel %vm1946, %v1939, %v1943
    %v1948 = vand.u32 2147483647, %v1938
    %vm1949 = vcmp.eq.f32.partialorder %v1948, 8.507059e+37
    %v1950 = vand.u32 %v1938, 2147483648
    %v1951 = vor.u32 1.1754944e-38, %v1950
    %v1952 = vsel %vm1949, %v1951, %v1947
    %v1953 = vmul.f32 1.0, %v1952
    %v1954 = vtanh.pop %v1851
    %v1955 = vxor.u32 %v1852, 2147483648
    %v1956 = vmul.f32 %v1955, 1.442695
    %v1957 = vpow.pop %v1956
    %v1958 = vadd.f32 %v1957, 1.0
    %v1959 = vrcp.pop %v1958
    %v1960 = vmul.f32 %v1958, %v1959
    %v1961 = vsub.f32 1.0, %v1960
    %v1962 = vmul.f32 %v1959, %v1961
    %v1963 = vadd.f32 %v1959, %v1962
    %vm1964 = vweird.f32 %v1958
    %vm1965 = vweird.f32 %v1959
    %vm1966 = vmor %vm1964, %vm1965
    %v1967 = vsel %vm1966, %v1959, %v1963
    %v1968 = vand.u32 2147483647, %v1958
    %vm1969 = vcmp.eq.f32.partialorder %v1968, 8.507059e+37
    %v1970 = vand.u32 %v1958, 2147483648
    %v1971 = vor.u32 1.1754944e-38, %v1970
    %v1972 = vsel %vm1969, %v1971, %v1967
    %v1973 = vmul.f32 1.0, %v1972
    %v1974 = vmul.f32 %v1953, %v1535
    %v1975 = vmul.f32 %v1934, %v1954
    %v1976 = vadd.f32 %v1974, %v1975
    %v1977 = vtanh.pop %v1976
    %v1978 = vmul.f32 %v1973, %v1977
    %s1979 = scalar_lea.vmem [#allocation3], %s1543
    %1980 = vst [vmem:[%s1979] sm:$0xff] %v1915
    %s1981 = scalar_lea.vmem [#allocation4], %s1543
    %1982 = vst [vmem:[%s1981] sm:$0xff] %v1978
    %s1983 = sadd.s32 %s1100, 3
    %s1984 = smul.u32 %s1983, 8
    %s1985 = sshra.s32 %s1984, 3
    %s1986 = sand.u32 %s1984, 7
    %s1987 = smul.u32 %s1985, 9
    %s1988 = smul.addr %s1987, 8
    %s1989 = scalar_lea.vmem [#allocation2], %s1988
    %v1990 = vld [vmem:[%s1989] sm:$0xff]
    %v1991 = vld [vmem:[%s1989 + $0x8] sm:$0xff]
    %v1992 = vld [vmem:[%s1989 + $0x10] sm:$0xff]
    %v1993 = vld [vmem:[%s1989 + $0x18] sm:$0xff]
    %v1994 = vld [vmem:[%s3] sm:$0xff]
    %v1995 = vld [vmem:[%s3 + $0x8] sm:$0xff]
    %v1996 = vld [vmem:[%s3 + $0x10] sm:$0xff]
    %v1997 = vld [vmem:[%s3 + $0x18] sm:$0xff]
    %v1998 = vld [vmem:[%s3 + $0x20] sm:$0xff]
    %v1999 = vld [vmem:[%s3 + $0x28] sm:$0xff]
    %v2000 = vld [vmem:[%s3 + $0x30] sm:$0xff]
    %v2001 = vld [vmem:[%s3 + $0x38] sm:$0xff]
    %v2002 = vld [vmem:[%s3 + $0x40] sm:$0xff]
    %v2003 = vld [vmem:[%s3 + $0x48] sm:$0xff]
    %v2004 = vld [vmem:[%s3 + $0x50] sm:$0xff]
    %v2005 = vld [vmem:[%s3 + $0x58] sm:$0xff]
    %v2006 = vld [vmem:[%s3 + $0x60] sm:$0xff]
    %v2007 = vld [vmem:[%s3 + $0x68] sm:$0xff]
    %v2008 = vld [vmem:[%s3 + $0x70] sm:$0xff]
    %v2009 = vld [vmem:[%s3 + $0x78] sm:$0xff]
    %v2010 = vld [vmem:[%s3 + $0x80] sm:$0xff]
    %v2011 = vld [vmem:[%s3 + $0x88] sm:$0xff]
    %v2012 = vld [vmem:[%s3 + $0x90] sm:$0xff]
    %v2013 = vld [vmem:[%s3 + $0x98] sm:$0xff]
    %v2014 = vld [vmem:[%s3 + $0xa0] sm:$0xff]
    %v2015 = vld [vmem:[%s3 + $0xa8] sm:$0xff]
    %v2016 = vld [vmem:[%s3 + $0xb0] sm:$0xff]
    %v2017 = vld [vmem:[%s3 + $0xb8] sm:$0xff]
    %v2018 = vld [vmem:[%s3 + $0xc0] sm:$0xff]
    %v2019 = vld [vmem:[%s3 + $0xc8] sm:$0xff]
    %v2020 = vld [vmem:[%s3 + $0xd0] sm:$0xff]
    %v2021 = vld [vmem:[%s3 + $0xd8] sm:$0xff]
    %v2022 = vld [vmem:[%s3 + $0xe0] sm:$0xff]
    %v2023 = vld [vmem:[%s3 + $0xe8] sm:$0xff]
    %v2024 = vld [vmem:[%s3 + $0xf0] sm:$0xff]
    %v2025 = vld [vmem:[%s3 + $0xf8] sm:$0xff]
    %v2026 = vld [vmem:[%s3 + $0x100] sm:$0xff]
    %v2027 = vld [vmem:[%s3 + $0x108] sm:$0xff]
    %v2028 = vld [vmem:[%s3 + $0x110] sm:$0xff]
    %v2029 = vld [vmem:[%s3 + $0x118] sm:$0xff]
    %v2030 = vld [vmem:[%s3 + $0x120] sm:$0xff]
    %v2031 = vld [vmem:[%s3 + $0x128] sm:$0xff]
    %v2032 = vld [vmem:[%s3 + $0x130] sm:$0xff]
    %v2033 = vld [vmem:[%s3 + $0x138] sm:$0xff]
    %v2034 = vld [vmem:[%s3 + $0x140] sm:$0xff]
    %v2035 = vld [vmem:[%s3 + $0x148] sm:$0xff]
    %v2036 = vld [vmem:[%s3 + $0x150] sm:$0xff]
    %v2037 = vld [vmem:[%s3 + $0x158] sm:$0xff]
    %v2038 = vld [vmem:[%s3 + $0x160] sm:$0xff]
    %v2039 = vld [vmem:[%s3 + $0x168] sm:$0xff]
    %v2040 = vld [vmem:[%s3 + $0x170] sm:$0xff]
    %v2041 = vld [vmem:[%s3 + $0x178] sm:$0xff]
    %v2042 = vld [vmem:[%s3 + $0x180] sm:$0xff]
    %v2043 = vld [vmem:[%s3 + $0x188] sm:$0xff]
    %v2044 = vld [vmem:[%s3 + $0x190] sm:$0xff]
    %v2045 = vld [vmem:[%s3 + $0x198] sm:$0xff]
    %v2046 = vld [vmem:[%s3 + $0x1a0] sm:$0xff]
    %v2047 = vld [vmem:[%s3 + $0x1a8] sm:$0xff]
    %v2048 = vld [vmem:[%s3 + $0x1b0] sm:$0xff]
    %v2049 = vld [vmem:[%s3 + $0x1b8] sm:$0xff]
    %v2050 = vld [vmem:[%s3 + $0x1c0] sm:$0xff]
    %v2051 = vld [vmem:[%s3 + $0x1c8] sm:$0xff]
    %v2052 = vld [vmem:[%s3 + $0x1d0] sm:$0xff]
    %v2053 = vld [vmem:[%s3 + $0x1d8] sm:$0xff]
    %v2054 = vld [vmem:[%s3 + $0x1e0] sm:$0xff]
    %v2055 = vld [vmem:[%s3 + $0x1e8] sm:$0xff]
    %v2056 = vld [vmem:[%s3 + $0x1f0] sm:$0xff]
    %v2057 = vld [vmem:[%s3 + $0x1f8] sm:$0xff]
    %2058 = vmatpush.msra.mxu0 %v2054
    %2059 = vmatpush.msra.mxu0 %v2050
    %2060 = vmatpush.msra.mxu0 %v2046
    %2061 = vmatpush.msra.mxu0 %v2042
    %2062 = vmatpush.msra.mxu0 %v2038
    %2063 = vmatpush.msra.mxu0 %v2034
    %2064 = vmatpush.msra.mxu0 %v2030
    %2065 = vmatpush.msra.mxu0 %v2026
    %2066 = vmatpush.msra.mxu0 %v2022
    %2067 = vmatpush.msra.mxu0 %v2018
    %2068 = vmatpush.msra.mxu0 %v2014
    %2069 = vmatpush.msra.mxu0 %v2010
    %2070 = vmatpush.msra.mxu0 %v2006
    %2071 = vmatpush.msra.mxu0 %v2002
    %2072 = vmatpush.msra.mxu0 %v1998
    %2073 = vmatpush.msra.mxu0 %v1994
    %2074 = vmatmul.f32.gmra.mxu0 %v1915
    %v2075 = vpop.f32.mrf.mxu0
    %v2076 = vadd.f32 0.0, %v2075
    %2077 = vdwg.mxu0
    %2078 = vmatpush.msra.mxu0 %v2055
    %2079 = vmatpush.msra.mxu0 %v2051
    %2080 = vmatpush.msra.mxu0 %v2047
    %2081 = vmatpush.msra.mxu0 %v2043
    %2082 = vmatpush.msra.mxu0 %v2039
    %2083 = vmatpush.msra.mxu0 %v2035
    %2084 = vmatpush.msra.mxu0 %v2031
    %2085 = vmatpush.msra.mxu0 %v2027
    %2086 = vmatpush.msra.mxu0 %v2023
    %2087 = vmatpush.msra.mxu0 %v2019
    %2088 = vmatpush.msra.mxu0 %v2015
    %2089 = vmatpush.msra.mxu0 %v2011
    %2090 = vmatpush.msra.mxu0 %v2007
    %2091 = vmatpush.msra.mxu0 %v2003
    %2092 = vmatpush.msra.mxu0 %v1999
    %2093 = vmatpush.msra.mxu0 %v1995
    %2094 = vmatmul.f32.gmra.mxu0 %v1915
    %v2095 = vpop.f32.mrf.mxu0
    %v2096 = vadd.f32 0.0, %v2095
    %2097 = vdwg.mxu0
    %2098 = vmatpush.msra.mxu0 %v2056
    %2099 = vmatpush.msra.mxu0 %v2052
    %2100 = vmatpush.msra.mxu0 %v2048
    %2101 = vmatpush.msra.mxu0 %v2044
    %2102 = vmatpush.msra.mxu0 %v2040
    %2103 = vmatpush.msra.mxu0 %v2036
    %2104 = vmatpush.msra.mxu0 %v2032
    %2105 = vmatpush.msra.mxu0 %v2028
    %2106 = vmatpush.msra.mxu0 %v2024
    %2107 = vmatpush.msra.mxu0 %v2020
    %2108 = vmatpush.msra.mxu0 %v2016
    %2109 = vmatpush.msra.mxu0 %v2012
    %2110 = vmatpush.msra.mxu0 %v2008
    %2111 = vmatpush.msra.mxu0 %v2004
    %2112 = vmatpush.msra.mxu0 %v2000
    %2113 = vmatpush.msra.mxu0 %v1996
    %2114 = vmatmul.f32.gmra.mxu0 %v1915
    %v2115 = vpop.f32.mrf.mxu0
    %v2116 = vadd.f32 0.0, %v2115
    %2117 = vdwg.mxu0
    %2118 = vmatpush.msra.mxu0 %v2057
    %2119 = vmatpush.msra.mxu0 %v2053
    %2120 = vmatpush.msra.mxu0 %v2049
    %2121 = vmatpush.msra.mxu0 %v2045
    %2122 = vmatpush.msra.mxu0 %v2041
    %2123 = vmatpush.msra.mxu0 %v2037
    %2124 = vmatpush.msra.mxu0 %v2033
    %2125 = vmatpush.msra.mxu0 %v2029
    %2126 = vmatpush.msra.mxu0 %v2025
    %2127 = vmatpush.msra.mxu0 %v2021
    %2128 = vmatpush.msra.mxu0 %v2017
    %2129 = vmatpush.msra.mxu0 %v2013
    %2130 = vmatpush.msra.mxu0 %v2009
    %2131 = vmatpush.msra.mxu0 %v2005
    %2132 = vmatpush.msra.mxu0 %v2001
    %2133 = vmatpush.msra.mxu0 %v1997
    %2134 = vmatmul.f32.gmra.mxu0 %v1915
    %v2135 = vpop.f32.mrf.mxu0
    %v2136 = vadd.f32 0.0, %v2135
    %2137 = vdwg.mxu0
    %v2138 = vadd.f32 %v1990, %v2076
    %v2139 = vadd.f32 %v1991, %v2096
    %v2140 = vadd.f32 %v1992, %v2116
    %v2141 = vadd.f32 %v1993, %v2136
    %v2142 = vld [vmem:[%s1989 + $0x20] sm:$0xff]
    %v2143 = vld [vmem:[%s1989 + $0x28] sm:$0xff]
    %v2144 = vld [vmem:[%s1989 + $0x30] sm:$0xff]
    %v2145 = vld [vmem:[%s1989 + $0x38] sm:$0xff]
    %v2146 = vld [vmem:[%s4] sm:$0xff]
    %v2147 = vld [vmem:[%s4 + $0x8] sm:$0xff]
    %v2148 = vld [vmem:[%s4 + $0x10] sm:$0xff]
    %v2149 = vld [vmem:[%s4 + $0x18] sm:$0xff]
    %v2150 = vld [vmem:[%s4 + $0x20] sm:$0xff]
    %v2151 = vld [vmem:[%s4 + $0x28] sm:$0xff]
    %v2152 = vld [vmem:[%s4 + $0x30] sm:$0xff]
    %v2153 = vld [vmem:[%s4 + $0x38] sm:$0xff]
    %v2154 = vld [vmem:[%s4 + $0x40] sm:$0xff]
    %v2155 = vld [vmem:[%s4 + $0x48] sm:$0xff]
    %v2156 = vld [vmem:[%s4 + $0x50] sm:$0xff]
    %v2157 = vld [vmem:[%s4 + $0x58] sm:$0xff]
    %v2158 = vld [vmem:[%s4 + $0x60] sm:$0xff]
    %v2159 = vld [vmem:[%s4 + $0x68] sm:$0xff]
    %v2160 = vld [vmem:[%s4 + $0x70] sm:$0xff]
    %v2161 = vld [vmem:[%s4 + $0x78] sm:$0xff]
    %v2162 = vld [vmem:[%s4 + $0x80] sm:$0xff]
    %v2163 = vld [vmem:[%s4 + $0x88] sm:$0xff]
    %v2164 = vld [vmem:[%s4 + $0x90] sm:$0xff]
    %v2165 = vld [vmem:[%s4 + $0x98] sm:$0xff]
    %v2166 = vld [vmem:[%s4 + $0xa0] sm:$0xff]
    %v2167 = vld [vmem:[%s4 + $0xa8] sm:$0xff]
    %v2168 = vld [vmem:[%s4 + $0xb0] sm:$0xff]
    %v2169 = vld [vmem:[%s4 + $0xb8] sm:$0xff]
    %v2170 = vld [vmem:[%s4 + $0xc0] sm:$0xff]
    %v2171 = vld [vmem:[%s4 + $0xc8] sm:$0xff]
    %v2172 = vld [vmem:[%s4 + $0xd0] sm:$0xff]
    %v2173 = vld [vmem:[%s4 + $0xd8] sm:$0xff]
    %v2174 = vld [vmem:[%s4 + $0xe0] sm:$0xff]
    %v2175 = vld [vmem:[%s4 + $0xe8] sm:$0xff]
    %v2176 = vld [vmem:[%s4 + $0xf0] sm:$0xff]
    %v2177 = vld [vmem:[%s4 + $0xf8] sm:$0xff]
    %v2178 = vld [vmem:[%s4 + $0x100] sm:$0xff]
    %v2179 = vld [vmem:[%s4 + $0x108] sm:$0xff]
    %v2180 = vld [vmem:[%s4 + $0x110] sm:$0xff]
    %v2181 = vld [vmem:[%s4 + $0x118] sm:$0xff]
    %v2182 = vld [vmem:[%s4 + $0x120] sm:$0xff]
    %v2183 = vld [vmem:[%s4 + $0x128] sm:$0xff]
    %v2184 = vld [vmem:[%s4 + $0x130] sm:$0xff]
    %v2185 = vld [vmem:[%s4 + $0x138] sm:$0xff]
    %v2186 = vld [vmem:[%s4 + $0x140] sm:$0xff]
    %v2187 = vld [vmem:[%s4 + $0x148] sm:$0xff]
    %v2188 = vld [vmem:[%s4 + $0x150] sm:$0xff]
    %v2189 = vld [vmem:[%s4 + $0x158] sm:$0xff]
    %v2190 = vld [vmem:[%s4 + $0x160] sm:$0xff]
    %v2191 = vld [vmem:[%s4 + $0x168] sm:$0xff]
    %v2192 = vld [vmem:[%s4 + $0x170] sm:$0xff]
    %v2193 = vld [vmem:[%s4 + $0x178] sm:$0xff]
    %v2194 = vld [vmem:[%s4 + $0x180] sm:$0xff]
    %v2195 = vld [vmem:[%s4 + $0x188] sm:$0xff]
    %v2196 = vld [vmem:[%s4 + $0x190] sm:$0xff]
    %v2197 = vld [vmem:[%s4 + $0x198] sm:$0xff]
    %v2198 = vld [vmem:[%s4 + $0x1a0] sm:$0xff]
    %v2199 = vld [vmem:[%s4 + $0x1a8] sm:$0xff]
    %v2200 = vld [vmem:[%s4 + $0x1b0] sm:$0xff]
    %v2201 = vld [vmem:[%s4 + $0x1b8] sm:$0xff]
    %v2202 = vld [vmem:[%s4 + $0x1c0] sm:$0xff]
    %v2203 = vld [vmem:[%s4 + $0x1c8] sm:$0xff]
    %v2204 = vld [vmem:[%s4 + $0x1d0] sm:$0xff]
    %v2205 = vld [vmem:[%s4 + $0x1d8] sm:$0xff]
    %v2206 = vld [vmem:[%s4 + $0x1e0] sm:$0xff]
    %v2207 = vld [vmem:[%s4 + $0x1e8] sm:$0xff]
    %v2208 = vld [vmem:[%s4 + $0x1f0] sm:$0xff]
    %v2209 = vld [vmem:[%s4 + $0x1f8] sm:$0xff]
    %2210 = vmatpush.msra.mxu0 %v2206
    %2211 = vmatpush.msra.mxu0 %v2202
    %2212 = vmatpush.msra.mxu0 %v2198
    %2213 = vmatpush.msra.mxu0 %v2194
    %2214 = vmatpush.msra.mxu0 %v2190
    %2215 = vmatpush.msra.mxu0 %v2186
    %2216 = vmatpush.msra.mxu0 %v2182
    %2217 = vmatpush.msra.mxu0 %v2178
    %2218 = vmatpush.msra.mxu0 %v2174
    %2219 = vmatpush.msra.mxu0 %v2170
    %2220 = vmatpush.msra.mxu0 %v2166
    %2221 = vmatpush.msra.mxu0 %v2162
    %2222 = vmatpush.msra.mxu0 %v2158
    %2223 = vmatpush.msra.mxu0 %v2154
    %2224 = vmatpush.msra.mxu0 %v2150
    %2225 = vmatpush.msra.mxu0 %v2146
    %2226 = vmatmul.f32.gmra.mxu0 %v1978
    %v2227 = vpop.f32.mrf.mxu0
    %v2228 = vadd.f32 0.0, %v2227
    %2229 = vdwg.mxu0
    %2230 = vmatpush.msra.mxu0 %v2207
    %2231 = vmatpush.msra.mxu0 %v2203
    %2232 = vmatpush.msra.mxu0 %v2199
    %2233 = vmatpush.msra.mxu0 %v2195
    %2234 = vmatpush.msra.mxu0 %v2191
    %2235 = vmatpush.msra.mxu0 %v2187
    %2236 = vmatpush.msra.mxu0 %v2183
    %2237 = vmatpush.msra.mxu0 %v2179
    %2238 = vmatpush.msra.mxu0 %v2175
    %2239 = vmatpush.msra.mxu0 %v2171
    %2240 = vmatpush.msra.mxu0 %v2167
    %2241 = vmatpush.msra.mxu0 %v2163
    %2242 = vmatpush.msra.mxu0 %v2159
    %2243 = vmatpush.msra.mxu0 %v2155
    %2244 = vmatpush.msra.mxu0 %v2151
    %2245 = vmatpush.msra.mxu0 %v2147
    %2246 = vmatmul.f32.gmra.mxu0 %v1978
    %v2247 = vpop.f32.mrf.mxu0
    %v2248 = vadd.f32 0.0, %v2247
    %2249 = vdwg.mxu0
    %2250 = vmatpush.msra.mxu0 %v2208
    %2251 = vmatpush.msra.mxu0 %v2204
    %2252 = vmatpush.msra.mxu0 %v2200
    %2253 = vmatpush.msra.mxu0 %v2196
    %2254 = vmatpush.msra.mxu0 %v2192
    %2255 = vmatpush.msra.mxu0 %v2188
    %2256 = vmatpush.msra.mxu0 %v2184
    %2257 = vmatpush.msra.mxu0 %v2180
    %2258 = vmatpush.msra.mxu0 %v2176
    %2259 = vmatpush.msra.mxu0 %v2172
    %2260 = vmatpush.msra.mxu0 %v2168
    %2261 = vmatpush.msra.mxu0 %v2164
    %2262 = vmatpush.msra.mxu0 %v2160
    %2263 = vmatpush.msra.mxu0 %v2156
    %2264 = vmatpush.msra.mxu0 %v2152
    %2265 = vmatpush.msra.mxu0 %v2148
    %2266 = vmatmul.f32.gmra.mxu0 %v1978
    %v2267 = vpop.f32.mrf.mxu0
    %v2268 = vadd.f32 0.0, %v2267
    %2269 = vdwg.mxu0
    %2270 = vmatpush.msra.mxu0 %v2209
    %2271 = vmatpush.msra.mxu0 %v2205
    %2272 = vmatpush.msra.mxu0 %v2201
    %2273 = vmatpush.msra.mxu0 %v2197
    %2274 = vmatpush.msra.mxu0 %v2193
    %2275 = vmatpush.msra.mxu0 %v2189
    %2276 = vmatpush.msra.mxu0 %v2185
    %2277 = vmatpush.msra.mxu0 %v2181
    %2278 = vmatpush.msra.mxu0 %v2177
    %2279 = vmatpush.msra.mxu0 %v2173
    %2280 = vmatpush.msra.mxu0 %v2169
    %2281 = vmatpush.msra.mxu0 %v2165
    %2282 = vmatpush.msra.mxu0 %v2161
    %2283 = vmatpush.msra.mxu0 %v2157
    %2284 = vmatpush.msra.mxu0 %v2153
    %2285 = vmatpush.msra.mxu0 %v2149
    %2286 = vmatmul.f32.gmra.mxu0 %v1978
    %v2287 = vpop.f32.mrf.mxu0
    %v2288 = vadd.f32 0.0, %v2287
    %2289 = vdwg.mxu0
    %v2290 = vadd.f32 %v2142, %v2228
    %v2291 = vadd.f32 %v2143, %v2248
    %v2292 = vadd.f32 %v2144, %v2268
    %v2293 = vadd.f32 %v2145, %v2288
    %v2294 = vxor.u32 %v2138, 2147483648
    %v2295 = vmul.f32 %v2294, 1.442695
    %v2296 = vpow.pop %v2295
    %v2297 = vadd.f32 %v2296, 1.0
    %v2298 = vrcp.pop %v2297
    %v2299 = vmul.f32 %v2297, %v2298
    %v2300 = vsub.f32 1.0, %v2299
    %v2301 = vmul.f32 %v2298, %v2300
    %v2302 = vadd.f32 %v2298, %v2301
    %vm2303 = vweird.f32 %v2297
    %vm2304 = vweird.f32 %v2298
    %vm2305 = vmor %vm2303, %vm2304
    %v2306 = vsel %vm2305, %v2298, %v2302
    %v2307 = vand.u32 2147483647, %v2297
    %vm2308 = vcmp.eq.f32.partialorder %v2307, 8.507059e+37
    %v2309 = vand.u32 %v2297, 2147483648
    %v2310 = vor.u32 1.1754944e-38, %v2309
    %v2311 = vsel %vm2308, %v2310, %v2306
    %v2312 = vmul.f32 1.0, %v2311
    %v2313 = vxor.u32 %v2139, 2147483648
    %v2314 = vmul.f32 %v2313, 1.442695
    %v2315 = vpow.pop %v2314
    %v2316 = vadd.f32 %v2315, 1.0
    %v2317 = vrcp.pop %v2316
    %v2318 = vmul.f32 %v2316, %v2317
    %v2319 = vsub.f32 1.0, %v2318
    %v2320 = vmul.f32 %v2317, %v2319
    %v2321 = vadd.f32 %v2317, %v2320
    %vm2322 = vweird.f32 %v2316
    %vm2323 = vweird.f32 %v2317
    %vm2324 = vmor %vm2322, %vm2323
    %v2325 = vsel %vm2324, %v2317, %v2321
    %v2326 = vand.u32 2147483647, %v2316
    %vm2327 = vcmp.eq.f32.partialorder %v2326, 8.507059e+37
    %v2328 = vand.u32 %v2316, 2147483648
    %v2329 = vor.u32 1.1754944e-38, %v2328
    %v2330 = vsel %vm2327, %v2329, %v2325
    %v2331 = vmul.f32 1.0, %v2330
    %v2332 = vtanh.pop %v2140
    %v2333 = vxor.u32 %v2141, 2147483648
    %v2334 = vmul.f32 %v2333, 1.442695
    %v2335 = vpow.pop %v2334
    %v2336 = vadd.f32 %v2335, 1.0
    %v2337 = vrcp.pop %v2336
    %v2338 = vmul.f32 %v2336, %v2337
    %v2339 = vsub.f32 1.0, %v2338
    %v2340 = vmul.f32 %v2337, %v2339
    %v2341 = vadd.f32 %v2337, %v2340
    %vm2342 = vweird.f32 %v2336
    %vm2343 = vweird.f32 %v2337
    %vm2344 = vmor %vm2342, %vm2343
    %v2345 = vsel %vm2344, %v2337, %v2341
    %v2346 = vand.u32 2147483647, %v2336
    %vm2347 = vcmp.eq.f32.partialorder %v2346, 8.507059e+37
    %v2348 = vand.u32 %v2336, 2147483648
    %v2349 = vor.u32 1.1754944e-38, %v2348
    %v2350 = vsel %vm2347, %v2349, %v2345
    %v2351 = vmul.f32 1.0, %v2350
    %v2352 = vmul.f32 %v2331, %v1913
    %v2353 = vmul.f32 %v2312, %v2332
    %v2354 = vadd.f32 %v2352, %v2353
    %v2355 = vtanh.pop %v2354
    %v2356 = vmul.f32 %v2351, %v2355
    %v2357 = vxor.u32 %v2290, 2147483648
    %v2358 = vmul.f32 %v2357, 1.442695
    %v2359 = vpow.pop %v2358
    %v2360 = vadd.f32 %v2359, 1.0
    %v2361 = vrcp.pop %v2360
    %v2362 = vmul.f32 %v2360, %v2361
    %v2363 = vsub.f32 1.0, %v2362
    %v2364 = vmul.f32 %v2361, %v2363
    %v2365 = vadd.f32 %v2361, %v2364
    %vm2366 = vweird.f32 %v2360
    %vm2367 = vweird.f32 %v2361
    %vm2368 = vmor %vm2366, %vm2367
    %v2369 = vsel %vm2368, %v2361, %v2365
    %v2370 = vand.u32 2147483647, %v2360
    %vm2371 = vcmp.eq.f32.partialorder %v2370, 8.507059e+37
    %v2372 = vand.u32 %v2360, 2147483648
    %v2373 = vor.u32 1.1754944e-38, %v2372
    %v2374 = vsel %vm2371, %v2373, %v2369
    %v2375 = vmul.f32 1.0, %v2374
    %v2376 = vxor.u32 %v2291, 2147483648
    %v2377 = vmul.f32 %v2376, 1.442695
    %v2378 = vpow.pop %v2377
    %v2379 = vadd.f32 %v2378, 1.0
    %v2380 = vrcp.pop %v2379
    %v2381 = vmul.f32 %v2379, %v2380
    %v2382 = vsub.f32 1.0, %v2381
    %v2383 = vmul.f32 %v2380, %v2382
    %v2384 = vadd.f32 %v2380, %v2383
    %vm2385 = vweird.f32 %v2379
    %vm2386 = vweird.f32 %v2380
    %vm2387 = vmor %vm2385, %vm2386
    %v2388 = vsel %vm2387, %v2380, %v2384
    %v2389 = vand.u32 2147483647, %v2379
    %vm2390 = vcmp.eq.f32.partialorder %v2389, 8.507059e+37
    %v2391 = vand.u32 %v2379, 2147483648
    %v2392 = vor.u32 1.1754944e-38, %v2391
    %v2393 = vsel %vm2390, %v2392, %v2388
    %v2394 = vmul.f32 1.0, %v2393
    %v2395 = vtanh.pop %v2292
    %v2396 = vxor.u32 %v2293, 2147483648
    %v2397 = vmul.f32 %v2396, 1.442695
    %v2398 = vpow.pop %v2397
    %v2399 = vadd.f32 %v2398, 1.0
    %v2400 = vrcp.pop %v2399
    %v2401 = vmul.f32 %v2399, %v2400
    %v2402 = vsub.f32 1.0, %v2401
    %v2403 = vmul.f32 %v2400, %v2402
    %v2404 = vadd.f32 %v2400, %v2403
    %vm2405 = vweird.f32 %v2399
    %vm2406 = vweird.f32 %v2400
    %vm2407 = vmor %vm2405, %vm2406
    %v2408 = vsel %vm2407, %v2400, %v2404
    %v2409 = vand.u32 2147483647, %v2399
    %vm2410 = vcmp.eq.f32.partialorder %v2409, 8.507059e+37
    %v2411 = vand.u32 %v2399, 2147483648
    %v2412 = vor.u32 1.1754944e-38, %v2411
    %v2413 = vsel %vm2410, %v2412, %v2408
    %v2414 = vmul.f32 1.0, %v2413
    %v2415 = vmul.f32 %v2394, %v1976
    %v2416 = vmul.f32 %v2375, %v2395
    %v2417 = vadd.f32 %v2415, %v2416
    %v2418 = vtanh.pop %v2417
    %v2419 = vmul.f32 %v2414, %v2418
    %s2420 = scalar_lea.vmem [#allocation3], %s1984
    %2421 = vst [vmem:[%s2420] sm:$0xff] %v2356
    %s2422 = scalar_lea.vmem [#allocation4], %s1984
    %2423 = vst [vmem:[%s2422] sm:$0xff] %v2419
  $region46: #{mulcat_block.1} parent=0 // loop_footer
    %s655 = sadd.s32 1, %s651
  $region47: #{mulcat_block.1} parent=0 // loop_footer_branch
    %650 = sbr.rel target = $region43
  $region48: #{mulcat_block.1} parent=0 // loop_exit
    _
  %v2424 = vld [vmem:[#allocation3] sm:$0xff]
  %v2425 = vld [vmem:[#allocation3 + $0x8] sm:$0xff]
  %v2426 = vld [vmem:[#allocation3 + $0x10] sm:$0xff]
  %v2427 = vld [vmem:[#allocation3 + $0x18] sm:$0xff]
  %v2428 = vld [vmem:[#allocation3 + $0x20] sm:$0xff]
  %v2429 = vld [vmem:[#allocation3 + $0x28] sm:$0xff]
  %v2430 = vld [vmem:[#allocation3 + $0x30] sm:$0xff]
  %v2431 = vld [vmem:[#allocation3 + $0x38] sm:$0xff]
  %v2432 = vld [vmem:[%s5] sm:$0xff]
  %v2433 = vld [vmem:[%s5 + $0x8] sm:$0xff]
  %v2434 = vld [vmem:[%s5 + $0x10] sm:$0xff]
  %v2435 = vld [vmem:[%s5 + $0x18] sm:$0xff]
  %v2436 = vld [vmem:[%s5 + $0x20] sm:$0xff]
  %v2437 = vld [vmem:[%s5 + $0x28] sm:$0xff]
  %v2438 = vld [vmem:[%s5 + $0x30] sm:$0xff]
  %v2439 = vld [vmem:[%s5 + $0x38] sm:$0xff]
  %v2440 = vld [vmem:[%s5 + $0x40] sm:$0xff]
  %v2441 = vld [vmem:[%s5 + $0x48] sm:$0xff]
  %v2442 = vld [vmem:[%s5 + $0x50] sm:$0xff]
  %v2443 = vld [vmem:[%s5 + $0x58] sm:$0xff]
  %v2444 = vld [vmem:[%s5 + $0x60] sm:$0xff]
  %v2445 = vld [vmem:[%s5 + $0x68] sm:$0xff]
  %v2446 = vld [vmem:[%s5 + $0x70] sm:$0xff]
  %v2447 = vld [vmem:[%s5 + $0x78] sm:$0xff]
  %v2448 = vld [vmem:[%s6] sm:$0x1]
  %v2450 = vperm.slane %v2448, 0
  %2452 = vmatpush.msra.mxu0 %v2447
  %2453 = vmatpush.msra.mxu0 %v2446
  %2454 = vmatpush.msra.mxu0 %v2445
  %2455 = vmatpush.msra.mxu0 %v2444
  %2456 = vmatpush.msra.mxu0 %v2443
  %2457 = vmatpush.msra.mxu0 %v2442
  %2458 = vmatpush.msra.mxu0 %v2441
  %2459 = vmatpush.msra.mxu0 %v2440
  %2460 = vmatpush.msra.mxu0 %v2439
  %2461 = vmatpush.msra.mxu0 %v2438
  %2462 = vmatpush.msra.mxu0 %v2437
  %2463 = vmatpush.msra.mxu0 %v2436
  %2464 = vmatpush.msra.mxu0 %v2435
  %2465 = vmatpush.msra.mxu0 %v2434
  %2466 = vmatpush.msra.mxu0 %v2433
  %2467 = vmatpush.msra.mxu0 %v2432
  %2468 = vmatmul.f32.gmra.mxu0 %v2424
  %v2469 = vpop.f32.mrf.mxu0
  %v2470 = vadd.f32 %v2450, %v2469
  %2471 = vmatmul.f32.gmra.mxu0 %v2425
  %v2472 = vpop.f32.mrf.mxu0
  %v2473 = vadd.f32 %v2450, %v2472
  %2474 = vmatmul.f32.gmra.mxu0 %v2426
  %v2475 = vpop.f32.mrf.mxu0
  %v2476 = vadd.f32 %v2450, %v2475
  %2477 = vmatmul.f32.gmra.mxu0 %v2427
  %v2478 = vpop.f32.mrf.mxu0
  %v2479 = vadd.f32 %v2450, %v2478
  %2480 = vmatmul.f32.gmra.mxu0 %v2428
  %v2481 = vpop.f32.mrf.mxu0
  %v2482 = vadd.f32 %v2450, %v2481
  %2483 = vmatmul.f32.gmra.mxu0 %v2429
  %v2484 = vpop.f32.mrf.mxu0
  %v2485 = vadd.f32 %v2450, %v2484
  %2486 = vmatmul.f32.gmra.mxu0 %v2430
  %v2487 = vpop.f32.mrf.mxu0
  %v2488 = vadd.f32 %v2450, %v2487
  %2489 = vmatmul.f32.gmra.mxu0 %v2431
  %v2490 = vpop.f32.mrf.mxu0
  %v2491 = vadd.f32 %v2450, %v2490
  %2492 = vdwg.mxu0
  %v2493 = vld [vmem:[#allocation4] sm:$0xff]
  %v2494 = vld [vmem:[#allocation4 + $0x8] sm:$0xff]
  %v2495 = vld [vmem:[#allocation4 + $0x10] sm:$0xff]
  %v2496 = vld [vmem:[#allocation4 + $0x18] sm:$0xff]
  %v2497 = vld [vmem:[#allocation4 + $0x20] sm:$0xff]
  %v2498 = vld [vmem:[#allocation4 + $0x28] sm:$0xff]
  %v2499 = vld [vmem:[#allocation4 + $0x30] sm:$0xff]
  %v2500 = vld [vmem:[#allocation4 + $0x38] sm:$0xff]
  %v2501 = vld [vmem:[%s7] sm:$0xff]
  %v2502 = vld [vmem:[%s7 + $0x8] sm:$0xff]
  %v2503 = vld [vmem:[%s7 + $0x10] sm:$0xff]
  %v2504 = vld [vmem:[%s7 + $0x18] sm:$0xff]
  %v2505 = vld [vmem:[%s7 + $0x20] sm:$0xff]
  %v2506 = vld [vmem:[%s7 + $0x28] sm:$0xff]
  %v2507 = vld [vmem:[%s7 + $0x30] sm:$0xff]
  %v2508 = vld [vmem:[%s7 + $0x38] sm:$0xff]
  %v2509 = vld [vmem:[%s7 + $0x40] sm:$0xff]
  %v2510 = vld [vmem:[%s7 + $0x48] sm:$0xff]
  %v2511 = vld [vmem:[%s7 + $0x50] sm:$0xff]
  %v2512 = vld [vmem:[%s7 + $0x58] sm:$0xff]
  %v2513 = vld [vmem:[%s7 + $0x60] sm:$0xff]
  %v2514 = vld [vmem:[%s7 + $0x68] sm:$0xff]
  %v2515 = vld [vmem:[%s7 + $0x70] sm:$0xff]
  %v2516 = vld [vmem:[%s7 + $0x78] sm:$0xff]
  %v2517 = vld [vmem:[%s8] sm:$0x1]
  %v2519 = vperm.slane %v2517, 0
  %2521 = vmatpush.msra.mxu0 %v2516
  %2522 = vmatpush.msra.mxu0 %v2515
  %2523 = vmatpush.msra.mxu0 %v2514
  %2524 = vmatpush.msra.mxu0 %v2513
  %2525 = vmatpush.msra.mxu0 %v2512
  %2526 = vmatpush.msra.mxu0 %v2511
  %2527 = vmatpush.msra.mxu0 %v2510
  %2528 = vmatpush.msra.mxu0 %v2509
  %2529 = vmatpush.msra.mxu0 %v2508
  %2530 = vmatpush.msra.mxu0 %v2507
  %2531 = vmatpush.msra.mxu0 %v2506
  %2532 = vmatpush.msra.mxu0 %v2505
  %2533 = vmatpush.msra.mxu0 %v2504
  %2534 = vmatpush.msra.mxu0 %v2503
  %2535 = vmatpush.msra.mxu0 %v2502
  %2536 = vmatpush.msra.mxu0 %v2501
  %2537 = vmatmul.f32.gmra.mxu0 %v2493
  %v2538 = vpop.f32.mrf.mxu0
  %v2539 = vadd.f32 %v2519, %v2538
  %2540 = vmatmul.f32.gmra.mxu0 %v2494
  %v2541 = vpop.f32.mrf.mxu0
  %v2542 = vadd.f32 %v2519, %v2541
  %2543 = vmatmul.f32.gmra.mxu0 %v2495
  %v2544 = vpop.f32.mrf.mxu0
  %v2545 = vadd.f32 %v2519, %v2544
  %2546 = vmatmul.f32.gmra.mxu0 %v2496
  %v2547 = vpop.f32.mrf.mxu0
  %v2548 = vadd.f32 %v2519, %v2547
  %2549 = vmatmul.f32.gmra.mxu0 %v2497
  %v2550 = vpop.f32.mrf.mxu0
  %v2551 = vadd.f32 %v2519, %v2550
  %2552 = vmatmul.f32.gmra.mxu0 %v2498
  %v2553 = vpop.f32.mrf.mxu0
  %v2554 = vadd.f32 %v2519, %v2553
  %2555 = vmatmul.f32.gmra.mxu0 %v2499
  %v2556 = vpop.f32.mrf.mxu0
  %v2557 = vadd.f32 %v2519, %v2556
  %2558 = vmatmul.f32.gmra.mxu0 %v2500
  %v2559 = vpop.f32.mrf.mxu0
  %v2560 = vadd.f32 %v2519, %v2559
  %2561 = vdwg.mxu0
  %v2562 = vmul.f32 %v2470, %v2539
  %v2563 = vmul.f32 %v2473, %v2542
  %v2564 = vmul.f32 %v2476, %v2545
  %v2565 = vmul.f32 %v2479, %v2548
  %v2566 = vmul.f32 %v2482, %v2551
  %v2567 = vmul.f32 %v2485, %v2554
  %v2568 = vmul.f32 %v2488, %v2557
  %v2569 = vmul.f32 %v2491, %v2560
  %v2570 = vld [vmem:[%s9] sm:$0xff]
  %v2571 = vld [vmem:[%s9 + $0x8] sm:$0xff]
  %v2572 = vld [vmem:[%s9 + $0x10] sm:$0xff]
  %v2573 = vld [vmem:[%s9 + $0x18] sm:$0xff]
  %v2574 = vld [vmem:[%s9 + $0x20] sm:$0xff]
  %v2575 = vld [vmem:[%s9 + $0x28] sm:$0xff]
  %v2576 = vld [vmem:[%s9 + $0x30] sm:$0xff]
  %v2577 = vld [vmem:[%s9 + $0x38] sm:$0xff]
  %v2578 = vld [vmem:[%s9 + $0x40] sm:$0xff]
  %v2579 = vld [vmem:[%s9 + $0x48] sm:$0xff]
  %v2580 = vld [vmem:[%s9 + $0x50] sm:$0xff]
  %v2581 = vld [vmem:[%s9 + $0x58] sm:$0xff]
  %v2582 = vld [vmem:[%s9 + $0x60] sm:$0xff]
  %v2583 = vld [vmem:[%s9 + $0x68] sm:$0xff]
  %v2584 = vld [vmem:[%s9 + $0x70] sm:$0xff]
  %v2585 = vld [vmem:[%s9 + $0x78] sm:$0xff]
  %v2586 = vld [vmem:[#allocation2 + $0x40] sm:$0xff]
  %v2587 = vld [vmem:[#allocation2 + $0x88] sm:$0xff]
  %v2588 = vld [vmem:[#allocation2 + $0xd0] sm:$0xff]
  %v2589 = vld [vmem:[#allocation2 + $0x118] sm:$0xff]
  %v2590 = vld [vmem:[#allocation2 + $0x160] sm:$0xff]
  %v2591 = vld [vmem:[#allocation2 + $0x1a8] sm:$0xff]
  %v2592 = vld [vmem:[#allocation2 + $0x1f0] sm:$0xff]
  %v2593 = vld [vmem:[#allocation2 + $0x238] sm:$0xff]
  %2594 = vmatpush.msra.mxu0 %v2585
  %2595 = vmatpush.msra.mxu0 %v2584
  %2596 = vmatpush.msra.mxu0 %v2583
  %2597 = vmatpush.msra.mxu0 %v2582
  %2598 = vmatpush.msra.mxu0 %v2581
  %2599 = vmatpush.msra.mxu0 %v2580
  %2600 = vmatpush.msra.mxu0 %v2579
  %2601 = vmatpush.msra.mxu0 %v2578
  %2602 = vmatpush.msra.mxu0 %v2577
  %2603 = vmatpush.msra.mxu0 %v2576
  %2604 = vmatpush.msra.mxu0 %v2575
  %2605 = vmatpush.msra.mxu0 %v2574
  %2606 = vmatpush.msra.mxu0 %v2573
  %2607 = vmatpush.msra.mxu0 %v2572
  %2608 = vmatpush.msra.mxu0 %v2571
  %2609 = vmatpush.msra.mxu0 %v2570
  %2610 = vmatmul.f32.gmra.mxu0 %v2562
  %v2611 = vpop.f32.mrf.mxu0
  %v2612 = vadd.f32 %v2586, %v2611
  %2613 = vmatmul.f32.gmra.mxu0 %v2563
  %v2614 = vpop.f32.mrf.mxu0
  %v2615 = vadd.f32 %v2587, %v2614
  %2616 = vmatmul.f32.gmra.mxu0 %v2564
  %v2617 = vpop.f32.mrf.mxu0
  %v2618 = vadd.f32 %v2588, %v2617
  %2619 = vmatmul.f32.gmra.mxu0 %v2565
  %v2620 = vpop.f32.mrf.mxu0
  %v2621 = vadd.f32 %v2589, %v2620
  %2622 = vmatmul.f32.gmra.mxu0 %v2566
  %v2623 = vpop.f32.mrf.mxu0
  %v2624 = vadd.f32 %v2590, %v2623
  %2625 = vmatmul.f32.gmra.mxu0 %v2567
  %v2626 = vpop.f32.mrf.mxu0
  %v2627 = vadd.f32 %v2591, %v2626
  %2628 = vmatmul.f32.gmra.mxu0 %v2568
  %v2629 = vpop.f32.mrf.mxu0
  %v2630 = vadd.f32 %v2592, %v2629
  %2631 = vmatmul.f32.gmra.mxu0 %v2569
  %v2632 = vpop.f32.mrf.mxu0
  %v2633 = vadd.f32 %v2593, %v2632
  %2634 = vdwg.mxu0
  %2635 = vst [vmem:[%s10] sm:$0xff] %v2612
  %2636 = vst [vmem:[%s10 + $0x8] sm:$0xff] %v2615
  %2637 = vst [vmem:[%s10 + $0x10] sm:$0xff] %v2618
  %2638 = vst [vmem:[%s10 + $0x18] sm:$0xff] %v2621
  %2639 = vst [vmem:[%s10 + $0x20] sm:$0xff] %v2624
  %2640 = vst [vmem:[%s10 + $0x28] sm:$0xff] %v2627
  %2641 = vst [vmem:[%s10 + $0x30] sm:$0xff] %v2630
  %2642 = vst [vmem:[%s10 + $0x38] sm:$0xff] %v2633
  // Predicated region
  $region49: #{mulcat_block.1} parent=0 // pred_check
    _
  $region50: #{mulcat_block.1} parent=0 // pred_check_branch
    %2644 = sbr.rel (0) target = $region52
  $region51: #{mulcat_block.1} parent=0 // pred_region
    _
  $region52: #{mulcat_block.1} parent=0 // pred_fallthru
    _
  // Predicated region
  $region53: #{mulcat_block.1} parent=0 // pred_check
    _
  $region54: #{mulcat_block.1} parent=0 // pred_check_branch
    %2646 = sbr.rel (0) target = $region56
  $region55: #{mulcat_block.1} parent=0 // pred_region
    _
  $region56: #{mulcat_block.1} parent=0 // pred_fallthru
    _

</llo_original>
